<compile_context>
chip_gen: v5e
topology: v5e:2x2
jax: 0.10.0
libtpu: 0.0.40
codegen_flags: <defaults>
</compile_context>

<pallas_src>
import math

import jax
import jax.numpy as jnp
from jax.experimental import pallas as pl
from jax.experimental.pallas import tpu as pltpu


# ----------------------------- model config ---------------------------------
PAD_IDX = 0
VOCAB = 50
D_EMB = 32            # d_model
N_HEADS = 4
HEAD_DIM = D_EMB // N_HEADS
N_BLOCKS = 2
DIM_FF = 2048         # PyTorch TransformerEncoderLayer default dim_feedforward
MLP_L1 = 32
MLP_L2 = 16
NUM_CLASSES = 4
LN_EPS = 1e-5
MASK_NEG = -1e9       # finite "-inf": same softmax result, no NaN for all-pad rows

BATCH = 2
SEQ = 8


# ----------------------------- kernel ----------------------------------------
def _layer_norm(x, gamma, beta, eps=LN_EPS):
    mu = jnp.mean(x, axis=-1, keepdims=True)
    var = jnp.mean(jnp.square(x - mu), axis=-1, keepdims=True)
    return (x - mu) * jax.lax.rsqrt(var + eps) * gamma + beta


def fused_forward_kernel(
    # inputs -------------------------------------------------------------
    x_ref, bias_ref, r_ref, rt_ref, cmask_ref, pool_ref,
    wqkv_ref, bqkv_ref, wo_ref, bo_ref,
    g1_ref, be1_ref, w1_ref, b1_ref, w2_ref, b2_ref, g2_ref, be2_ref,
    mw1_ref, mb1_ref, mw2_ref, mb2_ref, mw3_ref, mb3_ref,
    # output -------------------------------------------------------------
    o_ref,
):
    """Whole batched forward in one grid step: 2 encoder layers + pool + MLP."""
    x = x_ref[...]                    # (B*S, D) f32, batch folded into rows
    bias = bias_ref[...]              # (B*H*S, B*H*S) block-diag + key-pad additive bias
    R = r_ref[...]                    # (B*H*S, B*S) 0/1 row-duplication matrix
    Rt = rt_ref[...]                  # (B*S, B*H*S) its transpose (head un-pack / sum)
    cmask = cmask_ref[...]            # (B*H*S, D) per-head lane mask (0/1)
    D = D_EMB

    for li in range(N_BLOCKS):
        # ---- fused QKV projection (q-scale folded into wqkv/bqkv) --------
        qkv = jnp.dot(x, wqkv_ref[li],
                      preferred_element_type=jnp.float32) + bqkv_ref[li]     # (B*S, 3D)

        # ---- pack heads into a block-diagonal (B*H*S, D) layout -----------
        dup = jnp.dot(R, qkv, preferred_element_type=jnp.float32)            # (B*H*S, 3D)
        qp = dup[:, 0 * D:1 * D]                                             # (B*H*S, D)
        kp = dup[:, 1 * D:2 * D] * cmask                                     # zero outside own head
        vp = dup[:, 2 * D:3 * D] * cmask

        # ---- one wide scores matmul + one row-wise softmax ----------------
        s = jnp.einsum('md,nd->mn', qp, kp,
                       preferred_element_type=jnp.float32) + bias            # (B*H*S, B*H*S)
        s = s - jnp.max(s, axis=-1, keepdims=True)
        e = jnp.exp(s)                                                       # masked cols -> 0
        p = e * pl.reciprocal(jnp.sum(e, axis=-1, keepdims=True), approx=True)

        # ---- one PV matmul, un-pack heads with R^T, dense out-proj --------
        ctxp = jnp.dot(p, vp, preferred_element_type=jnp.float32)            # (B*H*S, D)
        ctx = jnp.dot(Rt, ctxp, preferred_element_type=jnp.float32)          # (B*S, D)
        attn = jnp.dot(ctx, wo_ref[li],
                       preferred_element_type=jnp.float32) + bo_ref[li]      # (B*S, D)

        # ---- residual + LayerNorm 1 ---------------------------------------
        y = _layer_norm(x + attn, g1_ref[li], be1_ref[li])

        # ---- feed-forward (relu), bf16 weights / f32 accumulation ---------
        h1 = jnp.dot(y.astype(jnp.bfloat16), w1_ref[li],
                     preferred_element_type=jnp.float32) + b1_ref[li]        # (B*S, F)
        h1 = jnp.maximum(h1, 0.0)
        ff = jnp.dot(h1.astype(jnp.bfloat16), w2_ref[li],
                     preferred_element_type=jnp.float32) + b2_ref[li]        # (B*S, D)

        # ---- residual + LayerNorm 2 ---------------------------------------
        x = _layer_norm(y + ff, g2_ref[li], be2_ref[li])

    # ---- per-batch mean-pool (over ALL positions, as torch.mean) + MLP head
    pooled = jnp.dot(pool_ref[...], x, preferred_element_type=jnp.float32)   # (B, D)
    z1 = jnp.maximum(jnp.dot(pooled, mw1_ref[...],
                             preferred_element_type=jnp.float32) + mb1_ref[...], 0.0)
    z2 = jnp.maximum(jnp.dot(z1, mw2_ref[...],
                             preferred_element_type=jnp.float32) + mb2_ref[...], 0.0)
    logits = jnp.dot(z2, mw3_ref[...],
                     preferred_element_type=jnp.float32) + mb3_ref[...]      # (B, C)
    o_ref[...] = logits.astype(o_ref.dtype)


# ----------------------------- wrapper ----------------------------------------
def transformer_control_forward(tokens, params):
    """tokens: (B, S) int32  ->  logits: (B, NUM_CLASSES) float32."""
    B, S = tokens.shape
    BS = B * S
    BHS = B * N_HEADS * S

    # embedding lookup — plain-JAX glue (gather); padding_idx row is zeros.
    x = jnp.take(params["emb"], tokens, axis=0).astype(jnp.float32).reshape(BS, D_EMB)

    # ---- packed-attention constants (token-independent ones constant-fold) ---
    rows = jnp.arange(BHS)
    rb = rows // (N_HEADS * S)            # batch index of packed row
    rh = (rows // S) % N_HEADS            # head  index of packed row
    rj = rows % S                         # seq   index of packed row
    R = ((rb * S + rj)[:, None] == jnp.arange(BS)[None, :]).astype(jnp.float32)     # (BHS, BS)
    Rt = R.T                                                                         # (BS, BHS)
    cmask = ((jnp.arange(D_EMB)[None, :] // HEAD_DIM) == rh[:, None]).astype(jnp.float32)  # (BHS, D)
    pool = ((jnp.arange(BS)[None, :] // S) == jnp.arange(B)[:, None]).astype(jnp.float32) / S  # (B, BS)

    # combined block-diagonal validity + key-padding additive bias (BHS, BHS)
    same_block = (rb[:, None] == rb[None, :]) & (rh[:, None] == rh[None, :])
    key_ok = tokens.reshape(-1)[rb * S + rj] != PAD_IDX                 # key valid, per packed col
    attn_bias = jnp.where(same_block & key_ok[None, :],
                          jnp.float32(0.0), jnp.float32(MASK_NEG))      # (BHS, BHS)

    # ---- stack per-layer params along a leading layer axis -------------------
    layers = params["layers"]
    stk = lambda k: jnp.stack([l[k] for l in layers], axis=0)
    qscale = jnp.concatenate([jnp.full((D_EMB,), 1.0 / math.sqrt(HEAD_DIM), jnp.float32),
                              jnp.ones((2 * D_EMB,), jnp.float32)])
    wqkv = stk("wqkv") * qscale[None, None, :]                          # (L, D, 3D) scale folded
    bqkv = stk("bqkv") * qscale[None, None, :]                          # (L, 1, 3D)
    wo = stk("wo")                                                      # (L, D, D)
    bo = stk("bo")                                                      # (L, 1, D)
    g1, be1 = stk("ln1_g"), stk("ln1_b")
    w1 = stk("w1").astype(jnp.bfloat16)                                 # (L, D, F) bf16
    b1 = stk("b1")
    w2 = stk("w2").astype(jnp.bfloat16)                                 # (L, F, D) bf16
    b2 = stk("b2")
    g2, be2 = stk("ln2_g"), stk("ln2_b")
    mlp = params["mlp"]

    inputs = [x, attn_bias, R, Rt, cmask, pool,
              wqkv, bqkv, wo, bo, g1, be1, w1, b1, w2, b2, g2, be2,
              mlp["w1"], mlp["b1"], mlp["w2"], mlp["b2"], mlp["w3"], mlp["b3"]]

    def full_spec(a):
        return pl.BlockSpec(a.shape, lambda i, n=a.ndim: (0,) * n)

    out = pl.pallas_call(
        fused_forward_kernel,
        out_shape=jax.ShapeDtypeStruct((B, NUM_CLASSES), jnp.float32),
        grid=(1,),                                          # single step: batch folded into rows
        in_specs=[full_spec(a) for a in inputs],
        out_specs=pl.BlockSpec((B, NUM_CLASSES), lambda i: (0, 0)),
    )(*inputs)
    return out


# ----------------------------- parameter init --------------------------------
def init_params(key):
    def nrm(k, shape, scale=0.02):
        return (scale * jax.random.normal(k, shape)).astype(jnp.float32)

    keys = jax.random.split(key, 3 + N_BLOCKS)
    emb = nrm(keys[0], (VOCAB, D_EMB), 1.0)
    emb = emb.at[0].set(0.0)                                   # padding_idx=0 row is zero

    layers = []
    for li in range(N_BLOCKS):
        lk = jax.random.split(keys[1 + li], 8)
        layers.append(dict(
            wqkv=nrm(lk[0], (D_EMB, 3 * D_EMB)),
            bqkv=nrm(lk[1], (1, 3 * D_EMB)),
            wo=nrm(lk[2], (D_EMB, D_EMB)),
            bo=nrm(lk[3], (1, D_EMB)),
            ln1_g=jnp.ones((1, D_EMB), jnp.float32),
            ln1_b=jnp.zeros((1, D_EMB), jnp.float32),
            w1=nrm(lk[4], (D_EMB, DIM_FF)),
            b1=nrm(lk[5], (1, DIM_FF)),
            w2=nrm(lk[6], (DIM_FF, D_EMB)),
            b2=nrm(lk[7], (1, D_EMB)),
            ln2_g=jnp.ones((1, D_EMB), jnp.float32),
            ln2_b=jnp.zeros((1, D_EMB), jnp.float32),
        ))

    mk = jax.random.split(keys[1 + N_BLOCKS], 6)
    mlp = dict(
        w1=nrm(mk[0], (D_EMB, MLP_L1)), b1=nrm(mk[1], (1, MLP_L1)),
        w2=nrm(mk[2], (MLP_L1, MLP_L2)), b2=nrm(mk[3], (1, MLP_L2)),
        w3=nrm(mk[4], (MLP_L2, NUM_CLASSES)), b3=nrm(mk[5], (1, NUM_CLASSES)),
    )
    return dict(emb=emb, layers=layers, mlp=mlp)


# ----------------------------- main -------------------------------------------
if __name__ == "__main__":
    key = jax.random.PRNGKey(0)
    pkey, tkey = jax.random.split(key)
    params = init_params(pkey)

    tokens = jax.random.randint(tkey, (BATCH, SEQ), 0, VOCAB, dtype=jnp.int32)
    tokens = tokens.at[:, 0].set(jnp.maximum(tokens[:, 0], 1))   # >=1 non-pad token per row
    tokens = tokens.at[:, -2:].set(PAD_IDX)                      # exercise padding mask

    fwd = jax.jit(transformer_control_forward)
    out = fwd(tokens, params)
    out = jax.block_until_ready(out)
    assert out.shape == (BATCH, NUM_CLASSES)
    assert bool(jnp.all(jnp.isfinite(out)))
    print("KERNEL_OK")
</pallas_src>

<mosaic_0001>
module attributes {stable_mosaic.version = 11 : i64} {
  func.func @fused_forward_kernel(%arg0: i32, %arg1: memref<16x32xf32, #tpu.memory_space<vmem>>, %arg2: memref<64x64xf32, #tpu.memory_space<vmem>>, %arg3: memref<64x16xf32, #tpu.memory_space<vmem>>, %arg4: memref<16x64xf32, #tpu.memory_space<vmem>>, %arg5: memref<64x32xf32, #tpu.memory_space<vmem>>, %arg6: memref<2x16xf32, #tpu.memory_space<vmem>>, %arg7: memref<2x32x96xf32, #tpu.memory_space<vmem>>, %arg8: memref<2x1x96xf32, #tpu.memory_space<vmem>>, %arg9: memref<2x32x32xf32, #tpu.memory_space<vmem>>, %arg10: memref<2x1x32xf32, #tpu.memory_space<vmem>>, %arg11: memref<2x1x32xf32, #tpu.memory_space<vmem>>, %arg12: memref<2x1x32xf32, #tpu.memory_space<vmem>>, %arg13: memref<2x32x2048xbf16, #tpu.memory_space<vmem>>, %arg14: memref<2x1x2048xf32, #tpu.memory_space<vmem>>, %arg15: memref<2x2048x32xbf16, #tpu.memory_space<vmem>>, %arg16: memref<2x1x32xf32, #tpu.memory_space<vmem>>, %arg17: memref<2x1x32xf32, #tpu.memory_space<vmem>>, %arg18: memref<2x1x32xf32, #tpu.memory_space<vmem>>, %arg19: memref<32x32xf32, #tpu.memory_space<vmem>>, %arg20: memref<1x32xf32, #tpu.memory_space<vmem>>, %arg21: memref<32x16xf32, #tpu.memory_space<vmem>>, %arg22: memref<1x16xf32, #tpu.memory_space<vmem>>, %arg23: memref<16x4xf32, #tpu.memory_space<vmem>>, %arg24: memref<1x4xf32, #tpu.memory_space<vmem>>, %arg25: memref<2x4xf32, #tpu.memory_space<vmem>>) attributes {dimension_semantics = [#tpu.dimension_semantics<arbitrary>], iteration_bounds = array<i64: 1>, scalar_prefetch = 0 : i64, scratch_operands = 0 : i64, tpu.core_type = #tpu.core_type<tc>, window_params = [{pipeline_mode = #tpu.pipeline_mode<synchronous>, transform_indices = @transform_0, window_bounds = array<i64: 16, 32>}, {pipeline_mode = #tpu.pipeline_mode<synchronous>, transform_indices = @transform_1, window_bounds = array<i64: 64, 64>}, {pipeline_mode = #tpu.pipeline_mode<synchronous>, transform_indices = @transform_2, window_bounds = array<i64: 64, 16>}, {pipeline_mode = #tpu.pipeline_mode<synchronous>, transform_indices = @transform_3, window_bounds = array<i64: 16, 64>}, {pipeline_mode = #tpu.pipeline_mode<synchronous>, transform_indices = @transform_4, window_bounds = array<i64: 64, 32>}, {pipeline_mode = #tpu.pipeline_mode<synchronous>, transform_indices = @transform_5, window_bounds = array<i64: 2, 16>}, {pipeline_mode = #tpu.pipeline_mode<synchronous>, transform_indices = @transform_6, window_bounds = array<i64: 2, 32, 96>}, {pipeline_mode = #tpu.pipeline_mode<synchronous>, transform_indices = @transform_7, window_bounds = array<i64: 2, 1, 96>}, {pipeline_mode = #tpu.pipeline_mode<synchronous>, transform_indices = @transform_8, window_bounds = array<i64: 2, 32, 32>}, {pipeline_mode = #tpu.pipeline_mode<synchronous>, transform_indices = @transform_9, window_bounds = array<i64: 2, 1, 32>}, {pipeline_mode = #tpu.pipeline_mode<synchronous>, transform_indices = @transform_10, window_bounds = array<i64: 2, 1, 32>}, {pipeline_mode = #tpu.pipeline_mode<synchronous>, transform_indices = @transform_11, window_bounds = array<i64: 2, 1, 32>}, {pipeline_mode = #tpu.pipeline_mode<synchronous>, transform_indices = @transform_12, window_bounds = array<i64: 2, 32, 2048>}, {pipeline_mode = #tpu.pipeline_mode<synchronous>, transform_indices = @transform_13, window_bounds = array<i64: 2, 1, 2048>}, {pipeline_mode = #tpu.pipeline_mode<synchronous>, transform_indices = @transform_14, window_bounds = array<i64: 2, 2048, 32>}, {pipeline_mode = #tpu.pipeline_mode<synchronous>, transform_indices = @transform_15, window_bounds = array<i64: 2, 1, 32>}, {pipeline_mode = #tpu.pipeline_mode<synchronous>, transform_indices = @transform_16, window_bounds = array<i64: 2, 1, 32>}, {pipeline_mode = #tpu.pipeline_mode<synchronous>, transform_indices = @transform_17, window_bounds = array<i64: 2, 1, 32>}, {pipeline_mode = #tpu.pipeline_mode<synchronous>, transform_indices = @transform_18, window_bounds = array<i64: 32, 32>}, {pipeline_mode = #tpu.pipeline_mode<synchronous>, transform_indices = @transform_19, window_bounds = array<i64: 1, 32>}, {pipeline_mode = #tpu.pipeline_mode<synchronous>, transform_indices = @transform_20, window_bounds = array<i64: 32, 16>}, {pipeline_mode = #tpu.pipeline_mode<synchronous>, transform_indices = @transform_21, window_bounds = array<i64: 1, 16>}, {pipeline_mode = #tpu.pipeline_mode<synchronous>, transform_indices = @transform_22, window_bounds = array<i64: 16, 4>}, {pipeline_mode = #tpu.pipeline_mode<synchronous>, transform_indices = @transform_23, window_bounds = array<i64: 1, 4>}, {pipeline_mode = #tpu.pipeline_mode<synchronous>, transform_indices = @transform_24, window_bounds = array<i64: 2, 4>}]} {
    %c0 = arith.constant 0 : index
    %c0_0 = arith.constant 0 : index
    %0 = vector.load %arg1[%c0, %c0_0] : memref<16x32xf32, #tpu.memory_space<vmem>>, vector<16x32xf32>
    %c0_1 = arith.constant 0 : index
    %c0_2 = arith.constant 0 : index
    %1 = vector.load %arg2[%c0_1, %c0_2] : memref<64x64xf32, #tpu.memory_space<vmem>>, vector<64x64xf32>
    %c0_3 = arith.constant 0 : index
    %c0_4 = arith.constant 0 : index
    %2 = vector.load %arg3[%c0_3, %c0_4] : memref<64x16xf32, #tpu.memory_space<vmem>>, vector<64x16xf32>
    %c0_5 = arith.constant 0 : index
    %c0_6 = arith.constant 0 : index
    %3 = vector.load %arg4[%c0_5, %c0_6] : memref<16x64xf32, #tpu.memory_space<vmem>>, vector<16x64xf32>
    %c0_7 = arith.constant 0 : index
    %c0_8 = arith.constant 0 : index
    %4 = vector.load %arg5[%c0_7, %c0_8] : memref<64x32xf32, #tpu.memory_space<vmem>>, vector<64x32xf32>
    %c0_9 = arith.constant 0 : index
    %c0_10 = arith.constant 0 : index
    %c0_11 = arith.constant 0 : index
    %5 = vector.load %arg7[%c0_9, %c0_10, %c0_11] : memref<2x32x96xf32, #tpu.memory_space<vmem>>, vector<1x32x96xf32>
    %6 = vector.shape_cast %5 : vector<1x32x96xf32> to vector<32x96xf32>
    %cst = arith.constant dense<0.000000e+00> : vector<16x96xf32>
    %7 = tpu.matmul %0, %6, %cst {dimension_numbers = #tpu.dot_dimension_numbers<[1], [0], [0], [1], [0, 0, 1, 1], [], []>} : vector<16x32xf32>, vector<32x96xf32>, vector<16x96xf32> -> vector<16x96xf32>
    %c0_12 = arith.constant 0 : index
    %c0_13 = arith.constant 0 : index
    %c0_14 = arith.constant 0 : index
    %8 = vector.load %arg8[%c0_12, %c0_13, %c0_14] : memref<2x1x96xf32, #tpu.memory_space<vmem>>, vector<1x1x96xf32>
    %9 = vector.shape_cast %8 : vector<1x1x96xf32> to vector<1x96xf32>
    %10 = vector.broadcast %9 : vector<1x96xf32> to vector<16x96xf32>
    %11 = arith.addf %7, %10 : vector<16x96xf32>
    %cst_15 = arith.constant dense<0.000000e+00> : vector<64x96xf32>
    %12 = tpu.matmul %2, %11, %cst_15 {dimension_numbers = #tpu.dot_dimension_numbers<[1], [0], [0], [1], [0, 0, 1, 1], [], []>} : vector<64x16xf32>, vector<16x96xf32>, vector<64x96xf32> -> vector<64x96xf32>
    %13 = vector.extract_strided_slice %12 {offsets = [0, 0], sizes = [64, 32], strides = [1, 1]} : vector<64x96xf32> to vector<64x32xf32>
    %14 = vector.extract_strided_slice %12 {offsets = [0, 32], sizes = [64, 32], strides = [1, 1]} : vector<64x96xf32> to vector<64x32xf32>
    %15 = arith.mulf %14, %4 : vector<64x32xf32>
    %16 = vector.extract_strided_slice %12 {offsets = [0, 64], sizes = [64, 32], strides = [1, 1]} : vector<64x96xf32> to vector<64x32xf32>
    %17 = arith.mulf %16, %4 : vector<64x32xf32>
    "tpu.trace_start"() <{level = 10 : i32, message = "md,nd->mn"}> : () -> ()
    %cst_16 = arith.constant dense<0.000000e+00> : vector<64x64xf32>
    %18 = tpu.matmul %13, %15, %cst_16 {dimension_numbers = #tpu.dot_dimension_numbers<[1], [1], [0], [0], [0, 0, 1, 0], [], []>} : vector<64x32xf32>, vector<64x32xf32>, vector<64x64xf32> -> vector<64x64xf32>
    "tpu.trace_stop"() : () -> ()
    %19 = arith.addf %18, %1 : vector<64x64xf32>
    %cst_17 = arith.constant dense<0xFF800000> : vector<64xf32>
    %20 = vector.multi_reduction <maximumf>, %19, %cst_17 [1] : vector<64x64xf32> to vector<64xf32>
    %21 = vector.shape_cast %20 : vector<64xf32> to vector<64x1xf32>
    %22 = vector.broadcast %21 : vector<64x1xf32> to vector<64x64xf32>
    %23 = arith.subf %19, %22 : vector<64x64xf32>
    %24 = math.exp %23 : vector<64x64xf32>
    %cst_18 = arith.constant dense<0.000000e+00> : vector<64xf32>
    %25 = vector.multi_reduction <add>, %24, %cst_18 [1] : vector<64x64xf32> to vector<64xf32>
    %26 = vector.shape_cast %25 : vector<64xf32> to vector<64x1xf32>
    %27 = tpu.reciprocal %26 {approx = true} : vector<64x1xf32> -> vector<64x1xf32>
    %28 = vector.broadcast %27 : vector<64x1xf32> to vector<64x64xf32>
    %29 = arith.mulf %24, %28 : vector<64x64xf32>
    %cst_19 = arith.constant dense<0.000000e+00> : vector<64x32xf32>
    %30 = tpu.matmul %29, %17, %cst_19 {dimension_numbers = #tpu.dot_dimension_numbers<[1], [0], [0], [1], [0, 0, 1, 1], [], []>} : vector<64x64xf32>, vector<64x32xf32>, vector<64x32xf32> -> vector<64x32xf32>
    %cst_20 = arith.constant dense<0.000000e+00> : vector<16x32xf32>
    %31 = tpu.matmul %3, %30, %cst_20 {dimension_numbers = #tpu.dot_dimension_numbers<[1], [0], [0], [1], [0, 0, 1, 1], [], []>} : vector<16x64xf32>, vector<64x32xf32>, vector<16x32xf32> -> vector<16x32xf32>
    %c0_21 = arith.constant 0 : index
    %c0_22 = arith.constant 0 : index
    %c0_23 = arith.constant 0 : index
    %32 = vector.load %arg9[%c0_21, %c0_22, %c0_23] : memref<2x32x32xf32, #tpu.memory_space<vmem>>, vector<1x32x32xf32>
    %33 = vector.shape_cast %32 : vector<1x32x32xf32> to vector<32x32xf32>
    %cst_24 = arith.constant dense<0.000000e+00> : vector<16x32xf32>
    %34 = tpu.matmul %31, %33, %cst_24 {dimension_numbers = #tpu.dot_dimension_numbers<[1], [0], [0], [1], [0, 0, 1, 1], [], []>} : vector<16x32xf32>, vector<32x32xf32>, vector<16x32xf32> -> vector<16x32xf32>
    %c0_25 = arith.constant 0 : index
    %c0_26 = arith.constant 0 : index
    %c0_27 = arith.constant 0 : index
    %35 = vector.load %arg10[%c0_25, %c0_26, %c0_27] : memref<2x1x32xf32, #tpu.memory_space<vmem>>, vector<1x1x32xf32>
    %36 = vector.shape_cast %35 : vector<1x1x32xf32> to vector<1x32xf32>
    %37 = vector.broadcast %36 : vector<1x32xf32> to vector<16x32xf32>
    %38 = arith.addf %34, %37 : vector<16x32xf32>
    %39 = arith.addf %0, %38 : vector<16x32xf32>
    %c0_28 = arith.constant 0 : index
    %c0_29 = arith.constant 0 : index
    %c0_30 = arith.constant 0 : index
    %40 = vector.load %arg11[%c0_28, %c0_29, %c0_30] : memref<2x1x32xf32, #tpu.memory_space<vmem>>, vector<1x1x32xf32>
    %41 = vector.shape_cast %40 : vector<1x1x32xf32> to vector<1x32xf32>
    %c0_31 = arith.constant 0 : index
    %c0_32 = arith.constant 0 : index
    %c0_33 = arith.constant 0 : index
    %42 = vector.load %arg12[%c0_31, %c0_32, %c0_33] : memref<2x1x32xf32, #tpu.memory_space<vmem>>, vector<1x1x32xf32>
    %43 = vector.shape_cast %42 : vector<1x1x32xf32> to vector<1x32xf32>
    %cst_34 = arith.constant dense<0.000000e+00> : vector<16xf32>
    %44 = vector.multi_reduction <add>, %39, %cst_34 [1] : vector<16x32xf32> to vector<16xf32>
    %45 = vector.shape_cast %44 : vector<16xf32> to vector<16x1xf32>
    %cst_35 = arith.constant 3.200000e+01 : f32
    %46 = vector.broadcast %cst_35 : f32 to vector<16x1xf32>
    %47 = arith.divf %45, %46 : vector<16x1xf32>
    %48 = vector.broadcast %47 : vector<16x1xf32> to vector<16x32xf32>
    %49 = arith.subf %39, %48 : vector<16x32xf32>
    %50 = arith.mulf %49, %49 : vector<16x32xf32>
    %cst_36 = arith.constant dense<0.000000e+00> : vector<16xf32>
    %51 = vector.multi_reduction <add>, %50, %cst_36 [1] : vector<16x32xf32> to vector<16xf32>
    %52 = vector.shape_cast %51 : vector<16xf32> to vector<16x1xf32>
    %cst_37 = arith.constant 3.200000e+01 : f32
    %53 = vector.broadcast %cst_37 : f32 to vector<16x1xf32>
    %54 = arith.divf %52, %53 : vector<16x1xf32>
    %55 = vector.broadcast %47 : vector<16x1xf32> to vector<16x32xf32>
    %56 = arith.subf %39, %55 : vector<16x32xf32>
    %cst_38 = arith.constant 9.99999974E-6 : f32
    %57 = vector.broadcast %cst_38 : f32 to vector<16x1xf32>
    %58 = arith.addf %54, %57 : vector<16x1xf32>
    %59 = math.rsqrt %58 : vector<16x1xf32>
    %60 = vector.broadcast %59 : vector<16x1xf32> to vector<16x32xf32>
    %61 = arith.mulf %56, %60 : vector<16x32xf32>
    %62 = vector.broadcast %41 : vector<1x32xf32> to vector<16x32xf32>
    %63 = arith.mulf %61, %62 : vector<16x32xf32>
    %64 = vector.broadcast %43 : vector<1x32xf32> to vector<16x32xf32>
    %65 = arith.addf %63, %64 : vector<16x32xf32>
    %66 = arith.truncf %65 : vector<16x32xf32> to vector<16x32xbf16>
    %c0_39 = arith.constant 0 : index
    %c0_40 = arith.constant 0 : index
    %c0_41 = arith.constant 0 : index
    %67 = vector.load %arg13[%c0_39, %c0_40, %c0_41] : memref<2x32x2048xbf16, #tpu.memory_space<vmem>>, vector<1x32x2048xbf16>
    %68 = vector.shape_cast %67 : vector<1x32x2048xbf16> to vector<32x2048xbf16>
    %cst_42 = arith.constant dense<0.000000e+00> : vector<16x2048xf32>
    %69 = tpu.matmul %66, %68, %cst_42 {dimension_numbers = #tpu.dot_dimension_numbers<[1], [0], [0], [1], [0, 0, 1, 1], [], []>} : vector<16x32xbf16>, vector<32x2048xbf16>, vector<16x2048xf32> -> vector<16x2048xf32>
    %c0_43 = arith.constant 0 : index
    %c0_44 = arith.constant 0 : index
    %c0_45 = arith.constant 0 : index
    %70 = vector.load %arg14[%c0_43, %c0_44, %c0_45] : memref<2x1x2048xf32, #tpu.memory_space<vmem>>, vector<1x1x2048xf32>
    %71 = vector.shape_cast %70 : vector<1x1x2048xf32> to vector<1x2048xf32>
    %72 = vector.broadcast %71 : vector<1x2048xf32> to vector<16x2048xf32>
    %73 = arith.addf %69, %72 : vector<16x2048xf32>
    %cst_46 = arith.constant 0.000000e+00 : f32
    %74 = vector.broadcast %cst_46 : f32 to vector<16x2048xf32>
    %75 = arith.maximumf %73, %74 : vector<16x2048xf32>
    %76 = arith.truncf %75 : vector<16x2048xf32> to vector<16x2048xbf16>
    %c0_47 = arith.constant 0 : index
    %c0_48 = arith.constant 0 : index
    %c0_49 = arith.constant 0 : index
    %77 = vector.load %arg15[%c0_47, %c0_48, %c0_49] : memref<2x2048x32xbf16, #tpu.memory_space<vmem>>, vector<1x2048x32xbf16>
    %78 = vector.shape_cast %77 : vector<1x2048x32xbf16> to vector<2048x32xbf16>
    %cst_50 = arith.constant dense<0.000000e+00> : vector<16x32xf32>
    %79 = tpu.matmul %76, %78, %cst_50 {dimension_numbers = #tpu.dot_dimension_numbers<[1], [0], [0], [1], [0, 0, 1, 1], [], []>} : vector<16x2048xbf16>, vector<2048x32xbf16>, vector<16x32xf32> -> vector<16x32xf32>
    %c0_51 = arith.constant 0 : index
    %c0_52 = arith.constant 0 : index
    %c0_53 = arith.constant 0 : index
    %80 = vector.load %arg16[%c0_51, %c0_52, %c0_53] : memref<2x1x32xf32, #tpu.memory_space<vmem>>, vector<1x1x32xf32>
    %81 = vector.shape_cast %80 : vector<1x1x32xf32> to vector<1x32xf32>
    %82 = vector.broadcast %81 : vector<1x32xf32> to vector<16x32xf32>
    %83 = arith.addf %79, %82 : vector<16x32xf32>
    %84 = arith.addf %65, %83 : vector<16x32xf32>
    %c0_54 = arith.constant 0 : index
    %c0_55 = arith.constant 0 : index
    %c0_56 = arith.constant 0 : index
    %85 = vector.load %arg17[%c0_54, %c0_55, %c0_56] : memref<2x1x32xf32, #tpu.memory_space<vmem>>, vector<1x1x32xf32>
    %86 = vector.shape_cast %85 : vector<1x1x32xf32> to vector<1x32xf32>
    %c0_57 = arith.constant 0 : index
    %c0_58 = arith.constant 0 : index
    %c0_59 = arith.constant 0 : index
    %87 = vector.load %arg18[%c0_57, %c0_58, %c0_59] : memref<2x1x32xf32, #tpu.memory_space<vmem>>, vector<1x1x32xf32>
    %88 = vector.shape_cast %87 : vector<1x1x32xf32> to vector<1x32xf32>
    %cst_60 = arith.constant dense<0.000000e+00> : vector<16xf32>
    %89 = vector.multi_reduction <add>, %84, %cst_60 [1] : vector<16x32xf32> to vector<16xf32>
    %90 = vector.shape_cast %89 : vector<16xf32> to vector<16x1xf32>
    %cst_61 = arith.constant 3.200000e+01 : f32
    %91 = vector.broadcast %cst_61 : f32 to vector<16x1xf32>
    %92 = arith.divf %90, %91 : vector<16x1xf32>
    %93 = vector.broadcast %92 : vector<16x1xf32> to vector<16x32xf32>
    %94 = arith.subf %84, %93 : vector<16x32xf32>
    %95 = arith.mulf %94, %94 : vector<16x32xf32>
    %cst_62 = arith.constant dense<0.000000e+00> : vector<16xf32>
    %96 = vector.multi_reduction <add>, %95, %cst_62 [1] : vector<16x32xf32> to vector<16xf32>
    %97 = vector.shape_cast %96 : vector<16xf32> to vector<16x1xf32>
    %cst_63 = arith.constant 3.200000e+01 : f32
    %98 = vector.broadcast %cst_63 : f32 to vector<16x1xf32>
    %99 = arith.divf %97, %98 : vector<16x1xf32>
    %100 = vector.broadcast %92 : vector<16x1xf32> to vector<16x32xf32>
    %101 = arith.subf %84, %100 : vector<16x32xf32>
    %cst_64 = arith.constant 9.99999974E-6 : f32
    %102 = vector.broadcast %cst_64 : f32 to vector<16x1xf32>
    %103 = arith.addf %99, %102 : vector<16x1xf32>
    %104 = math.rsqrt %103 : vector<16x1xf32>
    %105 = vector.broadcast %104 : vector<16x1xf32> to vector<16x32xf32>
    %106 = arith.mulf %101, %105 : vector<16x32xf32>
    %107 = vector.broadcast %86 : vector<1x32xf32> to vector<16x32xf32>
    %108 = arith.mulf %106, %107 : vector<16x32xf32>
    %109 = vector.broadcast %88 : vector<1x32xf32> to vector<16x32xf32>
    %110 = arith.addf %108, %109 : vector<16x32xf32>
    %c1 = arith.constant 1 : index
    %c0_65 = arith.constant 0 : index
    %c0_66 = arith.constant 0 : index
    %111 = vector.load %arg7[%c1, %c0_65, %c0_66] : memref<2x32x96xf32, #tpu.memory_space<vmem>>, vector<1x32x96xf32>
    %112 = vector.shape_cast %111 : vector<1x32x96xf32> to vector<32x96xf32>
    %cst_67 = arith.constant dense<0.000000e+00> : vector<16x96xf32>
    %113 = tpu.matmul %110, %112, %cst_67 {dimension_numbers = #tpu.dot_dimension_numbers<[1], [0], [0], [1], [0, 0, 1, 1], [], []>} : vector<16x32xf32>, vector<32x96xf32>, vector<16x96xf32> -> vector<16x96xf32>
    %c1_68 = arith.constant 1 : index
    %c0_69 = arith.constant 0 : index
    %c0_70 = arith.constant 0 : index
    %114 = vector.load %arg8[%c1_68, %c0_69, %c0_70] : memref<2x1x96xf32, #tpu.memory_space<vmem>>, vector<1x1x96xf32>
    %115 = vector.shape_cast %114 : vector<1x1x96xf32> to vector<1x96xf32>
    %116 = vector.broadcast %115 : vector<1x96xf32> to vector<16x96xf32>
    %117 = arith.addf %113, %116 : vector<16x96xf32>
    %cst_71 = arith.constant dense<0.000000e+00> : vector<64x96xf32>
    %118 = tpu.matmul %2, %117, %cst_71 {dimension_numbers = #tpu.dot_dimension_numbers<[1], [0], [0], [1], [0, 0, 1, 1], [], []>} : vector<64x16xf32>, vector<16x96xf32>, vector<64x96xf32> -> vector<64x96xf32>
    %119 = vector.extract_strided_slice %118 {offsets = [0, 0], sizes = [64, 32], strides = [1, 1]} : vector<64x96xf32> to vector<64x32xf32>
    %120 = vector.extract_strided_slice %118 {offsets = [0, 32], sizes = [64, 32], strides = [1, 1]} : vector<64x96xf32> to vector<64x32xf32>
    %121 = arith.mulf %120, %4 : vector<64x32xf32>
    %122 = vector.extract_strided_slice %118 {offsets = [0, 64], sizes = [64, 32], strides = [1, 1]} : vector<64x96xf32> to vector<64x32xf32>
    %123 = arith.mulf %122, %4 : vector<64x32xf32>
    "tpu.trace_start"() <{level = 10 : i32, message = "md,nd->mn"}> : () -> ()
    %cst_72 = arith.constant dense<0.000000e+00> : vector<64x64xf32>
    %124 = tpu.matmul %119, %121, %cst_72 {dimension_numbers = #tpu.dot_dimension_numbers<[1], [1], [0], [0], [0, 0, 1, 0], [], []>} : vector<64x32xf32>, vector<64x32xf32>, vector<64x64xf32> -> vector<64x64xf32>
    "tpu.trace_stop"() : () -> ()
    %125 = arith.addf %124, %1 : vector<64x64xf32>
    %cst_73 = arith.constant dense<0xFF800000> : vector<64xf32>
    %126 = vector.multi_reduction <maximumf>, %125, %cst_73 [1] : vector<64x64xf32> to vector<64xf32>
    %127 = vector.shape_cast %126 : vector<64xf32> to vector<64x1xf32>
    %128 = vector.broadcast %127 : vector<64x1xf32> to vector<64x64xf32>
    %129 = arith.subf %125, %128 : vector<64x64xf32>
    %130 = math.exp %129 : vector<64x64xf32>
    %cst_74 = arith.constant dense<0.000000e+00> : vector<64xf32>
    %131 = vector.multi_reduction <add>, %130, %cst_74 [1] : vector<64x64xf32> to vector<64xf32>
    %132 = vector.shape_cast %131 : vector<64xf32> to vector<64x1xf32>
    %133 = tpu.reciprocal %132 {approx = true} : vector<64x1xf32> -> vector<64x1xf32>
    %134 = vector.broadcast %133 : vector<64x1xf32> to vector<64x64xf32>
    %135 = arith.mulf %130, %134 : vector<64x64xf32>
    %cst_75 = arith.constant dense<0.000000e+00> : vector<64x32xf32>
    %136 = tpu.matmul %135, %123, %cst_75 {dimension_numbers = #tpu.dot_dimension_numbers<[1], [0], [0], [1], [0, 0, 1, 1], [], []>} : vector<64x64xf32>, vector<64x32xf32>, vector<64x32xf32> -> vector<64x32xf32>
    %cst_76 = arith.constant dense<0.000000e+00> : vector<16x32xf32>
    %137 = tpu.matmul %3, %136, %cst_76 {dimension_numbers = #tpu.dot_dimension_numbers<[1], [0], [0], [1], [0, 0, 1, 1], [], []>} : vector<16x64xf32>, vector<64x32xf32>, vector<16x32xf32> -> vector<16x32xf32>
    %c1_77 = arith.constant 1 : index
    %c0_78 = arith.constant 0 : index
    %c0_79 = arith.constant 0 : index
    %138 = vector.load %arg9[%c1_77, %c0_78, %c0_79] : memref<2x32x32xf32, #tpu.memory_space<vmem>>, vector<1x32x32xf32>
    %139 = vector.shape_cast %138 : vector<1x32x32xf32> to vector<32x32xf32>
    %cst_80 = arith.constant dense<0.000000e+00> : vector<16x32xf32>
    %140 = tpu.matmul %137, %139, %cst_80 {dimension_numbers = #tpu.dot_dimension_numbers<[1], [0], [0], [1], [0, 0, 1, 1], [], []>} : vector<16x32xf32>, vector<32x32xf32>, vector<16x32xf32> -> vector<16x32xf32>
    %c1_81 = arith.constant 1 : index
    %c0_82 = arith.constant 0 : index
    %c0_83 = arith.constant 0 : index
    %141 = vector.load %arg10[%c1_81, %c0_82, %c0_83] : memref<2x1x32xf32, #tpu.memory_space<vmem>>, vector<1x1x32xf32>
    %142 = vector.shape_cast %141 : vector<1x1x32xf32> to vector<1x32xf32>
    %143 = vector.broadcast %142 : vector<1x32xf32> to vector<16x32xf32>
    %144 = arith.addf %140, %143 : vector<16x32xf32>
    %145 = arith.addf %110, %144 : vector<16x32xf32>
    %c1_84 = arith.constant 1 : index
    %c0_85 = arith.constant 0 : index
    %c0_86 = arith.constant 0 : index
    %146 = vector.load %arg11[%c1_84, %c0_85, %c0_86] : memref<2x1x32xf32, #tpu.memory_space<vmem>>, vector<1x1x32xf32>
    %147 = vector.shape_cast %146 : vector<1x1x32xf32> to vector<1x32xf32>
    %c1_87 = arith.constant 1 : index
    %c0_88 = arith.constant 0 : index
    %c0_89 = arith.constant 0 : index
    %148 = vector.load %arg12[%c1_87, %c0_88, %c0_89] : memref<2x1x32xf32, #tpu.memory_space<vmem>>, vector<1x1x32xf32>
    %149 = vector.shape_cast %148 : vector<1x1x32xf32> to vector<1x32xf32>
    %cst_90 = arith.constant dense<0.000000e+00> : vector<16xf32>
    %150 = vector.multi_reduction <add>, %145, %cst_90 [1] : vector<16x32xf32> to vector<16xf32>
    %151 = vector.shape_cast %150 : vector<16xf32> to vector<16x1xf32>
    %cst_91 = arith.constant 3.200000e+01 : f32
    %152 = vector.broadcast %cst_91 : f32 to vector<16x1xf32>
    %153 = arith.divf %151, %152 : vector<16x1xf32>
    %154 = vector.broadcast %153 : vector<16x1xf32> to vector<16x32xf32>
    %155 = arith.subf %145, %154 : vector<16x32xf32>
    %156 = arith.mulf %155, %155 : vector<16x32xf32>
    %cst_92 = arith.constant dense<0.000000e+00> : vector<16xf32>
    %157 = vector.multi_reduction <add>, %156, %cst_92 [1] : vector<16x32xf32> to vector<16xf32>
    %158 = vector.shape_cast %157 : vector<16xf32> to vector<16x1xf32>
    %cst_93 = arith.constant 3.200000e+01 : f32
    %159 = vector.broadcast %cst_93 : f32 to vector<16x1xf32>
    %160 = arith.divf %158, %159 : vector<16x1xf32>
    %161 = vector.broadcast %153 : vector<16x1xf32> to vector<16x32xf32>
    %162 = arith.subf %145, %161 : vector<16x32xf32>
    %cst_94 = arith.constant 9.99999974E-6 : f32
    %163 = vector.broadcast %cst_94 : f32 to vector<16x1xf32>
    %164 = arith.addf %160, %163 : vector<16x1xf32>
    %165 = math.rsqrt %164 : vector<16x1xf32>
    %166 = vector.broadcast %165 : vector<16x1xf32> to vector<16x32xf32>
    %167 = arith.mulf %162, %166 : vector<16x32xf32>
    %168 = vector.broadcast %147 : vector<1x32xf32> to vector<16x32xf32>
    %169 = arith.mulf %167, %168 : vector<16x32xf32>
    %170 = vector.broadcast %149 : vector<1x32xf32> to vector<16x32xf32>
    %171 = arith.addf %169, %170 : vector<16x32xf32>
    %172 = arith.truncf %171 : vector<16x32xf32> to vector<16x32xbf16>
    %c1_95 = arith.constant 1 : index
    %c0_96 = arith.constant 0 : index
    %c0_97 = arith.constant 0 : index
    %173 = vector.load %arg13[%c1_95, %c0_96, %c0_97] : memref<2x32x2048xbf16, #tpu.memory_space<vmem>>, vector<1x32x2048xbf16>
    %174 = vector.shape_cast %173 : vector<1x32x2048xbf16> to vector<32x2048xbf16>
    %cst_98 = arith.constant dense<0.000000e+00> : vector<16x2048xf32>
    %175 = tpu.matmul %172, %174, %cst_98 {dimension_numbers = #tpu.dot_dimension_numbers<[1], [0], [0], [1], [0, 0, 1, 1], [], []>} : vector<16x32xbf16>, vector<32x2048xbf16>, vector<16x2048xf32> -> vector<16x2048xf32>
    %c1_99 = arith.constant 1 : index
    %c0_100 = arith.constant 0 : index
    %c0_101 = arith.constant 0 : index
    %176 = vector.load %arg14[%c1_99, %c0_100, %c0_101] : memref<2x1x2048xf32, #tpu.memory_space<vmem>>, vector<1x1x2048xf32>
    %177 = vector.shape_cast %176 : vector<1x1x2048xf32> to vector<1x2048xf32>
    %178 = vector.broadcast %177 : vector<1x2048xf32> to vector<16x2048xf32>
    %179 = arith.addf %175, %178 : vector<16x2048xf32>
    %cst_102 = arith.constant 0.000000e+00 : f32
    %180 = vector.broadcast %cst_102 : f32 to vector<16x2048xf32>
    %181 = arith.maximumf %179, %180 : vector<16x2048xf32>
    %182 = arith.truncf %181 : vector<16x2048xf32> to vector<16x2048xbf16>
    %c1_103 = arith.constant 1 : index
    %c0_104 = arith.constant 0 : index
    %c0_105 = arith.constant 0 : index
    %183 = vector.load %arg15[%c1_103, %c0_104, %c0_105] : memref<2x2048x32xbf16, #tpu.memory_space<vmem>>, vector<1x2048x32xbf16>
    %184 = vector.shape_cast %183 : vector<1x2048x32xbf16> to vector<2048x32xbf16>
    %cst_106 = arith.constant dense<0.000000e+00> : vector<16x32xf32>
    %185 = tpu.matmul %182, %184, %cst_106 {dimension_numbers = #tpu.dot_dimension_numbers<[1], [0], [0], [1], [0, 0, 1, 1], [], []>} : vector<16x2048xbf16>, vector<2048x32xbf16>, vector<16x32xf32> -> vector<16x32xf32>
    %c1_107 = arith.constant 1 : index
    %c0_108 = arith.constant 0 : index
    %c0_109 = arith.constant 0 : index
    %186 = vector.load %arg16[%c1_107, %c0_108, %c0_109] : memref<2x1x32xf32, #tpu.memory_space<vmem>>, vector<1x1x32xf32>
    %187 = vector.shape_cast %186 : vector<1x1x32xf32> to vector<1x32xf32>
    %188 = vector.broadcast %187 : vector<1x32xf32> to vector<16x32xf32>
    %189 = arith.addf %185, %188 : vector<16x32xf32>
    %190 = arith.addf %171, %189 : vector<16x32xf32>
    %c1_110 = arith.constant 1 : index
    %c0_111 = arith.constant 0 : index
    %c0_112 = arith.constant 0 : index
    %191 = vector.load %arg17[%c1_110, %c0_111, %c0_112] : memref<2x1x32xf32, #tpu.memory_space<vmem>>, vector<1x1x32xf32>
    %192 = vector.shape_cast %191 : vector<1x1x32xf32> to vector<1x32xf32>
    %c1_113 = arith.constant 1 : index
    %c0_114 = arith.constant 0 : index
    %c0_115 = arith.constant 0 : index
    %193 = vector.load %arg18[%c1_113, %c0_114, %c0_115] : memref<2x1x32xf32, #tpu.memory_space<vmem>>, vector<1x1x32xf32>
    %194 = vector.shape_cast %193 : vector<1x1x32xf32> to vector<1x32xf32>
    %cst_116 = arith.constant dense<0.000000e+00> : vector<16xf32>
    %195 = vector.multi_reduction <add>, %190, %cst_116 [1] : vector<16x32xf32> to vector<16xf32>
    %196 = vector.shape_cast %195 : vector<16xf32> to vector<16x1xf32>
    %cst_117 = arith.constant 3.200000e+01 : f32
    %197 = vector.broadcast %cst_117 : f32 to vector<16x1xf32>
    %198 = arith.divf %196, %197 : vector<16x1xf32>
    %199 = vector.broadcast %198 : vector<16x1xf32> to vector<16x32xf32>
    %200 = arith.subf %190, %199 : vector<16x32xf32>
    %201 = arith.mulf %200, %200 : vector<16x32xf32>
    %cst_118 = arith.constant dense<0.000000e+00> : vector<16xf32>
    %202 = vector.multi_reduction <add>, %201, %cst_118 [1] : vector<16x32xf32> to vector<16xf32>
    %203 = vector.shape_cast %202 : vector<16xf32> to vector<16x1xf32>
    %cst_119 = arith.constant 3.200000e+01 : f32
    %204 = vector.broadcast %cst_119 : f32 to vector<16x1xf32>
    %205 = arith.divf %203, %204 : vector<16x1xf32>
    %206 = vector.broadcast %198 : vector<16x1xf32> to vector<16x32xf32>
    %207 = arith.subf %190, %206 : vector<16x32xf32>
    %cst_120 = arith.constant 9.99999974E-6 : f32
    %208 = vector.broadcast %cst_120 : f32 to vector<16x1xf32>
    %209 = arith.addf %205, %208 : vector<16x1xf32>
    %210 = math.rsqrt %209 : vector<16x1xf32>
    %211 = vector.broadcast %210 : vector<16x1xf32> to vector<16x32xf32>
    %212 = arith.mulf %207, %211 : vector<16x32xf32>
    %213 = vector.broadcast %192 : vector<1x32xf32> to vector<16x32xf32>
    %214 = arith.mulf %212, %213 : vector<16x32xf32>
    %215 = vector.broadcast %194 : vector<1x32xf32> to vector<16x32xf32>
    %216 = arith.addf %214, %215 : vector<16x32xf32>
    %c0_121 = arith.constant 0 : index
    %c0_122 = arith.constant 0 : index
    %217 = vector.load %arg6[%c0_121, %c0_122] : memref<2x16xf32, #tpu.memory_space<vmem>>, vector<2x16xf32>
    %cst_123 = arith.constant dense<0.000000e+00> : vector<2x32xf32>
    %218 = tpu.matmul %217, %216, %cst_123 {dimension_numbers = #tpu.dot_dimension_numbers<[1], [0], [0], [1], [0, 0, 1, 1], [], []>} : vector<2x16xf32>, vector<16x32xf32>, vector<2x32xf32> -> vector<2x32xf32>
    %c0_124 = arith.constant 0 : index
    %c0_125 = arith.constant 0 : index
    %219 = vector.load %arg19[%c0_124, %c0_125] : memref<32x32xf32, #tpu.memory_space<vmem>>, vector<32x32xf32>
    %cst_126 = arith.constant dense<0.000000e+00> : vector<2x32xf32>
    %220 = tpu.matmul %218, %219, %cst_126 {dimension_numbers = #tpu.dot_dimension_numbers<[1], [0], [0], [1], [0, 0, 1, 1], [], []>} : vector<2x32xf32>, vector<32x32xf32>, vector<2x32xf32> -> vector<2x32xf32>
    %c0_127 = arith.constant 0 : index
    %c0_128 = arith.constant 0 : index
    %221 = vector.load %arg20[%c0_127, %c0_128] : memref<1x32xf32, #tpu.memory_space<vmem>>, vector<1x32xf32>
    %222 = vector.broadcast %221 : vector<1x32xf32> to vector<2x32xf32>
    %223 = arith.addf %220, %222 : vector<2x32xf32>
    %cst_129 = arith.constant 0.000000e+00 : f32
    %224 = vector.broadcast %cst_129 : f32 to vector<2x32xf32>
    %225 = arith.maximumf %223, %224 : vector<2x32xf32>
    %c0_130 = arith.constant 0 : index
    %c0_131 = arith.constant 0 : index
    %226 = vector.load %arg21[%c0_130, %c0_131] : memref<32x16xf32, #tpu.memory_space<vmem>>, vector<32x16xf32>
    %cst_132 = arith.constant dense<0.000000e+00> : vector<2x16xf32>
    %227 = tpu.matmul %225, %226, %cst_132 {dimension_numbers = #tpu.dot_dimension_numbers<[1], [0], [0], [1], [0, 0, 1, 1], [], []>} : vector<2x32xf32>, vector<32x16xf32>, vector<2x16xf32> -> vector<2x16xf32>
    %c0_133 = arith.constant 0 : index
    %c0_134 = arith.constant 0 : index
    %228 = vector.load %arg22[%c0_133, %c0_134] : memref<1x16xf32, #tpu.memory_space<vmem>>, vector<1x16xf32>
    %229 = vector.broadcast %228 : vector<1x16xf32> to vector<2x16xf32>
    %230 = arith.addf %227, %229 : vector<2x16xf32>
    %cst_135 = arith.constant 0.000000e+00 : f32
    %231 = vector.broadcast %cst_135 : f32 to vector<2x16xf32>
    %232 = arith.maximumf %230, %231 : vector<2x16xf32>
    %c0_136 = arith.constant 0 : index
    %c0_137 = arith.constant 0 : index
    %233 = vector.load %arg23[%c0_136, %c0_137] : memref<16x4xf32, #tpu.memory_space<vmem>>, vector<16x4xf32>
    %cst_138 = arith.constant dense<0.000000e+00> : vector<2x4xf32>
    %234 = tpu.matmul %232, %233, %cst_138 {dimension_numbers = #tpu.dot_dimension_numbers<[1], [0], [0], [1], [0, 0, 1, 1], [], []>} : vector<2x16xf32>, vector<16x4xf32>, vector<2x4xf32> -> vector<2x4xf32>
    %c0_139 = arith.constant 0 : index
    %c0_140 = arith.constant 0 : index
    %235 = vector.load %arg24[%c0_139, %c0_140] : memref<1x4xf32, #tpu.memory_space<vmem>>, vector<1x4xf32>
    %236 = vector.broadcast %235 : vector<1x4xf32> to vector<2x4xf32>
    %237 = arith.addf %234, %236 : vector<2x4xf32>
    %c0_141 = arith.constant 0 : index
    %c0_142 = arith.constant 0 : index
    %238 = vector.load %arg25[%c0_141, %c0_142] : memref<2x4xf32, #tpu.memory_space<vmem>>, vector<2x4xf32>
    tpu.vector_store %arg25[%c0_141, %c0_142], %237 {strides = array<i32>} : memref<2x4xf32, #tpu.memory_space<vmem>>, vector<2x4xf32>,
    return
  }
  func.func @transform_0(%arg0: i32) -> (i32, i32) {
    %c0_i32 = arith.constant 0 : i32
    %c0_i32_0 = arith.constant 0 : i32
    %c0_i32_1 = arith.constant 0 : i32
    return %c0_i32, %c0_i32_0 : i32, i32
  }
  func.func @transform_1(%arg0: i32) -> (i32, i32) {
    %c0_i32 = arith.constant 0 : i32
    %c0_i32_0 = arith.constant 0 : i32
    %c0_i32_1 = arith.constant 0 : i32
    return %c0_i32, %c0_i32_0 : i32, i32
  }
  func.func @transform_2(%arg0: i32) -> (i32, i32) {
    %c0_i32 = arith.constant 0 : i32
    %c0_i32_0 = arith.constant 0 : i32
    %c0_i32_1 = arith.constant 0 : i32
    return %c0_i32, %c0_i32_0 : i32, i32
  }
  func.func @transform_3(%arg0: i32) -> (i32, i32) {
    %c0_i32 = arith.constant 0 : i32
    %c0_i32_0 = arith.constant 0 : i32
    %c0_i32_1 = arith.constant 0 : i32
    return %c0_i32, %c0_i32_0 : i32, i32
  }
  func.func @transform_4(%arg0: i32) -> (i32, i32) {
    %c0_i32 = arith.constant 0 : i32
    %c0_i32_0 = arith.constant 0 : i32
    %c0_i32_1 = arith.constant 0 : i32
    return %c0_i32, %c0_i32_0 : i32, i32
  }
  func.func @transform_5(%arg0: i32) -> (i32, i32) {
    %c0_i32 = arith.constant 0 : i32
    %c0_i32_0 = arith.constant 0 : i32
    %c0_i32_1 = arith.constant 0 : i32
    return %c0_i32, %c0_i32_0 : i32, i32
  }
  func.func @transform_6(%arg0: i32) -> (i32, i32, i32) {
    %c0_i32 = arith.constant 0 : i32
    %c0_i32_0 = arith.constant 0 : i32
    %c0_i32_1 = arith.constant 0 : i32
    %c0_i32_2 = arith.constant 0 : i32
    return %c0_i32, %c0_i32_0, %c0_i32_1 : i32, i32, i32
  }
  func.func @transform_7(%arg0: i32) -> (i32, i32, i32) {
    %c0_i32 = arith.constant 0 : i32
    %c0_i32_0 = arith.constant 0 : i32
    %c0_i32_1 = arith.constant 0 : i32
    %c0_i32_2 = arith.constant 0 : i32
    return %c0_i32, %c0_i32_0, %c0_i32_1 : i32, i32, i32
  }
  func.func @transform_8(%arg0: i32) -> (i32, i32, i32) {
    %c0_i32 = arith.constant 0 : i32
    %c0_i32_0 = arith.constant 0 : i32
    %c0_i32_1 = arith.constant 0 : i32
    %c0_i32_2 = arith.constant 0 : i32
    return %c0_i32, %c0_i32_0, %c0_i32_1 : i32, i32, i32
  }
  func.func @transform_9(%arg0: i32) -> (i32, i32, i32) {
    %c0_i32 = arith.constant 0 : i32
    %c0_i32_0 = arith.constant 0 : i32
    %c0_i32_1 = arith.constant 0 : i32
    %c0_i32_2 = arith.constant 0 : i32
    return %c0_i32, %c0_i32_0, %c0_i32_1 : i32, i32, i32
  }
  func.func @transform_10(%arg0: i32) -> (i32, i32, i32) {
    %c0_i32 = arith.constant 0 : i32
    %c0_i32_0 = arith.constant 0 : i32
    %c0_i32_1 = arith.constant 0 : i32
    %c0_i32_2 = arith.constant 0 : i32
    return %c0_i32, %c0_i32_0, %c0_i32_1 : i32, i32, i32
  }
  func.func @transform_11(%arg0: i32) -> (i32, i32, i32) {
    %c0_i32 = arith.constant 0 : i32
    %c0_i32_0 = arith.constant 0 : i32
    %c0_i32_1 = arith.constant 0 : i32
    %c0_i32_2 = arith.constant 0 : i32
    return %c0_i32, %c0_i32_0, %c0_i32_1 : i32, i32, i32
  }
  func.func @transform_12(%arg0: i32) -> (i32, i32, i32) {
    %c0_i32 = arith.constant 0 : i32
    %c0_i32_0 = arith.constant 0 : i32
    %c0_i32_1 = arith.constant 0 : i32
    %c0_i32_2 = arith.constant 0 : i32
    return %c0_i32, %c0_i32_0, %c0_i32_1 : i32, i32, i32
  }
  func.func @transform_13(%arg0: i32) -> (i32, i32, i32) {
    %c0_i32 = arith.constant 0 : i32
    %c0_i32_0 = arith.constant 0 : i32
    %c0_i32_1 = arith.constant 0 : i32
    %c0_i32_2 = arith.constant 0 : i32
    return %c0_i32, %c0_i32_0, %c0_i32_1 : i32, i32, i32
  }
  func.func @transform_14(%arg0: i32) -> (i32, i32, i32) {
    %c0_i32 = arith.constant 0 : i32
    %c0_i32_0 = arith.constant 0 : i32
    %c0_i32_1 = arith.constant 0 : i32
    %c0_i32_2 = arith.constant 0 : i32
    return %c0_i32, %c0_i32_0, %c0_i32_1 : i32, i32, i32
  }
  func.func @transform_15(%arg0: i32) -> (i32, i32, i32) {
    %c0_i32 = arith.constant 0 : i32
    %c0_i32_0 = arith.constant 0 : i32
    %c0_i32_1 = arith.constant 0 : i32
    %c0_i32_2 = arith.constant 0 : i32
    return %c0_i32, %c0_i32_0, %c0_i32_1 : i32, i32, i32
  }
  func.func @transform_16(%arg0: i32) -> (i32, i32, i32) {
    %c0_i32 = arith.constant 0 : i32
    %c0_i32_0 = arith.constant 0 : i32
    %c0_i32_1 = arith.constant 0 : i32
    %c0_i32_2 = arith.constant 0 : i32
    return %c0_i32, %c0_i32_0, %c0_i32_1 : i32, i32, i32
  }
  func.func @transform_17(%arg0: i32) -> (i32, i32, i32) {
    %c0_i32 = arith.constant 0 : i32
    %c0_i32_0 = arith.constant 0 : i32
    %c0_i32_1 = arith.constant 0 : i32
    %c0_i32_2 = arith.constant 0 : i32
    return %c0_i32, %c0_i32_0, %c0_i32_1 : i32, i32, i32
  }
  func.func @transform_18(%arg0: i32) -> (i32, i32) {
    %c0_i32 = arith.constant 0 : i32
    %c0_i32_0 = arith.constant 0 : i32
    %c0_i32_1 = arith.constant 0 : i32
    return %c0_i32, %c0_i32_0 : i32, i32
  }
  func.func @transform_19(%arg0: i32) -> (i32, i32) {
    %c0_i32 = arith.constant 0 : i32
    %c0_i32_0 = arith.constant 0 : i32
    %c0_i32_1 = arith.constant 0 : i32
    return %c0_i32, %c0_i32_0 : i32, i32
  }
  func.func @transform_20(%arg0: i32) -> (i32, i32) {
    %c0_i32 = arith.constant 0 : i32
    %c0_i32_0 = arith.constant 0 : i32
    %c0_i32_1 = arith.constant 0 : i32
    return %c0_i32, %c0_i32_0 : i32, i32
  }
  func.func @transform_21(%arg0: i32) -> (i32, i32) {
    %c0_i32 = arith.constant 0 : i32
    %c0_i32_0 = arith.constant 0 : i32
    %c0_i32_1 = arith.constant 0 : i32
    return %c0_i32, %c0_i32_0 : i32, i32
  }
  func.func @transform_22(%arg0: i32) -> (i32, i32) {
    %c0_i32 = arith.constant 0 : i32
    %c0_i32_0 = arith.constant 0 : i32
    %c0_i32_1 = arith.constant 0 : i32
    return %c0_i32, %c0_i32_0 : i32, i32
  }
  func.func @transform_23(%arg0: i32) -> (i32, i32) {
    %c0_i32 = arith.constant 0 : i32
    %c0_i32_0 = arith.constant 0 : i32
    %c0_i32_1 = arith.constant 0 : i32
    return %c0_i32, %c0_i32_0 : i32, i32
  }
  func.func @transform_24(%arg0: i32) -> (i32, i32) {
    %c0_i32 = arith.constant 0 : i32
    %c0_i32_0 = arith.constant 0 : i32
    %c0_i32_1 = arith.constant 0 : i32
    return %c0_i32, %c0_i32_0 : i32, i32
  }
}

</mosaic_0001>

<llo_original>
// kernel: transformer_control_forward.1
$region0: #{transformer_control_forward.1}
  #allocation0 [shape = 'u32[]', space=smem, size = 0x4, offset = 0x4, fixed_abs, tag = 'smem constant byte address 0x4 - core index']
  #allocation1 [shape = 'u32[72,128]{1,0:T(1,128)}', space=vmem, size = 0x9000, scoped, tag = 'internal scratch']
  %s0 = inlined_call_operand.vmem [shape: f32[16,32], index: 0, kind: input, shape index: {}]
  %s1 = inlined_call_operand.vmem [shape: f32[64,64], index: 1, kind: input, shape index: {}]
  %s2 = inlined_call_operand.vmem [shape: f32[64,16], index: 2, kind: input, shape index: {}]
  %s3 = inlined_call_operand.vmem [shape: f32[16,64], index: 3, kind: input, shape index: {}]
  %s4 = inlined_call_operand.vmem [shape: f32[64,32], index: 4, kind: input, shape index: {}]
  %s5 = inlined_call_operand.vmem [shape: f32[2,16], index: 5, kind: input, shape index: {}]
  %s6 = inlined_call_operand.vmem [shape: f32[2,32,96], index: 6, kind: input, shape index: {}]
  %s7 = inlined_call_operand.vmem [shape: f32[2,1,96], index: 7, kind: input, shape index: {}]
  %s8 = inlined_call_operand.vmem [shape: f32[2,32,32], index: 8, kind: input, shape index: {}]
  %s9 = inlined_call_operand.vmem [shape: f32[2,1,32], index: 9, kind: input, shape index: {}]
  %s10 = inlined_call_operand.vmem [shape: f32[2,1,32], index: 10, kind: input, shape index: {}]
  %s11 = inlined_call_operand.vmem [shape: f32[2,1,32], index: 11, kind: input, shape index: {}]
  %s12 = inlined_call_operand.vmem [shape: bf16[2,32,2048], index: 12, kind: input, shape index: {}]
  %s13 = inlined_call_operand.vmem [shape: f32[2,1,2048], index: 13, kind: input, shape index: {}]
  %s14 = inlined_call_operand.vmem [shape: bf16[2,2048,32], index: 14, kind: input, shape index: {}]
  %s15 = inlined_call_operand.vmem [shape: f32[2,1,32], index: 15, kind: input, shape index: {}]
  %s16 = inlined_call_operand.vmem [shape: f32[2,1,32], index: 16, kind: input, shape index: {}]
  %s17 = inlined_call_operand.vmem [shape: f32[2,1,32], index: 17, kind: input, shape index: {}]
  %s18 = inlined_call_operand.vmem [shape: f32[32,32], index: 18, kind: input, shape index: {}]
  %s19 = inlined_call_operand.vmem [shape: f32[1,32], index: 19, kind: input, shape index: {}]
  %s20 = inlined_call_operand.vmem [shape: f32[32,16], index: 20, kind: input, shape index: {}]
  %s21 = inlined_call_operand.vmem [shape: f32[1,16], index: 21, kind: input, shape index: {}]
  %s22 = inlined_call_operand.vmem [shape: f32[16,4], index: 22, kind: input, shape index: {}]
  %s23 = inlined_call_operand.vmem [shape: f32[1,4], index: 23, kind: input, shape index: {}]
  %s24 = inlined_call_operand.hbm [shape: f32[2,4], index: 24, kind: output, shape index: {}]
  %s25 = sld [smem:[#allocation0]]
  $region106: #{transformer_control_forward.1} parent=0
    _
  %s27 = ssub.s32 1, %s25
  %s28 = scalar_select 0, %s27, %s25
  $region1: #{transformer_control_forward.1} parent=0
    #allocation2 [shape = 'u8[1024]{0}', space=vmem, size = 0x400, scoped, tag = 'output window, operand 0, single buffered']
    #allocation3 [shape = 's32[1]{0}', space=sflag, size = 0x4, scoped, tag = 'scoped memory for transformer_control_forward.1']
    %29 = vsyncpa [#allocation3], 0
    // Predicated region
    $region2: #{transformer_control_forward.1} parent=1 // pred_check
      _
    $region3: #{transformer_control_forward.1} parent=1 // pred_check_branch
      %31 = sbr.rel (0) target = $region5
    $region4: #{transformer_control_forward.1} parent=1 // pred_region
      _
    $region5: #{transformer_control_forward.1} parent=1 // pred_fallthru
      _
    // Predicated region
    $region6: #{transformer_control_forward.1} parent=1 // pred_check
      _
    $region7: #{transformer_control_forward.1} parent=1 // pred_check_branch
      %33 = sbr.rel (0) target = $region9
    $region8: #{transformer_control_forward.1} parent=1 // pred_region
      _
    $region9: #{transformer_control_forward.1} parent=1 // pred_fallthru
      _
    // Predicated region
    $region10: #{transformer_control_forward.1} parent=1 // pred_check
      _
    $region11: #{transformer_control_forward.1} parent=1 // pred_check_branch
      %35 = sbr.rel (0) target = $region13
    $region12: #{transformer_control_forward.1} parent=1 // pred_region
      _
    $region13: #{transformer_control_forward.1} parent=1 // pred_fallthru
      _
    // Predicated region
    $region14: #{transformer_control_forward.1} parent=1 // pred_check
      _
    $region15: #{transformer_control_forward.1} parent=1 // pred_check_branch
      %37 = sbr.rel (0) target = $region17
    $region16: #{transformer_control_forward.1} parent=1 // pred_region
      _
    $region17: #{transformer_control_forward.1} parent=1 // pred_fallthru
      _
    // Predicated region
    $region18: #{transformer_control_forward.1} parent=1 // pred_check
      _
    $region19: #{transformer_control_forward.1} parent=1 // pred_check_branch
      %39 = sbr.rel (0) target = $region21
    $region20: #{transformer_control_forward.1} parent=1 // pred_region
      _
    $region21: #{transformer_control_forward.1} parent=1 // pred_fallthru
      _
    // Predicated region
    $region22: #{transformer_control_forward.1} parent=1 // pred_check
      _
    $region23: #{transformer_control_forward.1} parent=1 // pred_check_branch
      %41 = sbr.rel (0) target = $region25
    $region24: #{transformer_control_forward.1} parent=1 // pred_region
      _
    $region25: #{transformer_control_forward.1} parent=1 // pred_fallthru
      _
    // Predicated region
    $region26: #{transformer_control_forward.1} parent=1 // pred_check
      _
    $region27: #{transformer_control_forward.1} parent=1 // pred_check_branch
      %43 = sbr.rel (0) target = $region29
    $region28: #{transformer_control_forward.1} parent=1 // pred_region
      _
    $region29: #{transformer_control_forward.1} parent=1 // pred_fallthru
      _
    // Predicated region
    $region30: #{transformer_control_forward.1} parent=1 // pred_check
      _
    $region31: #{transformer_control_forward.1} parent=1 // pred_check_branch
      %45 = sbr.rel (0) target = $region33
    $region32: #{transformer_control_forward.1} parent=1 // pred_region
      _
    $region33: #{transformer_control_forward.1} parent=1 // pred_fallthru
      _
    // Predicated region
    $region34: #{transformer_control_forward.1} parent=1 // pred_check
      _
    $region35: #{transformer_control_forward.1} parent=1 // pred_check_branch
      %47 = sbr.rel (0) target = $region37
    $region36: #{transformer_control_forward.1} parent=1 // pred_region
      _
    $region37: #{transformer_control_forward.1} parent=1 // pred_fallthru
      _
    // Predicated region
    $region38: #{transformer_control_forward.1} parent=1 // pred_check
      _
    $region39: #{transformer_control_forward.1} parent=1 // pred_check_branch
      %49 = sbr.rel (0) target = $region41
    $region40: #{transformer_control_forward.1} parent=1 // pred_region
      _
    $region41: #{transformer_control_forward.1} parent=1 // pred_fallthru
      _
    // Predicated region
    $region42: #{transformer_control_forward.1} parent=1 // pred_check
      _
    $region43: #{transformer_control_forward.1} parent=1 // pred_check_branch
      %51 = sbr.rel (0) target = $region45
    $region44: #{transformer_control_forward.1} parent=1 // pred_region
      _
    $region45: #{transformer_control_forward.1} parent=1 // pred_fallthru
      _
    // Predicated region
    $region46: #{transformer_control_forward.1} parent=1 // pred_check
      _
    $region47: #{transformer_control_forward.1} parent=1 // pred_check_branch
      %53 = sbr.rel (0) target = $region49
    $region48: #{transformer_control_forward.1} parent=1 // pred_region
      _
    $region49: #{transformer_control_forward.1} parent=1 // pred_fallthru
      _
    // Predicated region
    $region50: #{transformer_control_forward.1} parent=1 // pred_check
      _
    $region51: #{transformer_control_forward.1} parent=1 // pred_check_branch
      %55 = sbr.rel (0) target = $region53
    $region52: #{transformer_control_forward.1} parent=1 // pred_region
      _
    $region53: #{transformer_control_forward.1} parent=1 // pred_fallthru
      _
    // Predicated region
    $region54: #{transformer_control_forward.1} parent=1 // pred_check
      _
    $region55: #{transformer_control_forward.1} parent=1 // pred_check_branch
      %57 = sbr.rel (0) target = $region57
    $region56: #{transformer_control_forward.1} parent=1 // pred_region
      _
    $region57: #{transformer_control_forward.1} parent=1 // pred_fallthru
      _
    // Predicated region
    $region58: #{transformer_control_forward.1} parent=1 // pred_check
      _
    $region59: #{transformer_control_forward.1} parent=1 // pred_check_branch
      %59 = sbr.rel (0) target = $region61
    $region60: #{transformer_control_forward.1} parent=1 // pred_region
      _
    $region61: #{transformer_control_forward.1} parent=1 // pred_fallthru
      _
    // Predicated region
    $region62: #{transformer_control_forward.1} parent=1 // pred_check
      _
    $region63: #{transformer_control_forward.1} parent=1 // pred_check_branch
      %61 = sbr.rel (0) target = $region65
    $region64: #{transformer_control_forward.1} parent=1 // pred_region
      _
    $region65: #{transformer_control_forward.1} parent=1 // pred_fallthru
      _
    // Predicated region
    $region66: #{transformer_control_forward.1} parent=1 // pred_check
      _
    $region67: #{transformer_control_forward.1} parent=1 // pred_check_branch
      %63 = sbr.rel (0) target = $region69
    $region68: #{transformer_control_forward.1} parent=1 // pred_region
      _
    $region69: #{transformer_control_forward.1} parent=1 // pred_fallthru
      _
    // Predicated region
    $region70: #{transformer_control_forward.1} parent=1 // pred_check
      _
    $region71: #{transformer_control_forward.1} parent=1 // pred_check_branch
      %65 = sbr.rel (0) target = $region73
    $region72: #{transformer_control_forward.1} parent=1 // pred_region
      _
    $region73: #{transformer_control_forward.1} parent=1 // pred_fallthru
      _
    // Predicated region
    $region74: #{transformer_control_forward.1} parent=1 // pred_check
      _
    $region75: #{transformer_control_forward.1} parent=1 // pred_check_branch
      %67 = sbr.rel (0) target = $region77
    $region76: #{transformer_control_forward.1} parent=1 // pred_region
      _
    $region77: #{transformer_control_forward.1} parent=1 // pred_fallthru
      _
    // Predicated region
    $region78: #{transformer_control_forward.1} parent=1 // pred_check
      _
    $region79: #{transformer_control_forward.1} parent=1 // pred_check_branch
      %69 = sbr.rel (0) target = $region81
    $region80: #{transformer_control_forward.1} parent=1 // pred_region
      _
    $region81: #{transformer_control_forward.1} parent=1 // pred_fallthru
      _
    // Predicated region
    $region82: #{transformer_control_forward.1} parent=1 // pred_check
      _
    $region83: #{transformer_control_forward.1} parent=1 // pred_check_branch
      %71 = sbr.rel (0) target = $region85
    $region84: #{transformer_control_forward.1} parent=1 // pred_region
      _
    $region85: #{transformer_control_forward.1} parent=1 // pred_fallthru
      _
    // Predicated region
    $region86: #{transformer_control_forward.1} parent=1 // pred_check
      _
    $region87: #{transformer_control_forward.1} parent=1 // pred_check_branch
      %73 = sbr.rel (0) target = $region89
    $region88: #{transformer_control_forward.1} parent=1 // pred_region
      _
    $region89: #{transformer_control_forward.1} parent=1 // pred_fallthru
      _
    // Predicated region
    $region90: #{transformer_control_forward.1} parent=1 // pred_check
      _
    $region91: #{transformer_control_forward.1} parent=1 // pred_check_branch
      %75 = sbr.rel (0) target = $region93
    $region92: #{transformer_control_forward.1} parent=1 // pred_region
      _
    $region93: #{transformer_control_forward.1} parent=1 // pred_fallthru
      _
    // Predicated region
    $region94: #{transformer_control_forward.1} parent=1 // pred_check
      _
    $region95: #{transformer_control_forward.1} parent=1 // pred_check_branch
      %77 = sbr.rel (0) target = $region97
    $region96: #{transformer_control_forward.1} parent=1 // pred_region
      _
    $region97: #{transformer_control_forward.1} parent=1 // pred_fallthru
      _
    %v79 = vld [vmem:[%s0] sm:$0xff]
    %v80 = vld [vmem:[%s0 + $0x8] sm:$0xff]
    %v81 = vld [vmem:[%s1] sm:$0xff]
    %v82 = vld [vmem:[%s1 + $0x8] sm:$0xff]
    %v83 = vld [vmem:[%s1 + $0x10] sm:$0xff]
    %v84 = vld [vmem:[%s1 + $0x18] sm:$0xff]
    %v85 = vld [vmem:[%s1 + $0x20] sm:$0xff]
    %v86 = vld [vmem:[%s1 + $0x28] sm:$0xff]
    %v87 = vld [vmem:[%s1 + $0x30] sm:$0xff]
    %v88 = vld [vmem:[%s1 + $0x38] sm:$0xff]
    %v89 = vld [vmem:[%s2] sm:$0xff]
    %v90 = vld [vmem:[%s2 + $0x8] sm:$0xff]
    %v91 = vld [vmem:[%s2 + $0x10] sm:$0xff]
    %v92 = vld [vmem:[%s2 + $0x18] sm:$0xff]
    %v93 = vld [vmem:[%s2 + $0x20] sm:$0xff]
    %v94 = vld [vmem:[%s2 + $0x28] sm:$0xff]
    %v95 = vld [vmem:[%s2 + $0x30] sm:$0xff]
    %v96 = vld [vmem:[%s2 + $0x38] sm:$0xff]
    %v97 = vld [vmem:[%s3] sm:$0xff]
    %v98 = vld [vmem:[%s3 + $0x8] sm:$0xff]
    %v99 = vld [vmem:[%s4] sm:$0xff]
    %v100 = vld [vmem:[%s4 + $0x8] sm:$0xff]
    %v101 = vld [vmem:[%s4 + $0x10] sm:$0xff]
    %v102 = vld [vmem:[%s4 + $0x18] sm:$0xff]
    %v103 = vld [vmem:[%s4 + $0x20] sm:$0xff]
    %v104 = vld [vmem:[%s4 + $0x28] sm:$0xff]
    %v105 = vld [vmem:[%s4 + $0x30] sm:$0xff]
    %v106 = vld [vmem:[%s4 + $0x38] sm:$0xff]
    %v107 = vld [vmem:[%s6] sm:$0xff]
    %v108 = vld [vmem:[%s6 + $0x8] sm:$0xff]
    %v109 = vld [vmem:[%s6 + $0x10] sm:$0xff]
    %v110 = vld [vmem:[%s6 + $0x18] sm:$0xff]
    %v111 = vld [vmem:[%s7] sm:$0x1]
    %v113 = vperm.slane %v111, 0
    %vm115 = vcmask 261120
    %v117 = vsel %vm115, %v79, 0
    %v120 = vsel %vm115, %v80, 0
    %122 = vmatpush.msra.mxu0 0.0
    %123 = vmatpush.msra.mxu0 0.0
    %124 = vmatpush.msra.mxu0 0.0
    %125 = vmatpush.msra.mxu0 0.0
    %126 = vmatpush.msra.mxu0 0.0
    %127 = vmatpush.msra.mxu0 0.0
    %128 = vmatpush.msra.mxu0 0.0
    %129 = vmatpush.msra.mxu0 0.0
    %130 = vmatpush.msra.mxu0 0.0
    %131 = vmatpush.msra.mxu0 0.0
    %132 = vmatpush.msra.mxu0 0.0
    %133 = vmatpush.msra.mxu0 0.0
    %134 = vmatpush.msra.mxu0 %v110
    %135 = vmatpush.msra.mxu0 %v109
    %136 = vmatpush.msra.mxu0 %v108
    %137 = vmatpush.msra.mxu0 %v107
    %138 = vmatmul.f32.gmra.mxu0 %v117
    %v139 = vpop.f32.mrf.mxu0
    %v140 = vadd.f32 %v113, %v139
    %141 = vmatmul.f32.gmra.mxu0 %v120
    %v142 = vpop.f32.mrf.mxu0
    %v143 = vadd.f32 %v113, %v142
    %144 = vdwg.mxu0
    %vm145 = vcmask 130048
    %v147 = vsel %vm145, %v89, 0
    %v150 = vsel %vm145, %v90, 0
    %v153 = vsel %vm145, %v91, 0
    %v156 = vsel %vm145, %v92, 0
    %v159 = vsel %vm145, %v93, 0
    %v162 = vsel %vm145, %v94, 0
    %v165 = vsel %vm145, %v95, 0
    %v168 = vsel %vm145, %v96, 0
    %170 = vmatpush.msra.mxu0 0.0
    %171 = vmatpush.msra.mxu0 0.0
    %172 = vmatpush.msra.mxu0 0.0
    %173 = vmatpush.msra.mxu0 0.0
    %174 = vmatpush.msra.mxu0 0.0
    %175 = vmatpush.msra.mxu0 0.0
    %176 = vmatpush.msra.mxu0 0.0
    %177 = vmatpush.msra.mxu0 0.0
    %178 = vmatpush.msra.mxu0 0.0
    %179 = vmatpush.msra.mxu0 0.0
    %180 = vmatpush.msra.mxu0 0.0
    %181 = vmatpush.msra.mxu0 0.0
    %182 = vmatpush.msra.mxu0 0.0
    %183 = vmatpush.msra.mxu0 0.0
    %184 = vmatpush.msra.mxu0 %v143
    %185 = vmatpush.msra.mxu0 %v140
    %186 = vmatmul.f32.gmra.mxu0 %v147
    %v187 = vpop.f32.mrf.mxu0
    %v188 = vadd.f32 0.0, %v187
    %189 = vmatmul.f32.gmra.mxu0 %v150
    %v190 = vpop.f32.mrf.mxu0
    %v191 = vadd.f32 0.0, %v190
    %192 = vmatmul.f32.gmra.mxu0 %v153
    %v193 = vpop.f32.mrf.mxu0
    %v194 = vadd.f32 0.0, %v193
    %195 = vmatmul.f32.gmra.mxu0 %v156
    %v196 = vpop.f32.mrf.mxu0
    %v197 = vadd.f32 0.0, %v196
    %198 = vmatmul.f32.gmra.mxu0 %v159
    %v199 = vpop.f32.mrf.mxu0
    %v200 = vadd.f32 0.0, %v199
    %201 = vmatmul.f32.gmra.mxu0 %v162
    %v202 = vpop.f32.mrf.mxu0
    %v203 = vadd.f32 0.0, %v202
    %204 = vmatmul.f32.gmra.mxu0 %v165
    %v205 = vpop.f32.mrf.mxu0
    %v206 = vadd.f32 0.0, %v205
    %207 = vmatmul.f32.gmra.mxu0 %v168
    %v208 = vpop.f32.mrf.mxu0
    %v209 = vadd.f32 0.0, %v208
    %210 = vdwg.mxu0
    %219 = vrot.lane.b32.xlu0 %v99, 32
    %v220 = vpop.permute.xlu0 %219
    %221 = vrot.lane.b32.xlu0 %v100, 32
    %v222 = vpop.permute.xlu0 %221
    %223 = vrot.lane.b32.xlu0 %v101, 32
    %v224 = vpop.permute.xlu0 %223
    %225 = vrot.lane.b32.xlu0 %v102, 32
    %v226 = vpop.permute.xlu0 %225
    %227 = vrot.lane.b32.xlu0 %v103, 32
    %v228 = vpop.permute.xlu0 %227
    %229 = vrot.lane.b32.xlu0 %v104, 32
    %v230 = vpop.permute.xlu0 %229
    %231 = vrot.lane.b32.xlu0 %v105, 32
    %v232 = vpop.permute.xlu0 %231
    %233 = vrot.lane.b32.xlu0 %v106, 32
    %v234 = vpop.permute.xlu0 %233
    %v243 = vmul.f32 %v188, %v220
    %v244 = vmul.f32 %v191, %v222
    %v245 = vmul.f32 %v194, %v224
    %v246 = vmul.f32 %v197, %v226
    %v247 = vmul.f32 %v200, %v228
    %v248 = vmul.f32 %v203, %v230
    %v249 = vmul.f32 %v206, %v232
    %v250 = vmul.f32 %v209, %v234
    %251 = vrot.lane.b32.xlu0 %v99, 64
    %v252 = vpop.permute.xlu0 %251
    %253 = vrot.lane.b32.xlu0 %v100, 64
    %v254 = vpop.permute.xlu0 %253
    %255 = vrot.lane.b32.xlu0 %v101, 64
    %v256 = vpop.permute.xlu0 %255
    %257 = vrot.lane.b32.xlu0 %v102, 64
    %v258 = vpop.permute.xlu0 %257
    %259 = vrot.lane.b32.xlu0 %v103, 64
    %v260 = vpop.permute.xlu0 %259
    %261 = vrot.lane.b32.xlu0 %v104, 64
    %v262 = vpop.permute.xlu0 %261
    %263 = vrot.lane.b32.xlu0 %v105, 64
    %v264 = vpop.permute.xlu0 %263
    %265 = vrot.lane.b32.xlu0 %v106, 64
    %v266 = vpop.permute.xlu0 %265
    %v275 = vmul.f32 %v188, %v252
    %v276 = vmul.f32 %v191, %v254
    %v277 = vmul.f32 %v194, %v256
    %v278 = vmul.f32 %v197, %v258
    %v279 = vmul.f32 %v200, %v260
    %v280 = vmul.f32 %v203, %v262
    %v281 = vmul.f32 %v206, %v264
    %v282 = vmul.f32 %v209, %v266
    %291 = vrot.lane.b32.xlu0 %v243, 96
    %v292 = vpop.permute.xlu0 %291
    %293 = vrot.lane.b32.xlu0 %v244, 96
    %v294 = vpop.permute.xlu0 %293
    %295 = vrot.lane.b32.xlu0 %v245, 96
    %v296 = vpop.permute.xlu0 %295
    %297 = vrot.lane.b32.xlu0 %v246, 96
    %v298 = vpop.permute.xlu0 %297
    %299 = vrot.lane.b32.xlu0 %v247, 96
    %v300 = vpop.permute.xlu0 %299
    %301 = vrot.lane.b32.xlu0 %v248, 96
    %v302 = vpop.permute.xlu0 %301
    %303 = vrot.lane.b32.xlu0 %v249, 96
    %v304 = vpop.permute.xlu0 %303
    %305 = vrot.lane.b32.xlu0 %v250, 96
    %v306 = vpop.permute.xlu0 %305
    %v308 = vsel %vm115, %v188, 0
    %v311 = vsel %vm115, %v191, 0
    %v314 = vsel %vm115, %v194, 0
    %v317 = vsel %vm115, %v197, 0
    %v320 = vsel %vm115, %v200, 0
    %v323 = vsel %vm115, %v203, 0
    %v326 = vsel %vm115, %v206, 0
    %v329 = vsel %vm115, %v209, 0
    %v331 = vsel %vm115, %v292, 0
    %v333 = vsel %vm115, %v294, 0
    %v335 = vsel %vm115, %v296, 0
    %v337 = vsel %vm115, %v298, 0
    %v339 = vsel %vm115, %v300, 0
    %v341 = vsel %vm115, %v302, 0
    %v343 = vsel %vm115, %v304, 0
    %v345 = vsel %vm115, %v306, 0
    %347 = vmatpush.xpose.msra.mxu0 0.0
    %348 = vmatpush.xpose.msra.mxu0 0.0
    %349 = vmatpush.xpose.msra.mxu0 0.0
    %350 = vmatpush.xpose.msra.mxu0 0.0
    %351 = vmatpush.xpose.msra.mxu0 0.0
    %352 = vmatpush.xpose.msra.mxu0 0.0
    %353 = vmatpush.xpose.msra.mxu0 0.0
    %354 = vmatpush.xpose.msra.mxu0 0.0
    %355 = vmatpush.xpose.msra.mxu0 %v345
    %356 = vmatpush.xpose.msra.mxu0 %v343
    %357 = vmatpush.xpose.msra.mxu0 %v341
    %358 = vmatpush.xpose.msra.mxu0 %v339
    %359 = vmatpush.xpose.msra.mxu0 %v337
    %360 = vmatpush.xpose.msra.mxu0 %v335
    %361 = vmatpush.xpose.msra.mxu0 %v333
    %362 = vmatpush.xpose.msra.mxu0 %v331
    %363 = vmatmul.f32.gmra.mxu0 %v308
    %v364 = vpop.f32.mrf.mxu0
    %v365 = vadd.f32 %v81, %v364
    %366 = vmatmul.f32.gmra.mxu0 %v311
    %v367 = vpop.f32.mrf.mxu0
    %v368 = vadd.f32 %v82, %v367
    %369 = vmatmul.f32.gmra.mxu0 %v314
    %v370 = vpop.f32.mrf.mxu0
    %v371 = vadd.f32 %v83, %v370
    %372 = vmatmul.f32.gmra.mxu0 %v317
    %v373 = vpop.f32.mrf.mxu0
    %v374 = vadd.f32 %v84, %v373
    %375 = vmatmul.f32.gmra.mxu0 %v320
    %v376 = vpop.f32.mrf.mxu0
    %v377 = vadd.f32 %v85, %v376
    %378 = vmatmul.f32.gmra.mxu0 %v323
    %v379 = vpop.f32.mrf.mxu0
    %v380 = vadd.f32 %v86, %v379
    %381 = vmatmul.f32.gmra.mxu0 %v326
    %v382 = vpop.f32.mrf.mxu0
    %v383 = vadd.f32 %v87, %v382
    %384 = vmatmul.f32.gmra.mxu0 %v329
    %v385 = vpop.f32.mrf.mxu0
    %v386 = vadd.f32 %v88, %v385
    %387 = vdwg.mxu0
    %vm388 = vcmask 523264
    %v389 = vsel %vm388, %v365, -inf
    %390 = vmax.xlane.f32.xlu0 %v389
    %v391 = vpop.xlane.xlu0 %390
    %v392 = vsel %vm388, %v368, -inf
    %393 = vmax.xlane.f32.xlu0 %v392
    %v394 = vpop.xlane.xlu0 %393
    %v395 = vsel %vm388, %v371, -inf
    %396 = vmax.xlane.f32.xlu0 %v395
    %v397 = vpop.xlane.xlu0 %396
    %v398 = vsel %vm388, %v374, -inf
    %399 = vmax.xlane.f32.xlu0 %v398
    %v400 = vpop.xlane.xlu0 %399
    %v401 = vsel %vm388, %v377, -inf
    %402 = vmax.xlane.f32.xlu0 %v401
    %v403 = vpop.xlane.xlu0 %402
    %v404 = vsel %vm388, %v380, -inf
    %405 = vmax.xlane.f32.xlu0 %v404
    %v406 = vpop.xlane.xlu0 %405
    %v407 = vsel %vm388, %v383, -inf
    %408 = vmax.xlane.f32.xlu0 %v407
    %v409 = vpop.xlane.xlu0 %408
    %v410 = vsel %vm388, %v386, -inf
    %411 = vmax.xlane.f32.xlu0 %v410
    %v412 = vpop.xlane.xlu0 %411
    %v413 = vsub.f32 %v365, %v391
    %v414 = vsub.f32 %v368, %v394
    %v415 = vsub.f32 %v371, %v397
    %v416 = vsub.f32 %v374, %v400
    %v417 = vsub.f32 %v377, %v403
    %v418 = vsub.f32 %v380, %v406
    %v419 = vsub.f32 %v383, %v409
    %v420 = vsub.f32 %v386, %v412
    %v421 = vmul.f32 %v413, 1.442695
    %v422 = vpow.pop %v421
    %v423 = vmul.f32 %v414, 1.442695
    %v424 = vpow.pop %v423
    %v425 = vmul.f32 %v415, 1.442695
    %v426 = vpow.pop %v425
    %v427 = vmul.f32 %v416, 1.442695
    %v428 = vpow.pop %v427
    %v429 = vmul.f32 %v417, 1.442695
    %v430 = vpow.pop %v429
    %v431 = vmul.f32 %v418, 1.442695
    %v432 = vpow.pop %v431
    %v433 = vmul.f32 %v419, 1.442695
    %v434 = vpow.pop %v433
    %v435 = vmul.f32 %v420, 1.442695
    %v436 = vpow.pop %v435
    %v437 = vsel %vm388, %v422, 0.0
    %438 = vadd.xlane.f32.xlu0 %v437
    %v439 = vpop.xlane.xlu0 %438
    %v440 = vsel %vm388, %v424, 0.0
    %441 = vadd.xlane.f32.xlu0 %v440
    %v442 = vpop.xlane.xlu0 %441
    %v443 = vsel %vm388, %v426, 0.0
    %444 = vadd.xlane.f32.xlu0 %v443
    %v445 = vpop.xlane.xlu0 %444
    %v446 = vsel %vm388, %v428, 0.0
    %447 = vadd.xlane.f32.xlu0 %v446
    %v448 = vpop.xlane.xlu0 %447
    %v449 = vsel %vm388, %v430, 0.0
    %450 = vadd.xlane.f32.xlu0 %v449
    %v451 = vpop.xlane.xlu0 %450
    %v452 = vsel %vm388, %v432, 0.0
    %453 = vadd.xlane.f32.xlu0 %v452
    %v454 = vpop.xlane.xlu0 %453
    %v455 = vsel %vm388, %v434, 0.0
    %456 = vadd.xlane.f32.xlu0 %v455
    %v457 = vpop.xlane.xlu0 %456
    %v458 = vsel %vm388, %v436, 0.0
    %459 = vadd.xlane.f32.xlu0 %v458
    %v460 = vpop.xlane.xlu0 %459
    %v461 = vrcp.pop %v439
    %v462 = vrcp.pop %v442
    %v463 = vrcp.pop %v445
    %v464 = vrcp.pop %v448
    %v465 = vrcp.pop %v451
    %v466 = vrcp.pop %v454
    %v467 = vrcp.pop %v457
    %v468 = vrcp.pop %v460
    %v469 = vmul.f32 %v422, %v461
    %v470 = vmul.f32 %v424, %v462
    %v471 = vmul.f32 %v426, %v463
    %v472 = vmul.f32 %v428, %v464
    %v473 = vmul.f32 %v430, %v465
    %v474 = vmul.f32 %v432, %v466
    %v475 = vmul.f32 %v434, %v467
    %v476 = vmul.f32 %v436, %v468
    %485 = vrot.lane.b32.xlu0 %v275, 64
    %v486 = vpop.permute.xlu0 %485
    %487 = vrot.lane.b32.xlu0 %v276, 64
    %v488 = vpop.permute.xlu0 %487
    %489 = vrot.lane.b32.xlu0 %v277, 64
    %v490 = vpop.permute.xlu0 %489
    %491 = vrot.lane.b32.xlu0 %v278, 64
    %v492 = vpop.permute.xlu0 %491
    %493 = vrot.lane.b32.xlu0 %v279, 64
    %v494 = vpop.permute.xlu0 %493
    %495 = vrot.lane.b32.xlu0 %v280, 64
    %v496 = vpop.permute.xlu0 %495
    %497 = vrot.lane.b32.xlu0 %v281, 64
    %v498 = vpop.permute.xlu0 %497
    %499 = vrot.lane.b32.xlu0 %v282, 64
    %v500 = vpop.permute.xlu0 %499
    %v510 = vsel %vm388, %v469, 0
    %v513 = vsel %vm388, %v470, 0
    %v516 = vsel %vm388, %v471, 0
    %v519 = vsel %vm388, %v472, 0
    %v522 = vsel %vm388, %v473, 0
    %v525 = vsel %vm388, %v474, 0
    %v528 = vsel %vm388, %v475, 0
    %v531 = vsel %vm388, %v476, 0
    %533 = vmatpush.msra.mxu0 0.0
    %534 = vmatpush.msra.mxu0 0.0
    %535 = vmatpush.msra.mxu0 0.0
    %536 = vmatpush.msra.mxu0 0.0
    %537 = vmatpush.msra.mxu0 0.0
    %538 = vmatpush.msra.mxu0 0.0
    %539 = vmatpush.msra.mxu0 0.0
    %540 = vmatpush.msra.mxu0 0.0
    %541 = vmatpush.msra.mxu0 %v500
    %542 = vmatpush.msra.mxu0 %v498
    %543 = vmatpush.msra.mxu0 %v496
    %544 = vmatpush.msra.mxu0 %v494
    %545 = vmatpush.msra.mxu0 %v492
    %546 = vmatpush.msra.mxu0 %v490
    %547 = vmatpush.msra.mxu0 %v488
    %548 = vmatpush.msra.mxu0 %v486
    %549 = vmatmul.f32.gmra.mxu0 %v510
    %v550 = vpop.f32.mrf.mxu0
    %v551 = vadd.f32 0.0, %v550
    %552 = vmatmul.f32.gmra.mxu0 %v513
    %v553 = vpop.f32.mrf.mxu0
    %v554 = vadd.f32 0.0, %v553
    %555 = vmatmul.f32.gmra.mxu0 %v516
    %v556 = vpop.f32.mrf.mxu0
    %v557 = vadd.f32 0.0, %v556
    %558 = vmatmul.f32.gmra.mxu0 %v519
    %v559 = vpop.f32.mrf.mxu0
    %v560 = vadd.f32 0.0, %v559
    %561 = vmatmul.f32.gmra.mxu0 %v522
    %v562 = vpop.f32.mrf.mxu0
    %v563 = vadd.f32 0.0, %v562
    %564 = vmatmul.f32.gmra.mxu0 %v525
    %v565 = vpop.f32.mrf.mxu0
    %v566 = vadd.f32 0.0, %v565
    %567 = vmatmul.f32.gmra.mxu0 %v528
    %v568 = vpop.f32.mrf.mxu0
    %v569 = vadd.f32 0.0, %v568
    %570 = vmatmul.f32.gmra.mxu0 %v531
    %v571 = vpop.f32.mrf.mxu0
    %v572 = vadd.f32 0.0, %v571
    %573 = vdwg.mxu0
    %v575 = vsel %vm388, %v97, 0
    %v578 = vsel %vm388, %v98, 0
    %580 = vmatpush.msra.mxu0 0.0
    %581 = vmatpush.msra.mxu0 0.0
    %582 = vmatpush.msra.mxu0 0.0
    %583 = vmatpush.msra.mxu0 0.0
    %584 = vmatpush.msra.mxu0 0.0
    %585 = vmatpush.msra.mxu0 0.0
    %586 = vmatpush.msra.mxu0 0.0
    %587 = vmatpush.msra.mxu0 0.0
    %588 = vmatpush.msra.mxu0 %v572
    %589 = vmatpush.msra.mxu0 %v569
    %590 = vmatpush.msra.mxu0 %v566
    %591 = vmatpush.msra.mxu0 %v563
    %592 = vmatpush.msra.mxu0 %v560
    %593 = vmatpush.msra.mxu0 %v557
    %594 = vmatpush.msra.mxu0 %v554
    %595 = vmatpush.msra.mxu0 %v551
    %596 = vmatmul.f32.gmra.mxu0 %v575
    %v597 = vpop.f32.mrf.mxu0
    %v598 = vadd.f32 0.0, %v597
    %599 = vmatmul.f32.gmra.mxu0 %v578
    %v600 = vpop.f32.mrf.mxu0
    %v601 = vadd.f32 0.0, %v600
    %602 = vdwg.mxu0
    %v603 = vld [vmem:[%s8] sm:$0xff]
    %v604 = vld [vmem:[%s8 + $0x8] sm:$0xff]
    %v605 = vld [vmem:[%s8 + $0x10] sm:$0xff]
    %v606 = vld [vmem:[%s8 + $0x18] sm:$0xff]
    %v607 = vld [vmem:[%s9] sm:$0x1]
    %v609 = vperm.slane %v607, 0
    %v612 = vsel %vm115, %v598, 0
    %v615 = vsel %vm115, %v601, 0
    %617 = vmatpush.msra.mxu0 0.0
    %618 = vmatpush.msra.mxu0 0.0
    %619 = vmatpush.msra.mxu0 0.0
    %620 = vmatpush.msra.mxu0 0.0
    %621 = vmatpush.msra.mxu0 0.0
    %622 = vmatpush.msra.mxu0 0.0
    %623 = vmatpush.msra.mxu0 0.0
    %624 = vmatpush.msra.mxu0 0.0
    %625 = vmatpush.msra.mxu0 0.0
    %626 = vmatpush.msra.mxu0 0.0
    %627 = vmatpush.msra.mxu0 0.0
    %628 = vmatpush.msra.mxu0 0.0
    %629 = vmatpush.msra.mxu0 %v606
    %630 = vmatpush.msra.mxu0 %v605
    %631 = vmatpush.msra.mxu0 %v604
    %632 = vmatpush.msra.mxu0 %v603
    %633 = vmatmul.f32.gmra.mxu0 %v612
    %v634 = vpop.f32.mrf.mxu0
    %v635 = vadd.f32 %v609, %v634
    %636 = vmatmul.f32.gmra.mxu0 %v615
    %v637 = vpop.f32.mrf.mxu0
    %v638 = vadd.f32 %v609, %v637
    %639 = vdwg.mxu0
    %v640 = vadd.f32 %v79, %v635
    %v641 = vadd.f32 %v80, %v638
    %v642 = vld [vmem:[%s10] sm:$0x1]
    %v643 = vld [vmem:[%s11] sm:$0x1]
    %v644 = vsel %vm115, %v640, 0.0
    %645 = vadd.xlane.f32.xlu0 %v644
    %v646 = vpop.xlane.xlu0 %645
    %v647 = vsel %vm115, %v641, 0.0
    %648 = vadd.xlane.f32.xlu0 %v647
    %v649 = vpop.xlane.xlu0 %648
    %v650 = vrcp.pop 32.0
    %v651 = vmul.f32 32.0, %v650
    %v652 = vsub.f32 1.0, %v651
    %v653 = vmul.f32 %v650, %v652
    %v654 = vadd.f32 %v650, %v653
    %vm655 = vweird.f32 %v650
    %v656 = vsel %vm655, %v650, %v654
    %v657 = vmul.f32 %v646, %v656
    %v658 = vmul.f32 %v649, %v656
    %v659 = vsub.f32 %v640, %v657
    %v660 = vsub.f32 %v641, %v658
    %v661 = vmul.f32 %v659, %v659
    %v662 = vmul.f32 %v660, %v660
    %v663 = vsel %vm115, %v661, 0.0
    %664 = vadd.xlane.f32.xlu0 %v663
    %v665 = vpop.xlane.xlu0 %664
    %v666 = vsel %vm115, %v662, 0.0
    %667 = vadd.xlane.f32.xlu0 %v666
    %v668 = vpop.xlane.xlu0 %667
    %v669 = vmul.f32 %v665, %v656
    %v670 = vmul.f32 %v668, %v656
    %v671 = vadd.f32 %v669, 1e-05
    %v672 = vadd.f32 %v670, 1e-05
    %v673 = vrsqrt.pop %v671
    %v674 = vmul.f32 %v673, %v671
    %v675 = vmul.f32 %v674, %v673
    %v676 = vmul.f32 0.5, %v675
    %v677 = vsub.f32 1.5, %v676
    %v678 = vmul.f32 %v673, %v677
    %vm679 = vweird.f32 %v671
    %vm680 = vweird.f32 %v673
    %vm681 = vmor %vm679, %vm680
    %v682 = vsel %vm681, %v673, %v678
    %v683 = vrsqrt.pop %v672
    %v684 = vmul.f32 %v683, %v672
    %v685 = vmul.f32 %v684, %v683
    %v686 = vmul.f32 0.5, %v685
    %v687 = vsub.f32 1.5, %v686
    %v688 = vmul.f32 %v683, %v687
    %vm689 = vweird.f32 %v672
    %vm690 = vweird.f32 %v683
    %vm691 = vmor %vm689, %vm690
    %v692 = vsel %vm691, %v683, %v688
    %v693 = vmul.f32 %v659, %v682
    %v694 = vmul.f32 %v660, %v692
    %v696 = vperm.slane %v642, 0
    %v698 = vmul.f32 %v693, %v696
    %v699 = vmul.f32 %v694, %v696
    %v701 = vperm.slane %v643, 0
    %v703 = vadd.f32 %v698, %v701
    %v704 = vadd.f32 %v699, %v701
    %v705 = vpack.c.bf16 %v704, %v703
    %v706 = vld [vmem:[%s12] sm:$0xff]
    %v707 = vld [vmem:[%s12 + $0x8] sm:$0xff]
    %v708 = vld [vmem:[%s12 + $0x10] sm:$0xff]
    %v709 = vld [vmem:[%s12 + $0x18] sm:$0xff]
    %v710 = vld [vmem:[%s12 + $0x20] sm:$0xff]
    %v711 = vld [vmem:[%s12 + $0x28] sm:$0xff]
    %v712 = vld [vmem:[%s12 + $0x30] sm:$0xff]
    %v713 = vld [vmem:[%s12 + $0x38] sm:$0xff]
    %v714 = vld [vmem:[%s12 + $0x40] sm:$0xff]
    %v715 = vld [vmem:[%s12 + $0x48] sm:$0xff]
    %v716 = vld [vmem:[%s12 + $0x50] sm:$0xff]
    %v717 = vld [vmem:[%s12 + $0x58] sm:$0xff]
    %v718 = vld [vmem:[%s12 + $0x60] sm:$0xff]
    %v719 = vld [vmem:[%s12 + $0x68] sm:$0xff]
    %v720 = vld [vmem:[%s12 + $0x70] sm:$0xff]
    %v721 = vld [vmem:[%s12 + $0x78] sm:$0xff]
    %v722 = vld [vmem:[%s12 + $0x80] sm:$0xff]
    %v723 = vld [vmem:[%s12 + $0x88] sm:$0xff]
    %v724 = vld [vmem:[%s12 + $0x90] sm:$0xff]
    %v725 = vld [vmem:[%s12 + $0x98] sm:$0xff]
    %v726 = vld [vmem:[%s12 + $0xa0] sm:$0xff]
    %v727 = vld [vmem:[%s12 + $0xa8] sm:$0xff]
    %v728 = vld [vmem:[%s12 + $0xb0] sm:$0xff]
    %v729 = vld [vmem:[%s12 + $0xb8] sm:$0xff]
    %v730 = vld [vmem:[%s12 + $0xc0] sm:$0xff]
    %v731 = vld [vmem:[%s12 + $0xc8] sm:$0xff]
    %v732 = vld [vmem:[%s12 + $0xd0] sm:$0xff]
    %v733 = vld [vmem:[%s12 + $0xd8] sm:$0xff]
    %v734 = vld [vmem:[%s12 + $0xe0] sm:$0xff]
    %v735 = vld [vmem:[%s12 + $0xe8] sm:$0xff]
    %v736 = vld [vmem:[%s12 + $0xf0] sm:$0xff]
    %v737 = vld [vmem:[%s12 + $0xf8] sm:$0xff]
    %v738 = vld [vmem:[%s13] sm:$0xff]
    %v739 = vld [vmem:[%s13 + $0x8] sm:$0xff]
    %v742 = vperm.slane %v738, 0
    %v743 = vperm.slane %v738, 1
    %v744 = vperm.slane %v738, 2
    %v745 = vperm.slane %v738, 3
    %v746 = vperm.slane %v738, 4
    %v747 = vperm.slane %v738, 5
    %v748 = vperm.slane %v738, 6
    %v749 = vperm.slane %v738, 7
    %v750 = vperm.slane %v739, 0
    %v751 = vperm.slane %v739, 1
    %v752 = vperm.slane %v739, 2
    %v753 = vperm.slane %v739, 3
    %v754 = vperm.slane %v739, 4
    %v755 = vperm.slane %v739, 5
    %v756 = vperm.slane %v739, 6
    %v757 = vperm.slane %v739, 7
    %v806 = vunpack.c.l.b16 %v706
    %v807 = vunpack.c.h.b16 %v706
    %v808 = vunpack.c.l.b16 %v707
    %v809 = vunpack.c.h.b16 %v707
    %v810 = vunpack.c.l.b16 %v708
    %v811 = vunpack.c.h.b16 %v708
    %v812 = vunpack.c.l.b16 %v709
    %v813 = vunpack.c.h.b16 %v709
    %v814 = vunpack.c.l.b16 %v710
    %v815 = vunpack.c.h.b16 %v710
    %v816 = vunpack.c.l.b16 %v711
    %v817 = vunpack.c.h.b16 %v711
    %v818 = vunpack.c.l.b16 %v712
    %v819 = vunpack.c.h.b16 %v712
    %v820 = vunpack.c.l.b16 %v713
    %v821 = vunpack.c.h.b16 %v713
    %v822 = vunpack.c.l.b16 %v714
    %v823 = vunpack.c.h.b16 %v714
    %v824 = vunpack.c.l.b16 %v715
    %v825 = vunpack.c.h.b16 %v715
    %v826 = vunpack.c.l.b16 %v716
    %v827 = vunpack.c.h.b16 %v716
    %v828 = vunpack.c.l.b16 %v717
    %v829 = vunpack.c.h.b16 %v717
    %v830 = vunpack.c.l.b16 %v718
    %v831 = vunpack.c.h.b16 %v718
    %v832 = vunpack.c.l.b16 %v719
    %v833 = vunpack.c.h.b16 %v719
    %v834 = vunpack.c.l.b16 %v720
    %v835 = vunpack.c.h.b16 %v720
    %v836 = vunpack.c.l.b16 %v721
    %v837 = vunpack.c.h.b16 %v721
    %v838 = vunpack.c.l.b16 %v722
    %v839 = vunpack.c.h.b16 %v722
    %v840 = vunpack.c.l.b16 %v723
    %v841 = vunpack.c.h.b16 %v723
    %v842 = vunpack.c.l.b16 %v724
    %v843 = vunpack.c.h.b16 %v724
    %v844 = vunpack.c.l.b16 %v725
    %v845 = vunpack.c.h.b16 %v725
    %v846 = vunpack.c.l.b16 %v726
    %v847 = vunpack.c.h.b16 %v726
    %v848 = vunpack.c.l.b16 %v727
    %v849 = vunpack.c.h.b16 %v727
    %v850 = vunpack.c.l.b16 %v728
    %v851 = vunpack.c.h.b16 %v728
    %v852 = vunpack.c.l.b16 %v729
    %v853 = vunpack.c.h.b16 %v729
    %v854 = vunpack.c.l.b16 %v730
    %v855 = vunpack.c.h.b16 %v730
    %v856 = vunpack.c.l.b16 %v731
    %v857 = vunpack.c.h.b16 %v731
    %v858 = vunpack.c.l.b16 %v732
    %v859 = vunpack.c.h.b16 %v732
    %v860 = vunpack.c.l.b16 %v733
    %v861 = vunpack.c.h.b16 %v733
    %v862 = vunpack.c.l.b16 %v734
    %v863 = vunpack.c.h.b16 %v734
    %v864 = vunpack.c.l.b16 %v735
    %v865 = vunpack.c.h.b16 %v735
    %v866 = vunpack.c.l.b16 %v736
    %v867 = vunpack.c.h.b16 %v736
    %v868 = vunpack.c.l.b16 %v737
    %v869 = vunpack.c.h.b16 %v737
    %v870 = vpack.c.b16 %v822, %v806
    %v871 = vpack.c.b16 %v823, %v807
    %v872 = vpack.c.b16 %v824, %v808
    %v873 = vpack.c.b16 %v825, %v809
    %v874 = vpack.c.b16 %v826, %v810
    %v875 = vpack.c.b16 %v827, %v811
    %v876 = vpack.c.b16 %v828, %v812
    %v877 = vpack.c.b16 %v829, %v813
    %v878 = vpack.c.b16 %v830, %v814
    %v879 = vpack.c.b16 %v831, %v815
    %v880 = vpack.c.b16 %v832, %v816
    %v881 = vpack.c.b16 %v833, %v817
    %v882 = vpack.c.b16 %v834, %v818
    %v883 = vpack.c.b16 %v835, %v819
    %v884 = vpack.c.b16 %v836, %v820
    %v885 = vpack.c.b16 %v837, %v821
    %v886 = vpack.c.b16 %v854, %v838
    %v887 = vpack.c.b16 %v855, %v839
    %v888 = vpack.c.b16 %v856, %v840
    %v889 = vpack.c.b16 %v857, %v841
    %v890 = vpack.c.b16 %v858, %v842
    %v891 = vpack.c.b16 %v859, %v843
    %v892 = vpack.c.b16 %v860, %v844
    %v893 = vpack.c.b16 %v861, %v845
    %v894 = vpack.c.b16 %v862, %v846
    %v895 = vpack.c.b16 %v863, %v847
    %v896 = vpack.c.b16 %v864, %v848
    %v897 = vpack.c.b16 %v865, %v849
    %v898 = vpack.c.b16 %v866, %v850
    %v899 = vpack.c.b16 %v867, %v851
    %v900 = vpack.c.b16 %v868, %v852
    %v901 = vpack.c.b16 %v869, %v853
    %v935 = vsel %vm115, %v705, 0
    %937 = vmatpush.bf16.msra.mxu0 0
    %938 = vmatpush.bf16.msra.mxu0 0
    %939 = vmatpush.bf16.msra.mxu0 0
    %940 = vmatpush.bf16.msra.mxu0 0
    %941 = vmatpush.bf16.msra.mxu0 0
    %942 = vmatpush.bf16.msra.mxu0 0
    %943 = vmatpush.bf16.msra.mxu0 %v886
    %944 = vmatpush.bf16.msra.mxu0 %v870
    %945 = vmatmul.bf16.gmra.mxu0 %v935
    %v946 = vpop.f32.mrf.mxu0
    %v947 = vadd.f32 %v742, %v946
    %v948 = vpop.f32.mrf.mxu0
    %v949 = vadd.f32 %v742, %v948
    %950 = vdwg.mxu0
    %951 = vmatpush.bf16.msra.mxu0 0
    %952 = vmatpush.bf16.msra.mxu0 0
    %953 = vmatpush.bf16.msra.mxu0 0
    %954 = vmatpush.bf16.msra.mxu0 0
    %955 = vmatpush.bf16.msra.mxu0 0
    %956 = vmatpush.bf16.msra.mxu0 0
    %957 = vmatpush.bf16.msra.mxu0 %v887
    %958 = vmatpush.bf16.msra.mxu0 %v871
    %959 = vmatmul.bf16.gmra.mxu0 %v935
    %v960 = vpop.f32.mrf.mxu0
    %v961 = vadd.f32 %v743, %v960
    %v962 = vpop.f32.mrf.mxu0
    %v963 = vadd.f32 %v743, %v962
    %964 = vdwg.mxu0
    %965 = vmatpush.bf16.msra.mxu0 0
    %966 = vmatpush.bf16.msra.mxu0 0
    %967 = vmatpush.bf16.msra.mxu0 0
    %968 = vmatpush.bf16.msra.mxu0 0
    %969 = vmatpush.bf16.msra.mxu0 0
    %970 = vmatpush.bf16.msra.mxu0 0
    %971 = vmatpush.bf16.msra.mxu0 %v888
    %972 = vmatpush.bf16.msra.mxu0 %v872
    %973 = vmatmul.bf16.gmra.mxu0 %v935
    %v974 = vpop.f32.mrf.mxu0
    %v975 = vadd.f32 %v744, %v974
    %v976 = vpop.f32.mrf.mxu0
    %v977 = vadd.f32 %v744, %v976
    %978 = vdwg.mxu0
    %979 = vmatpush.bf16.msra.mxu0 0
    %980 = vmatpush.bf16.msra.mxu0 0
    %981 = vmatpush.bf16.msra.mxu0 0
    %982 = vmatpush.bf16.msra.mxu0 0
    %983 = vmatpush.bf16.msra.mxu0 0
    %984 = vmatpush.bf16.msra.mxu0 0
    %985 = vmatpush.bf16.msra.mxu0 %v889
    %986 = vmatpush.bf16.msra.mxu0 %v873
    %987 = vmatmul.bf16.gmra.mxu0 %v935
    %v988 = vpop.f32.mrf.mxu0
    %v989 = vadd.f32 %v745, %v988
    %v990 = vpop.f32.mrf.mxu0
    %v991 = vadd.f32 %v745, %v990
    %992 = vdwg.mxu0
    %993 = vmatpush.bf16.msra.mxu0 0
    %994 = vmatpush.bf16.msra.mxu0 0
    %995 = vmatpush.bf16.msra.mxu0 0
    %996 = vmatpush.bf16.msra.mxu0 0
    %997 = vmatpush.bf16.msra.mxu0 0
    %998 = vmatpush.bf16.msra.mxu0 0
    %999 = vmatpush.bf16.msra.mxu0 %v890
    %1000 = vmatpush.bf16.msra.mxu0 %v874
    %1001 = vmatmul.bf16.gmra.mxu0 %v935
    %v1002 = vpop.f32.mrf.mxu0
    %v1003 = vadd.f32 %v746, %v1002
    %v1004 = vpop.f32.mrf.mxu0
    %v1005 = vadd.f32 %v746, %v1004
    %1006 = vdwg.mxu0
    %1007 = vmatpush.bf16.msra.mxu0 0
    %1008 = vmatpush.bf16.msra.mxu0 0
    %1009 = vmatpush.bf16.msra.mxu0 0
    %1010 = vmatpush.bf16.msra.mxu0 0
    %1011 = vmatpush.bf16.msra.mxu0 0
    %1012 = vmatpush.bf16.msra.mxu0 0
    %1013 = vmatpush.bf16.msra.mxu0 %v891
    %1014 = vmatpush.bf16.msra.mxu0 %v875
    %1015 = vmatmul.bf16.gmra.mxu0 %v935
    %v1016 = vpop.f32.mrf.mxu0
    %v1017 = vadd.f32 %v747, %v1016
    %v1018 = vpop.f32.mrf.mxu0
    %v1019 = vadd.f32 %v747, %v1018
    %1020 = vdwg.mxu0
    %1021 = vmatpush.bf16.msra.mxu0 0
    %1022 = vmatpush.bf16.msra.mxu0 0
    %1023 = vmatpush.bf16.msra.mxu0 0
    %1024 = vmatpush.bf16.msra.mxu0 0
    %1025 = vmatpush.bf16.msra.mxu0 0
    %1026 = vmatpush.bf16.msra.mxu0 0
    %1027 = vmatpush.bf16.msra.mxu0 %v892
    %1028 = vmatpush.bf16.msra.mxu0 %v876
    %1029 = vmatmul.bf16.gmra.mxu0 %v935
    %v1030 = vpop.f32.mrf.mxu0
    %v1031 = vadd.f32 %v748, %v1030
    %v1032 = vpop.f32.mrf.mxu0
    %v1033 = vadd.f32 %v748, %v1032
    %1034 = vdwg.mxu0
    %1035 = vmatpush.bf16.msra.mxu0 0
    %1036 = vmatpush.bf16.msra.mxu0 0
    %1037 = vmatpush.bf16.msra.mxu0 0
    %1038 = vmatpush.bf16.msra.mxu0 0
    %1039 = vmatpush.bf16.msra.mxu0 0
    %1040 = vmatpush.bf16.msra.mxu0 0
    %1041 = vmatpush.bf16.msra.mxu0 %v893
    %1042 = vmatpush.bf16.msra.mxu0 %v877
    %1043 = vmatmul.bf16.gmra.mxu0 %v935
    %v1044 = vpop.f32.mrf.mxu0
    %v1045 = vadd.f32 %v749, %v1044
    %v1046 = vpop.f32.mrf.mxu0
    %v1047 = vadd.f32 %v749, %v1046
    %1048 = vdwg.mxu0
    %1049 = vmatpush.bf16.msra.mxu0 0
    %1050 = vmatpush.bf16.msra.mxu0 0
    %1051 = vmatpush.bf16.msra.mxu0 0
    %1052 = vmatpush.bf16.msra.mxu0 0
    %1053 = vmatpush.bf16.msra.mxu0 0
    %1054 = vmatpush.bf16.msra.mxu0 0
    %1055 = vmatpush.bf16.msra.mxu0 %v894
    %1056 = vmatpush.bf16.msra.mxu0 %v878
    %1057 = vmatmul.bf16.gmra.mxu0 %v935
    %v1058 = vpop.f32.mrf.mxu0
    %v1059 = vadd.f32 %v750, %v1058
    %v1060 = vpop.f32.mrf.mxu0
    %v1061 = vadd.f32 %v750, %v1060
    %1062 = vdwg.mxu0
    %1063 = vmatpush.bf16.msra.mxu0 0
    %1064 = vmatpush.bf16.msra.mxu0 0
    %1065 = vmatpush.bf16.msra.mxu0 0
    %1066 = vmatpush.bf16.msra.mxu0 0
    %1067 = vmatpush.bf16.msra.mxu0 0
    %1068 = vmatpush.bf16.msra.mxu0 0
    %1069 = vmatpush.bf16.msra.mxu0 %v895
    %1070 = vmatpush.bf16.msra.mxu0 %v879
    %1071 = vmatmul.bf16.gmra.mxu0 %v935
    %v1072 = vpop.f32.mrf.mxu0
    %v1073 = vadd.f32 %v751, %v1072
    %v1074 = vpop.f32.mrf.mxu0
    %v1075 = vadd.f32 %v751, %v1074
    %1076 = vdwg.mxu0
    %1077 = vmatpush.bf16.msra.mxu0 0
    %1078 = vmatpush.bf16.msra.mxu0 0
    %1079 = vmatpush.bf16.msra.mxu0 0
    %1080 = vmatpush.bf16.msra.mxu0 0
    %1081 = vmatpush.bf16.msra.mxu0 0
    %1082 = vmatpush.bf16.msra.mxu0 0
    %1083 = vmatpush.bf16.msra.mxu0 %v896
    %1084 = vmatpush.bf16.msra.mxu0 %v880
    %1085 = vmatmul.bf16.gmra.mxu0 %v935
    %v1086 = vpop.f32.mrf.mxu0
    %v1087 = vadd.f32 %v752, %v1086
    %v1088 = vpop.f32.mrf.mxu0
    %v1089 = vadd.f32 %v752, %v1088
    %1090 = vdwg.mxu0
    %1091 = vmatpush.bf16.msra.mxu0 0
    %1092 = vmatpush.bf16.msra.mxu0 0
    %1093 = vmatpush.bf16.msra.mxu0 0
    %1094 = vmatpush.bf16.msra.mxu0 0
    %1095 = vmatpush.bf16.msra.mxu0 0
    %1096 = vmatpush.bf16.msra.mxu0 0
    %1097 = vmatpush.bf16.msra.mxu0 %v897
    %1098 = vmatpush.bf16.msra.mxu0 %v881
    %1099 = vmatmul.bf16.gmra.mxu0 %v935
    %v1100 = vpop.f32.mrf.mxu0
    %v1101 = vadd.f32 %v753, %v1100
    %v1102 = vpop.f32.mrf.mxu0
    %v1103 = vadd.f32 %v753, %v1102
    %1104 = vdwg.mxu0
    %1105 = vmatpush.bf16.msra.mxu0 0
    %1106 = vmatpush.bf16.msra.mxu0 0
    %1107 = vmatpush.bf16.msra.mxu0 0
    %1108 = vmatpush.bf16.msra.mxu0 0
    %1109 = vmatpush.bf16.msra.mxu0 0
    %1110 = vmatpush.bf16.msra.mxu0 0
    %1111 = vmatpush.bf16.msra.mxu0 %v898
    %1112 = vmatpush.bf16.msra.mxu0 %v882
    %1113 = vmatmul.bf16.gmra.mxu0 %v935
    %v1114 = vpop.f32.mrf.mxu0
    %v1115 = vadd.f32 %v754, %v1114
    %v1116 = vpop.f32.mrf.mxu0
    %v1117 = vadd.f32 %v754, %v1116
    %1118 = vdwg.mxu0
    %1119 = vmatpush.bf16.msra.mxu0 0
    %1120 = vmatpush.bf16.msra.mxu0 0
    %1121 = vmatpush.bf16.msra.mxu0 0
    %1122 = vmatpush.bf16.msra.mxu0 0
    %1123 = vmatpush.bf16.msra.mxu0 0
    %1124 = vmatpush.bf16.msra.mxu0 0
    %1125 = vmatpush.bf16.msra.mxu0 %v899
    %1126 = vmatpush.bf16.msra.mxu0 %v883
    %1127 = vmatmul.bf16.gmra.mxu0 %v935
    %v1128 = vpop.f32.mrf.mxu0
    %v1129 = vadd.f32 %v755, %v1128
    %v1130 = vpop.f32.mrf.mxu0
    %v1131 = vadd.f32 %v755, %v1130
    %1132 = vdwg.mxu0
    %1133 = vmatpush.bf16.msra.mxu0 0
    %1134 = vmatpush.bf16.msra.mxu0 0
    %1135 = vmatpush.bf16.msra.mxu0 0
    %1136 = vmatpush.bf16.msra.mxu0 0
    %1137 = vmatpush.bf16.msra.mxu0 0
    %1138 = vmatpush.bf16.msra.mxu0 0
    %1139 = vmatpush.bf16.msra.mxu0 %v900
    %1140 = vmatpush.bf16.msra.mxu0 %v884
    %1141 = vmatmul.bf16.gmra.mxu0 %v935
    %v1142 = vpop.f32.mrf.mxu0
    %v1143 = vadd.f32 %v756, %v1142
    %v1144 = vpop.f32.mrf.mxu0
    %v1145 = vadd.f32 %v756, %v1144
    %1146 = vdwg.mxu0
    %1147 = vmatpush.bf16.msra.mxu0 0
    %1148 = vmatpush.bf16.msra.mxu0 0
    %1149 = vmatpush.bf16.msra.mxu0 0
    %1150 = vmatpush.bf16.msra.mxu0 0
    %1151 = vmatpush.bf16.msra.mxu0 0
    %1152 = vmatpush.bf16.msra.mxu0 0
    %1153 = vmatpush.bf16.msra.mxu0 %v901
    %1154 = vmatpush.bf16.msra.mxu0 %v885
    %1155 = vmatmul.bf16.gmra.mxu0 %v935
    %v1156 = vpop.f32.mrf.mxu0
    %v1157 = vadd.f32 %v757, %v1156
    %v1158 = vpop.f32.mrf.mxu0
    %v1159 = vadd.f32 %v757, %v1158
    %1160 = vdwg.mxu0
    %v1161 = vmax.f32 %v947, 0.0
    %v1162 = vmax.f32 %v961, 0.0
    %v1163 = vmax.f32 %v975, 0.0
    %v1164 = vmax.f32 %v989, 0.0
    %v1165 = vmax.f32 %v1003, 0.0
    %v1166 = vmax.f32 %v1017, 0.0
    %v1167 = vmax.f32 %v1031, 0.0
    %v1168 = vmax.f32 %v1045, 0.0
    %v1169 = vmax.f32 %v1059, 0.0
    %v1170 = vmax.f32 %v1073, 0.0
    %v1171 = vmax.f32 %v1087, 0.0
    %v1172 = vmax.f32 %v1101, 0.0
    %v1173 = vmax.f32 %v1115, 0.0
    %v1174 = vmax.f32 %v1129, 0.0
    %v1175 = vmax.f32 %v1143, 0.0
    %v1176 = vmax.f32 %v1157, 0.0
    %v1177 = vmax.f32 %v949, 0.0
    %v1178 = vmax.f32 %v963, 0.0
    %v1179 = vmax.f32 %v977, 0.0
    %v1180 = vmax.f32 %v991, 0.0
    %v1181 = vmax.f32 %v1005, 0.0
    %v1182 = vmax.f32 %v1019, 0.0
    %v1183 = vmax.f32 %v1033, 0.0
    %v1184 = vmax.f32 %v1047, 0.0
    %v1185 = vmax.f32 %v1061, 0.0
    %v1186 = vmax.f32 %v1075, 0.0
    %v1187 = vmax.f32 %v1089, 0.0
    %v1188 = vmax.f32 %v1103, 0.0
    %v1189 = vmax.f32 %v1117, 0.0
    %v1190 = vmax.f32 %v1131, 0.0
    %v1191 = vmax.f32 %v1145, 0.0
    %v1192 = vmax.f32 %v1159, 0.0
    %v1193 = vpack.c.bf16 %v1177, %v1161
    %v1194 = vpack.c.bf16 %v1178, %v1162
    %v1195 = vpack.c.bf16 %v1179, %v1163
    %v1196 = vpack.c.bf16 %v1180, %v1164
    %v1197 = vpack.c.bf16 %v1181, %v1165
    %v1198 = vpack.c.bf16 %v1182, %v1166
    %v1199 = vpack.c.bf16 %v1183, %v1167
    %v1200 = vpack.c.bf16 %v1184, %v1168
    %v1201 = vpack.c.bf16 %v1185, %v1169
    %v1202 = vpack.c.bf16 %v1186, %v1170
    %v1203 = vpack.c.bf16 %v1187, %v1171
    %v1204 = vpack.c.bf16 %v1188, %v1172
    %v1205 = vpack.c.bf16 %v1189, %v1173
    %v1206 = vpack.c.bf16 %v1190, %v1174
    %v1207 = vpack.c.bf16 %v1191, %v1175
    %v1208 = vpack.c.bf16 %v1192, %v1176
    %v1209 = vld [vmem:[%s14] sm:$0xf]
    %v1210 = vld [vmem:[%s14 + $0x4] sm:$0xf]
    %v1211 = vld [vmem:[%s14 + $0x8] sm:$0xf]
    %v1212 = vld [vmem:[%s14 + $0xc] sm:$0xf]
    %v1213 = vld [vmem:[%s14 + $0x10] sm:$0xf]
    %v1214 = vld [vmem:[%s14 + $0x14] sm:$0xf]
    %v1215 = vld [vmem:[%s14 + $0x18] sm:$0xf]
    %v1216 = vld [vmem:[%s14 + $0x1c] sm:$0xf]
    %v1217 = vld [vmem:[%s14 + $0x20] sm:$0xf]
    %v1218 = vld [vmem:[%s14 + $0x24] sm:$0xf]
    %v1219 = vld [vmem:[%s14 + $0x28] sm:$0xf]
    %v1220 = vld [vmem:[%s14 + $0x2c] sm:$0xf]
    %v1221 = vld [vmem:[%s14 + $0x30] sm:$0xf]
    %v1222 = vld [vmem:[%s14 + $0x34] sm:$0xf]
    %v1223 = vld [vmem:[%s14 + $0x38] sm:$0xf]
    %v1224 = vld [vmem:[%s14 + $0x3c] sm:$0xf]
    %v1225 = vld [vmem:[%s14 + $0x40] sm:$0xf]
    %v1226 = vld [vmem:[%s14 + $0x44] sm:$0xf]
    %v1227 = vld [vmem:[%s14 + $0x48] sm:$0xf]
    %v1228 = vld [vmem:[%s14 + $0x4c] sm:$0xf]
    %v1229 = vld [vmem:[%s14 + $0x50] sm:$0xf]
    %v1230 = vld [vmem:[%s14 + $0x54] sm:$0xf]
    %v1231 = vld [vmem:[%s14 + $0x58] sm:$0xf]
    %v1232 = vld [vmem:[%s14 + $0x5c] sm:$0xf]
    %v1233 = vld [vmem:[%s14 + $0x60] sm:$0xf]
    %v1234 = vld [vmem:[%s14 + $0x64] sm:$0xf]
    %v1235 = vld [vmem:[%s14 + $0x68] sm:$0xf]
    %v1236 = vld [vmem:[%s14 + $0x6c] sm:$0xf]
    %v1237 = vld [vmem:[%s14 + $0x70] sm:$0xf]
    %v1238 = vld [vmem:[%s14 + $0x74] sm:$0xf]
    %v1239 = vld [vmem:[%s14 + $0x78] sm:$0xf]
    %v1240 = vld [vmem:[%s14 + $0x7c] sm:$0xf]
    %v1241 = vld [vmem:[%s14 + $0x80] sm:$0xf]
    %v1242 = vld [vmem:[%s14 + $0x84] sm:$0xf]
    %v1243 = vld [vmem:[%s14 + $0x88] sm:$0xf]
    %v1244 = vld [vmem:[%s14 + $0x8c] sm:$0xf]
    %v1245 = vld [vmem:[%s14 + $0x90] sm:$0xf]
    %v1246 = vld [vmem:[%s14 + $0x94] sm:$0xf]
    %v1247 = vld [vmem:[%s14 + $0x98] sm:$0xf]
    %v1248 = vld [vmem:[%s14 + $0x9c] sm:$0xf]
    %v1249 = vld [vmem:[%s14 + $0xa0] sm:$0xf]
    %v1250 = vld [vmem:[%s14 + $0xa4] sm:$0xf]
    %v1251 = vld [vmem:[%s14 + $0xa8] sm:$0xf]
    %v1252 = vld [vmem:[%s14 + $0xac] sm:$0xf]
    %v1253 = vld [vmem:[%s14 + $0xb0] sm:$0xf]
    %v1254 = vld [vmem:[%s14 + $0xb4] sm:$0xf]
    %v1255 = vld [vmem:[%s14 + $0xb8] sm:$0xf]
    %v1256 = vld [vmem:[%s14 + $0xbc] sm:$0xf]
    %v1257 = vld [vmem:[%s14 + $0xc0] sm:$0xf]
    %v1258 = vld [vmem:[%s14 + $0xc4] sm:$0xf]
    %v1259 = vld [vmem:[%s14 + $0xc8] sm:$0xf]
    %v1260 = vld [vmem:[%s14 + $0xcc] sm:$0xf]
    %v1261 = vld [vmem:[%s14 + $0xd0] sm:$0xf]
    %v1262 = vld [vmem:[%s14 + $0xd4] sm:$0xf]
    %v1263 = vld [vmem:[%s14 + $0xd8] sm:$0xf]
    %v1264 = vld [vmem:[%s14 + $0xdc] sm:$0xf]
    %v1265 = vld [vmem:[%s14 + $0xe0] sm:$0xf]
    %v1266 = vld [vmem:[%s14 + $0xe4] sm:$0xf]
    %v1267 = vld [vmem:[%s14 + $0xe8] sm:$0xf]
    %v1268 = vld [vmem:[%s14 + $0xec] sm:$0xf]
    %v1269 = vld [vmem:[%s14 + $0xf0] sm:$0xf]
    %v1270 = vld [vmem:[%s14 + $0xf4] sm:$0xf]
    %v1271 = vld [vmem:[%s14 + $0xf8] sm:$0xf]
    %v1272 = vld [vmem:[%s14 + $0xfc] sm:$0xf]
    %v1273 = vld [vmem:[%s14 + $0x100] sm:$0xf]
    %v1274 = vld [vmem:[%s14 + $0x104] sm:$0xf]
    %v1275 = vld [vmem:[%s14 + $0x108] sm:$0xf]
    %v1276 = vld [vmem:[%s14 + $0x10c] sm:$0xf]
    %v1277 = vld [vmem:[%s14 + $0x110] sm:$0xf]
    %v1278 = vld [vmem:[%s14 + $0x114] sm:$0xf]
    %v1279 = vld [vmem:[%s14 + $0x118] sm:$0xf]
    %v1280 = vld [vmem:[%s14 + $0x11c] sm:$0xf]
    %v1281 = vld [vmem:[%s14 + $0x120] sm:$0xf]
    %v1282 = vld [vmem:[%s14 + $0x124] sm:$0xf]
    %v1283 = vld [vmem:[%s14 + $0x128] sm:$0xf]
    %v1284 = vld [vmem:[%s14 + $0x12c] sm:$0xf]
    %v1285 = vld [vmem:[%s14 + $0x130] sm:$0xf]
    %v1286 = vld [vmem:[%s14 + $0x134] sm:$0xf]
    %v1287 = vld [vmem:[%s14 + $0x138] sm:$0xf]
    %v1288 = vld [vmem:[%s14 + $0x13c] sm:$0xf]
    %v1289 = vld [vmem:[%s14 + $0x140] sm:$0xf]
    %v1290 = vld [vmem:[%s14 + $0x144] sm:$0xf]
    %v1291 = vld [vmem:[%s14 + $0x148] sm:$0xf]
    %v1292 = vld [vmem:[%s14 + $0x14c] sm:$0xf]
    %v1293 = vld [vmem:[%s14 + $0x150] sm:$0xf]
    %v1294 = vld [vmem:[%s14 + $0x154] sm:$0xf]
    %v1295 = vld [vmem:[%s14 + $0x158] sm:$0xf]
    %v1296 = vld [vmem:[%s14 + $0x15c] sm:$0xf]
    %v1297 = vld [vmem:[%s14 + $0x160] sm:$0xf]
    %v1298 = vld [vmem:[%s14 + $0x164] sm:$0xf]
    %v1299 = vld [vmem:[%s14 + $0x168] sm:$0xf]
    %v1300 = vld [vmem:[%s14 + $0x16c] sm:$0xf]
    %v1301 = vld [vmem:[%s14 + $0x170] sm:$0xf]
    %v1302 = vld [vmem:[%s14 + $0x174] sm:$0xf]
    %v1303 = vld [vmem:[%s14 + $0x178] sm:$0xf]
    %v1304 = vld [vmem:[%s14 + $0x17c] sm:$0xf]
    %v1305 = vld [vmem:[%s14 + $0x180] sm:$0xf]
    %v1306 = vld [vmem:[%s14 + $0x184] sm:$0xf]
    %v1307 = vld [vmem:[%s14 + $0x188] sm:$0xf]
    %v1308 = vld [vmem:[%s14 + $0x18c] sm:$0xf]
    %v1309 = vld [vmem:[%s14 + $0x190] sm:$0xf]
    %v1310 = vld [vmem:[%s14 + $0x194] sm:$0xf]
    %v1311 = vld [vmem:[%s14 + $0x198] sm:$0xf]
    %v1312 = vld [vmem:[%s14 + $0x19c] sm:$0xf]
    %v1313 = vld [vmem:[%s14 + $0x1a0] sm:$0xf]
    %v1314 = vld [vmem:[%s14 + $0x1a4] sm:$0xf]
    %v1315 = vld [vmem:[%s14 + $0x1a8] sm:$0xf]
    %v1316 = vld [vmem:[%s14 + $0x1ac] sm:$0xf]
    %v1317 = vld [vmem:[%s14 + $0x1b0] sm:$0xf]
    %v1318 = vld [vmem:[%s14 + $0x1b4] sm:$0xf]
    %v1319 = vld [vmem:[%s14 + $0x1b8] sm:$0xf]
    %v1320 = vld [vmem:[%s14 + $0x1bc] sm:$0xf]
    %v1321 = vld [vmem:[%s14 + $0x1c0] sm:$0xf]
    %v1322 = vld [vmem:[%s14 + $0x1c4] sm:$0xf]
    %v1323 = vld [vmem:[%s14 + $0x1c8] sm:$0xf]
    %v1324 = vld [vmem:[%s14 + $0x1cc] sm:$0xf]
    %v1325 = vld [vmem:[%s14 + $0x1d0] sm:$0xf]
    %v1326 = vld [vmem:[%s14 + $0x1d4] sm:$0xf]
    %v1327 = vld [vmem:[%s14 + $0x1d8] sm:$0xf]
    %v1328 = vld [vmem:[%s14 + $0x1dc] sm:$0xf]
    %v1329 = vld [vmem:[%s14 + $0x1e0] sm:$0xf]
    %v1330 = vld [vmem:[%s14 + $0x1e4] sm:$0xf]
    %v1331 = vld [vmem:[%s14 + $0x1e8] sm:$0xf]
    %v1332 = vld [vmem:[%s14 + $0x1ec] sm:$0xf]
    %v1333 = vld [vmem:[%s14 + $0x1f0] sm:$0xf]
    %v1334 = vld [vmem:[%s14 + $0x1f4] sm:$0xf]
    %v1335 = vld [vmem:[%s14 + $0x1f8] sm:$0xf]
    %v1336 = vld [vmem:[%s14 + $0x1fc] sm:$0xf]
    %v1337 = vld [vmem:[%s14 + $0x200] sm:$0xf]
    %v1338 = vld [vmem:[%s14 + $0x204] sm:$0xf]
    %v1339 = vld [vmem:[%s14 + $0x208] sm:$0xf]
    %v1340 = vld [vmem:[%s14 + $0x20c] sm:$0xf]
    %v1341 = vld [vmem:[%s14 + $0x210] sm:$0xf]
    %v1342 = vld [vmem:[%s14 + $0x214] sm:$0xf]
    %v1343 = vld [vmem:[%s14 + $0x218] sm:$0xf]
    %v1344 = vld [vmem:[%s14 + $0x21c] sm:$0xf]
    %v1345 = vld [vmem:[%s14 + $0x220] sm:$0xf]
    %v1346 = vld [vmem:[%s14 + $0x224] sm:$0xf]
    %v1347 = vld [vmem:[%s14 + $0x228] sm:$0xf]
    %v1348 = vld [vmem:[%s14 + $0x22c] sm:$0xf]
    %v1349 = vld [vmem:[%s14 + $0x230] sm:$0xf]
    %v1350 = vld [vmem:[%s14 + $0x234] sm:$0xf]
    %v1351 = vld [vmem:[%s14 + $0x238] sm:$0xf]
    %v1352 = vld [vmem:[%s14 + $0x23c] sm:$0xf]
    %v1353 = vld [vmem:[%s14 + $0x240] sm:$0xf]
    %v1354 = vld [vmem:[%s14 + $0x244] sm:$0xf]
    %v1355 = vld [vmem:[%s14 + $0x248] sm:$0xf]
    %v1356 = vld [vmem:[%s14 + $0x24c] sm:$0xf]
    %v1357 = vld [vmem:[%s14 + $0x250] sm:$0xf]
    %v1358 = vld [vmem:[%s14 + $0x254] sm:$0xf]
    %v1359 = vld [vmem:[%s14 + $0x258] sm:$0xf]
    %v1360 = vld [vmem:[%s14 + $0x25c] sm:$0xf]
    %v1361 = vld [vmem:[%s14 + $0x260] sm:$0xf]
    %v1362 = vld [vmem:[%s14 + $0x264] sm:$0xf]
    %v1363 = vld [vmem:[%s14 + $0x268] sm:$0xf]
    %v1364 = vld [vmem:[%s14 + $0x26c] sm:$0xf]
    %v1365 = vld [vmem:[%s14 + $0x270] sm:$0xf]
    %v1366 = vld [vmem:[%s14 + $0x274] sm:$0xf]
    %v1367 = vld [vmem:[%s14 + $0x278] sm:$0xf]
    %v1368 = vld [vmem:[%s14 + $0x27c] sm:$0xf]
    %v1369 = vld [vmem:[%s14 + $0x280] sm:$0xf]
    %v1370 = vld [vmem:[%s14 + $0x284] sm:$0xf]
    %v1371 = vld [vmem:[%s14 + $0x288] sm:$0xf]
    %v1372 = vld [vmem:[%s14 + $0x28c] sm:$0xf]
    %v1373 = vld [vmem:[%s14 + $0x290] sm:$0xf]
    %v1374 = vld [vmem:[%s14 + $0x294] sm:$0xf]
    %v1375 = vld [vmem:[%s14 + $0x298] sm:$0xf]
    %v1376 = vld [vmem:[%s14 + $0x29c] sm:$0xf]
    %v1377 = vld [vmem:[%s14 + $0x2a0] sm:$0xf]
    %v1378 = vld [vmem:[%s14 + $0x2a4] sm:$0xf]
    %v1379 = vld [vmem:[%s14 + $0x2a8] sm:$0xf]
    %v1380 = vld [vmem:[%s14 + $0x2ac] sm:$0xf]
    %v1381 = vld [vmem:[%s14 + $0x2b0] sm:$0xf]
    %v1382 = vld [vmem:[%s14 + $0x2b4] sm:$0xf]
    %v1383 = vld [vmem:[%s14 + $0x2b8] sm:$0xf]
    %v1384 = vld [vmem:[%s14 + $0x2bc] sm:$0xf]
    %v1385 = vld [vmem:[%s14 + $0x2c0] sm:$0xf]
    %v1386 = vld [vmem:[%s14 + $0x2c4] sm:$0xf]
    %v1387 = vld [vmem:[%s14 + $0x2c8] sm:$0xf]
    %v1388 = vld [vmem:[%s14 + $0x2cc] sm:$0xf]
    %v1389 = vld [vmem:[%s14 + $0x2d0] sm:$0xf]
    %v1390 = vld [vmem:[%s14 + $0x2d4] sm:$0xf]
    %v1391 = vld [vmem:[%s14 + $0x2d8] sm:$0xf]
    %v1392 = vld [vmem:[%s14 + $0x2dc] sm:$0xf]
    %v1393 = vld [vmem:[%s14 + $0x2e0] sm:$0xf]
    %v1394 = vld [vmem:[%s14 + $0x2e4] sm:$0xf]
    %v1395 = vld [vmem:[%s14 + $0x2e8] sm:$0xf]
    %v1396 = vld [vmem:[%s14 + $0x2ec] sm:$0xf]
    %v1397 = vld [vmem:[%s14 + $0x2f0] sm:$0xf]
    %v1398 = vld [vmem:[%s14 + $0x2f4] sm:$0xf]
    %v1399 = vld [vmem:[%s14 + $0x2f8] sm:$0xf]
    %v1400 = vld [vmem:[%s14 + $0x2fc] sm:$0xf]
    %v1401 = vld [vmem:[%s14 + $0x300] sm:$0xf]
    %v1402 = vld [vmem:[%s14 + $0x304] sm:$0xf]
    %v1403 = vld [vmem:[%s14 + $0x308] sm:$0xf]
    %v1404 = vld [vmem:[%s14 + $0x30c] sm:$0xf]
    %v1405 = vld [vmem:[%s14 + $0x310] sm:$0xf]
    %v1406 = vld [vmem:[%s14 + $0x314] sm:$0xf]
    %v1407 = vld [vmem:[%s14 + $0x318] sm:$0xf]
    %v1408 = vld [vmem:[%s14 + $0x31c] sm:$0xf]
    %v1409 = vld [vmem:[%s14 + $0x320] sm:$0xf]
    %v1410 = vld [vmem:[%s14 + $0x324] sm:$0xf]
    %v1411 = vld [vmem:[%s14 + $0x328] sm:$0xf]
    %v1412 = vld [vmem:[%s14 + $0x32c] sm:$0xf]
    %v1413 = vld [vmem:[%s14 + $0x330] sm:$0xf]
    %v1414 = vld [vmem:[%s14 + $0x334] sm:$0xf]
    %v1415 = vld [vmem:[%s14 + $0x338] sm:$0xf]
    %v1416 = vld [vmem:[%s14 + $0x33c] sm:$0xf]
    %v1417 = vld [vmem:[%s14 + $0x340] sm:$0xf]
    %v1418 = vld [vmem:[%s14 + $0x344] sm:$0xf]
    %v1419 = vld [vmem:[%s14 + $0x348] sm:$0xf]
    %v1420 = vld [vmem:[%s14 + $0x34c] sm:$0xf]
    %v1421 = vld [vmem:[%s14 + $0x350] sm:$0xf]
    %v1422 = vld [vmem:[%s14 + $0x354] sm:$0xf]
    %v1423 = vld [vmem:[%s14 + $0x358] sm:$0xf]
    %v1424 = vld [vmem:[%s14 + $0x35c] sm:$0xf]
    %v1425 = vld [vmem:[%s14 + $0x360] sm:$0xf]
    %v1426 = vld [vmem:[%s14 + $0x364] sm:$0xf]
    %v1427 = vld [vmem:[%s14 + $0x368] sm:$0xf]
    %v1428 = vld [vmem:[%s14 + $0x36c] sm:$0xf]
    %v1429 = vld [vmem:[%s14 + $0x370] sm:$0xf]
    %v1430 = vld [vmem:[%s14 + $0x374] sm:$0xf]
    %v1431 = vld [vmem:[%s14 + $0x378] sm:$0xf]
    %v1432 = vld [vmem:[%s14 + $0x37c] sm:$0xf]
    %v1433 = vld [vmem:[%s14 + $0x380] sm:$0xf]
    %v1434 = vld [vmem:[%s14 + $0x384] sm:$0xf]
    %v1435 = vld [vmem:[%s14 + $0x388] sm:$0xf]
    %v1436 = vld [vmem:[%s14 + $0x38c] sm:$0xf]
    %v1437 = vld [vmem:[%s14 + $0x390] sm:$0xf]
    %v1438 = vld [vmem:[%s14 + $0x394] sm:$0xf]
    %v1439 = vld [vmem:[%s14 + $0x398] sm:$0xf]
    %v1440 = vld [vmem:[%s14 + $0x39c] sm:$0xf]
    %v1441 = vld [vmem:[%s14 + $0x3a0] sm:$0xf]
    %v1442 = vld [vmem:[%s14 + $0x3a4] sm:$0xf]
    %v1443 = vld [vmem:[%s14 + $0x3a8] sm:$0xf]
    %v1444 = vld [vmem:[%s14 + $0x3ac] sm:$0xf]
    %v1445 = vld [vmem:[%s14 + $0x3b0] sm:$0xf]
    %v1446 = vld [vmem:[%s14 + $0x3b4] sm:$0xf]
    %v1447 = vld [vmem:[%s14 + $0x3b8] sm:$0xf]
    %v1448 = vld [vmem:[%s14 + $0x3bc] sm:$0xf]
    %v1449 = vld [vmem:[%s14 + $0x3c0] sm:$0xf]
    %v1450 = vld [vmem:[%s14 + $0x3c4] sm:$0xf]
    %v1451 = vld [vmem:[%s14 + $0x3c8] sm:$0xf]
    %v1452 = vld [vmem:[%s14 + $0x3cc] sm:$0xf]
    %v1453 = vld [vmem:[%s14 + $0x3d0] sm:$0xf]
    %v1454 = vld [vmem:[%s14 + $0x3d4] sm:$0xf]
    %v1455 = vld [vmem:[%s14 + $0x3d8] sm:$0xf]
    %v1456 = vld [vmem:[%s14 + $0x3dc] sm:$0xf]
    %v1457 = vld [vmem:[%s14 + $0x3e0] sm:$0xf]
    %v1458 = vld [vmem:[%s14 + $0x3e4] sm:$0xf]
    %v1459 = vld [vmem:[%s14 + $0x3e8] sm:$0xf]
    %v1460 = vld [vmem:[%s14 + $0x3ec] sm:$0xf]
    %v1461 = vld [vmem:[%s14 + $0x3f0] sm:$0xf]
    %v1462 = vld [vmem:[%s14 + $0x3f4] sm:$0xf]
    %v1463 = vld [vmem:[%s14 + $0x3f8] sm:$0xf]
    %v1464 = vld [vmem:[%s14 + $0x3fc] sm:$0xf]
    %v1465 = vld [vmem:[%s15] sm:$0x1]
    %v1467 = vperm.slane %v1465, 0
    %v1725 = vunpack.c.l.b16 %v1209
    %v1726 = vunpack.c.l.b16 %v1210
    %v1727 = vunpack.c.l.b16 %v1211
    %v1728 = vunpack.c.l.b16 %v1212
    %v1729 = vunpack.c.l.b16 %v1213
    %v1730 = vunpack.c.l.b16 %v1214
    %v1731 = vunpack.c.l.b16 %v1215
    %v1732 = vunpack.c.l.b16 %v1216
    %v1733 = vunpack.c.l.b16 %v1217
    %v1734 = vunpack.c.l.b16 %v1218
    %v1735 = vunpack.c.l.b16 %v1219
    %v1736 = vunpack.c.l.b16 %v1220
    %v1737 = vunpack.c.l.b16 %v1221
    %v1738 = vunpack.c.l.b16 %v1222
    %v1739 = vunpack.c.l.b16 %v1223
    %v1740 = vunpack.c.l.b16 %v1224
    %v1741 = vunpack.c.l.b16 %v1225
    %v1742 = vunpack.c.l.b16 %v1226
    %v1743 = vunpack.c.l.b16 %v1227
    %v1744 = vunpack.c.l.b16 %v1228
    %v1745 = vunpack.c.l.b16 %v1229
    %v1746 = vunpack.c.l.b16 %v1230
    %v1747 = vunpack.c.l.b16 %v1231
    %v1748 = vunpack.c.l.b16 %v1232
    %v1749 = vunpack.c.l.b16 %v1233
    %v1750 = vunpack.c.l.b16 %v1234
    %v1751 = vunpack.c.l.b16 %v1235
    %v1752 = vunpack.c.l.b16 %v1236
    %v1753 = vunpack.c.l.b16 %v1237
    %v1754 = vunpack.c.l.b16 %v1238
    %v1755 = vunpack.c.l.b16 %v1239
    %v1756 = vunpack.c.l.b16 %v1240
    %v1757 = vunpack.c.l.b16 %v1241
    %v1758 = vunpack.c.l.b16 %v1242
    %v1759 = vunpack.c.l.b16 %v1243
    %v1760 = vunpack.c.l.b16 %v1244
    %v1761 = vunpack.c.l.b16 %v1245
    %v1762 = vunpack.c.l.b16 %v1246
    %v1763 = vunpack.c.l.b16 %v1247
    %v1764 = vunpack.c.l.b16 %v1248
    %v1765 = vunpack.c.l.b16 %v1249
    %v1766 = vunpack.c.l.b16 %v1250
    %v1767 = vunpack.c.l.b16 %v1251
    %v1768 = vunpack.c.l.b16 %v1252
    %v1769 = vunpack.c.l.b16 %v1253
    %v1770 = vunpack.c.l.b16 %v1254
    %v1771 = vunpack.c.l.b16 %v1255
    %v1772 = vunpack.c.l.b16 %v1256
    %v1773 = vunpack.c.l.b16 %v1257
    %v1774 = vunpack.c.l.b16 %v1258
    %v1775 = vunpack.c.l.b16 %v1259
    %v1776 = vunpack.c.l.b16 %v1260
    %v1777 = vunpack.c.l.b16 %v1261
    %v1778 = vunpack.c.l.b16 %v1262
    %v1779 = vunpack.c.l.b16 %v1263
    %v1780 = vunpack.c.l.b16 %v1264
    %v1781 = vunpack.c.l.b16 %v1265
    %v1782 = vunpack.c.l.b16 %v1266
    %v1783 = vunpack.c.l.b16 %v1267
    %v1784 = vunpack.c.l.b16 %v1268
    %v1785 = vunpack.c.l.b16 %v1269
    %v1786 = vunpack.c.l.b16 %v1270
    %v1787 = vunpack.c.l.b16 %v1271
    %v1788 = vunpack.c.l.b16 %v1272
    %v1789 = vunpack.c.l.b16 %v1273
    %v1790 = vunpack.c.l.b16 %v1274
    %v1791 = vunpack.c.l.b16 %v1275
    %v1792 = vunpack.c.l.b16 %v1276
    %v1793 = vunpack.c.l.b16 %v1277
    %v1794 = vunpack.c.l.b16 %v1278
    %v1795 = vunpack.c.l.b16 %v1279
    %v1796 = vunpack.c.l.b16 %v1280
    %v1797 = vunpack.c.l.b16 %v1281
    %v1798 = vunpack.c.l.b16 %v1282
    %v1799 = vunpack.c.l.b16 %v1283
    %v1800 = vunpack.c.l.b16 %v1284
    %v1801 = vunpack.c.l.b16 %v1285
    %v1802 = vunpack.c.l.b16 %v1286
    %v1803 = vunpack.c.l.b16 %v1287
    %v1804 = vunpack.c.l.b16 %v1288
    %v1805 = vunpack.c.l.b16 %v1289
    %v1806 = vunpack.c.l.b16 %v1290
    %v1807 = vunpack.c.l.b16 %v1291
    %v1808 = vunpack.c.l.b16 %v1292
    %v1809 = vunpack.c.l.b16 %v1293
    %v1810 = vunpack.c.l.b16 %v1294
    %v1811 = vunpack.c.l.b16 %v1295
    %v1812 = vunpack.c.l.b16 %v1296
    %v1813 = vunpack.c.l.b16 %v1297
    %v1814 = vunpack.c.l.b16 %v1298
    %v1815 = vunpack.c.l.b16 %v1299
    %v1816 = vunpack.c.l.b16 %v1300
    %v1817 = vunpack.c.l.b16 %v1301
    %v1818 = vunpack.c.l.b16 %v1302
    %v1819 = vunpack.c.l.b16 %v1303
    %v1820 = vunpack.c.l.b16 %v1304
    %v1821 = vunpack.c.l.b16 %v1305
    %v1822 = vunpack.c.l.b16 %v1306
    %v1823 = vunpack.c.l.b16 %v1307
    %v1824 = vunpack.c.l.b16 %v1308
    %v1825 = vunpack.c.l.b16 %v1309
    %v1826 = vunpack.c.l.b16 %v1310
    %v1827 = vunpack.c.l.b16 %v1311
    %v1828 = vunpack.c.l.b16 %v1312
    %v1829 = vunpack.c.l.b16 %v1313
    %v1830 = vunpack.c.l.b16 %v1314
    %v1831 = vunpack.c.l.b16 %v1315
    %v1832 = vunpack.c.l.b16 %v1316
    %v1833 = vunpack.c.l.b16 %v1317
    %v1834 = vunpack.c.l.b16 %v1318
    %v1835 = vunpack.c.l.b16 %v1319
    %v1836 = vunpack.c.l.b16 %v1320
    %v1837 = vunpack.c.l.b16 %v1321
    %v1838 = vunpack.c.l.b16 %v1322
    %v1839 = vunpack.c.l.b16 %v1323
    %v1840 = vunpack.c.l.b16 %v1324
    %v1841 = vunpack.c.l.b16 %v1325
    %v1842 = vunpack.c.l.b16 %v1326
    %v1843 = vunpack.c.l.b16 %v1327
    %v1844 = vunpack.c.l.b16 %v1328
    %v1845 = vunpack.c.l.b16 %v1329
    %v1846 = vunpack.c.l.b16 %v1330
    %v1847 = vunpack.c.l.b16 %v1331
    %v1848 = vunpack.c.l.b16 %v1332
    %v1849 = vunpack.c.l.b16 %v1333
    %v1850 = vunpack.c.l.b16 %v1334
    %v1851 = vunpack.c.l.b16 %v1335
    %v1852 = vunpack.c.l.b16 %v1336
    %v1853 = vunpack.c.l.b16 %v1337
    %v1854 = vunpack.c.l.b16 %v1338
    %v1855 = vunpack.c.l.b16 %v1339
    %v1856 = vunpack.c.l.b16 %v1340
    %v1857 = vunpack.c.l.b16 %v1341
    %v1858 = vunpack.c.l.b16 %v1342
    %v1859 = vunpack.c.l.b16 %v1343
    %v1860 = vunpack.c.l.b16 %v1344
    %v1861 = vunpack.c.l.b16 %v1345
    %v1862 = vunpack.c.l.b16 %v1346
    %v1863 = vunpack.c.l.b16 %v1347
    %v1864 = vunpack.c.l.b16 %v1348
    %v1865 = vunpack.c.l.b16 %v1349
    %v1866 = vunpack.c.l.b16 %v1350
    %v1867 = vunpack.c.l.b16 %v1351
    %v1868 = vunpack.c.l.b16 %v1352
    %v1869 = vunpack.c.l.b16 %v1353
    %v1870 = vunpack.c.l.b16 %v1354
    %v1871 = vunpack.c.l.b16 %v1355
    %v1872 = vunpack.c.l.b16 %v1356
    %v1873 = vunpack.c.l.b16 %v1357
    %v1874 = vunpack.c.l.b16 %v1358
    %v1875 = vunpack.c.l.b16 %v1359
    %v1876 = vunpack.c.l.b16 %v1360
    %v1877 = vunpack.c.l.b16 %v1361
    %v1878 = vunpack.c.l.b16 %v1362
    %v1879 = vunpack.c.l.b16 %v1363
    %v1880 = vunpack.c.l.b16 %v1364
    %v1881 = vunpack.c.l.b16 %v1365
    %v1882 = vunpack.c.l.b16 %v1366
    %v1883 = vunpack.c.l.b16 %v1367
    %v1884 = vunpack.c.l.b16 %v1368
    %v1885 = vunpack.c.l.b16 %v1369
    %v1886 = vunpack.c.l.b16 %v1370
    %v1887 = vunpack.c.l.b16 %v1371
    %v1888 = vunpack.c.l.b16 %v1372
    %v1889 = vunpack.c.l.b16 %v1373
    %v1890 = vunpack.c.l.b16 %v1374
    %v1891 = vunpack.c.l.b16 %v1375
    %v1892 = vunpack.c.l.b16 %v1376
    %v1893 = vunpack.c.l.b16 %v1377
    %v1894 = vunpack.c.l.b16 %v1378
    %v1895 = vunpack.c.l.b16 %v1379
    %v1896 = vunpack.c.l.b16 %v1380
    %v1897 = vunpack.c.l.b16 %v1381
    %v1898 = vunpack.c.l.b16 %v1382
    %v1899 = vunpack.c.l.b16 %v1383
    %v1900 = vunpack.c.l.b16 %v1384
    %v1901 = vunpack.c.l.b16 %v1385
    %v1902 = vunpack.c.l.b16 %v1386
    %v1903 = vunpack.c.l.b16 %v1387
    %v1904 = vunpack.c.l.b16 %v1388
    %v1905 = vunpack.c.l.b16 %v1389
    %v1906 = vunpack.c.l.b16 %v1390
    %v1907 = vunpack.c.l.b16 %v1391
    %v1908 = vunpack.c.l.b16 %v1392
    %v1909 = vunpack.c.l.b16 %v1393
    %v1910 = vunpack.c.l.b16 %v1394
    %v1911 = vunpack.c.l.b16 %v1395
    %v1912 = vunpack.c.l.b16 %v1396
    %v1913 = vunpack.c.l.b16 %v1397
    %v1914 = vunpack.c.l.b16 %v1398
    %v1915 = vunpack.c.l.b16 %v1399
    %v1916 = vunpack.c.l.b16 %v1400
    %v1917 = vunpack.c.l.b16 %v1401
    %v1918 = vunpack.c.l.b16 %v1402
    %v1919 = vunpack.c.l.b16 %v1403
    %v1920 = vunpack.c.l.b16 %v1404
    %v1921 = vunpack.c.l.b16 %v1405
    %v1922 = vunpack.c.l.b16 %v1406
    %v1923 = vunpack.c.l.b16 %v1407
    %v1924 = vunpack.c.l.b16 %v1408
    %v1925 = vunpack.c.l.b16 %v1409
    %v1926 = vunpack.c.l.b16 %v1410
    %v1927 = vunpack.c.l.b16 %v1411
    %v1928 = vunpack.c.l.b16 %v1412
    %v1929 = vunpack.c.l.b16 %v1413
    %v1930 = vunpack.c.l.b16 %v1414
    %v1931 = vunpack.c.l.b16 %v1415
    %v1932 = vunpack.c.l.b16 %v1416
    %v1933 = vunpack.c.l.b16 %v1417
    %v1934 = vunpack.c.l.b16 %v1418
    %v1935 = vunpack.c.l.b16 %v1419
    %v1936 = vunpack.c.l.b16 %v1420
    %v1937 = vunpack.c.l.b16 %v1421
    %v1938 = vunpack.c.l.b16 %v1422
    %v1939 = vunpack.c.l.b16 %v1423
    %v1940 = vunpack.c.l.b16 %v1424
    %v1941 = vunpack.c.l.b16 %v1425
    %v1942 = vunpack.c.l.b16 %v1426
    %v1943 = vunpack.c.l.b16 %v1427
    %v1944 = vunpack.c.l.b16 %v1428
    %v1945 = vunpack.c.l.b16 %v1429
    %v1946 = vunpack.c.l.b16 %v1430
    %v1947 = vunpack.c.l.b16 %v1431
    %v1948 = vunpack.c.l.b16 %v1432
    %v1949 = vunpack.c.l.b16 %v1433
    %v1950 = vunpack.c.l.b16 %v1434
    %v1951 = vunpack.c.l.b16 %v1435
    %v1952 = vunpack.c.l.b16 %v1436
    %v1953 = vunpack.c.l.b16 %v1437
    %v1954 = vunpack.c.l.b16 %v1438
    %v1955 = vunpack.c.l.b16 %v1439
    %v1956 = vunpack.c.l.b16 %v1440
    %v1957 = vunpack.c.l.b16 %v1441
    %v1958 = vunpack.c.l.b16 %v1442
    %v1959 = vunpack.c.l.b16 %v1443
    %v1960 = vunpack.c.l.b16 %v1444
    %v1961 = vunpack.c.l.b16 %v1445
    %v1962 = vunpack.c.l.b16 %v1446
    %v1963 = vunpack.c.l.b16 %v1447
    %v1964 = vunpack.c.l.b16 %v1448
    %v1965 = vunpack.c.l.b16 %v1449
    %v1966 = vunpack.c.l.b16 %v1450
    %v1967 = vunpack.c.l.b16 %v1451
    %v1968 = vunpack.c.l.b16 %v1452
    %v1969 = vunpack.c.l.b16 %v1453
    %v1970 = vunpack.c.l.b16 %v1454
    %v1971 = vunpack.c.l.b16 %v1455
    %v1972 = vunpack.c.l.b16 %v1456
    %v1973 = vunpack.c.l.b16 %v1457
    %v1974 = vunpack.c.l.b16 %v1458
    %v1975 = vunpack.c.l.b16 %v1459
    %v1976 = vunpack.c.l.b16 %v1460
    %v1977 = vunpack.c.l.b16 %v1461
    %v1978 = vunpack.c.l.b16 %v1462
    %v1979 = vunpack.c.l.b16 %v1463
    %v1980 = vunpack.c.l.b16 %v1464
    %v1981 = vpack.c.b16 %v1726, %v1725
    %v1982 = vpack.c.b16 %v1728, %v1727
    %v1983 = vpack.c.b16 %v1730, %v1729
    %v1984 = vpack.c.b16 %v1732, %v1731
    %v1985 = vpack.c.b16 %v1734, %v1733
    %v1986 = vpack.c.b16 %v1736, %v1735
    %v1987 = vpack.c.b16 %v1738, %v1737
    %v1988 = vpack.c.b16 %v1740, %v1739
    %v1989 = vpack.c.b16 %v1742, %v1741
    %v1990 = vpack.c.b16 %v1744, %v1743
    %v1991 = vpack.c.b16 %v1746, %v1745
    %v1992 = vpack.c.b16 %v1748, %v1747
    %v1993 = vpack.c.b16 %v1750, %v1749
    %v1994 = vpack.c.b16 %v1752, %v1751
    %v1995 = vpack.c.b16 %v1754, %v1753
    %v1996 = vpack.c.b16 %v1756, %v1755
    %v1997 = vpack.c.b16 %v1758, %v1757
    %v1998 = vpack.c.b16 %v1760, %v1759
    %v1999 = vpack.c.b16 %v1762, %v1761
    %v2000 = vpack.c.b16 %v1764, %v1763
    %v2001 = vpack.c.b16 %v1766, %v1765
    %v2002 = vpack.c.b16 %v1768, %v1767
    %v2003 = vpack.c.b16 %v1770, %v1769
    %v2004 = vpack.c.b16 %v1772, %v1771
    %v2005 = vpack.c.b16 %v1774, %v1773
    %v2006 = vpack.c.b16 %v1776, %v1775
    %v2007 = vpack.c.b16 %v1778, %v1777
    %v2008 = vpack.c.b16 %v1780, %v1779
    %v2009 = vpack.c.b16 %v1782, %v1781
    %v2010 = vpack.c.b16 %v1784, %v1783
    %v2011 = vpack.c.b16 %v1786, %v1785
    %v2012 = vpack.c.b16 %v1788, %v1787
    %v2013 = vpack.c.b16 %v1790, %v1789
    %v2014 = vpack.c.b16 %v1792, %v1791
    %v2015 = vpack.c.b16 %v1794, %v1793
    %v2016 = vpack.c.b16 %v1796, %v1795
    %v2017 = vpack.c.b16 %v1798, %v1797
    %v2018 = vpack.c.b16 %v1800, %v1799
    %v2019 = vpack.c.b16 %v1802, %v1801
    %v2020 = vpack.c.b16 %v1804, %v1803
    %v2021 = vpack.c.b16 %v1806, %v1805
    %v2022 = vpack.c.b16 %v1808, %v1807
    %v2023 = vpack.c.b16 %v1810, %v1809
    %v2024 = vpack.c.b16 %v1812, %v1811
    %v2025 = vpack.c.b16 %v1814, %v1813
    %v2026 = vpack.c.b16 %v1816, %v1815
    %v2027 = vpack.c.b16 %v1818, %v1817
    %v2028 = vpack.c.b16 %v1820, %v1819
    %v2029 = vpack.c.b16 %v1822, %v1821
    %v2030 = vpack.c.b16 %v1824, %v1823
    %v2031 = vpack.c.b16 %v1826, %v1825
    %v2032 = vpack.c.b16 %v1828, %v1827
    %v2033 = vpack.c.b16 %v1830, %v1829
    %v2034 = vpack.c.b16 %v1832, %v1831
    %v2035 = vpack.c.b16 %v1834, %v1833
    %v2036 = vpack.c.b16 %v1836, %v1835
    %v2037 = vpack.c.b16 %v1838, %v1837
    %v2038 = vpack.c.b16 %v1840, %v1839
    %v2039 = vpack.c.b16 %v1842, %v1841
    %v2040 = vpack.c.b16 %v1844, %v1843
    %v2041 = vpack.c.b16 %v1846, %v1845
    %v2042 = vpack.c.b16 %v1848, %v1847
    %v2043 = vpack.c.b16 %v1850, %v1849
    %v2044 = vpack.c.b16 %v1852, %v1851
    %v2045 = vpack.c.b16 %v1854, %v1853
    %v2046 = vpack.c.b16 %v1856, %v1855
    %v2047 = vpack.c.b16 %v1858, %v1857
    %v2048 = vpack.c.b16 %v1860, %v1859
    %v2049 = vpack.c.b16 %v1862, %v1861
    %v2050 = vpack.c.b16 %v1864, %v1863
    %v2051 = vpack.c.b16 %v1866, %v1865
    %v2052 = vpack.c.b16 %v1868, %v1867
    %v2053 = vpack.c.b16 %v1870, %v1869
    %v2054 = vpack.c.b16 %v1872, %v1871
    %v2055 = vpack.c.b16 %v1874, %v1873
    %v2056 = vpack.c.b16 %v1876, %v1875
    %v2057 = vpack.c.b16 %v1878, %v1877
    %v2058 = vpack.c.b16 %v1880, %v1879
    %v2059 = vpack.c.b16 %v1882, %v1881
    %v2060 = vpack.c.b16 %v1884, %v1883
    %v2061 = vpack.c.b16 %v1886, %v1885
    %v2062 = vpack.c.b16 %v1888, %v1887
    %v2063 = vpack.c.b16 %v1890, %v1889
    %v2064 = vpack.c.b16 %v1892, %v1891
    %v2065 = vpack.c.b16 %v1894, %v1893
    %v2066 = vpack.c.b16 %v1896, %v1895
    %v2067 = vpack.c.b16 %v1898, %v1897
    %v2068 = vpack.c.b16 %v1900, %v1899
    %v2069 = vpack.c.b16 %v1902, %v1901
    %v2070 = vpack.c.b16 %v1904, %v1903
    %v2071 = vpack.c.b16 %v1906, %v1905
    %v2072 = vpack.c.b16 %v1908, %v1907
    %v2073 = vpack.c.b16 %v1910, %v1909
    %v2074 = vpack.c.b16 %v1912, %v1911
    %v2075 = vpack.c.b16 %v1914, %v1913
    %v2076 = vpack.c.b16 %v1916, %v1915
    %v2077 = vpack.c.b16 %v1918, %v1917
    %v2078 = vpack.c.b16 %v1920, %v1919
    %v2079 = vpack.c.b16 %v1922, %v1921
    %v2080 = vpack.c.b16 %v1924, %v1923
    %v2081 = vpack.c.b16 %v1926, %v1925
    %v2082 = vpack.c.b16 %v1928, %v1927
    %v2083 = vpack.c.b16 %v1930, %v1929
    %v2084 = vpack.c.b16 %v1932, %v1931
    %v2085 = vpack.c.b16 %v1934, %v1933
    %v2086 = vpack.c.b16 %v1936, %v1935
    %v2087 = vpack.c.b16 %v1938, %v1937
    %v2088 = vpack.c.b16 %v1940, %v1939
    %v2089 = vpack.c.b16 %v1942, %v1941
    %v2090 = vpack.c.b16 %v1944, %v1943
    %v2091 = vpack.c.b16 %v1946, %v1945
    %v2092 = vpack.c.b16 %v1948, %v1947
    %v2093 = vpack.c.b16 %v1950, %v1949
    %v2094 = vpack.c.b16 %v1952, %v1951
    %v2095 = vpack.c.b16 %v1954, %v1953
    %v2096 = vpack.c.b16 %v1956, %v1955
    %v2097 = vpack.c.b16 %v1958, %v1957
    %v2098 = vpack.c.b16 %v1960, %v1959
    %v2099 = vpack.c.b16 %v1962, %v1961
    %v2100 = vpack.c.b16 %v1964, %v1963
    %v2101 = vpack.c.b16 %v1966, %v1965
    %v2102 = vpack.c.b16 %v1968, %v1967
    %v2103 = vpack.c.b16 %v1970, %v1969
    %v2104 = vpack.c.b16 %v1972, %v1971
    %v2105 = vpack.c.b16 %v1974, %v1973
    %v2106 = vpack.c.b16 %v1976, %v1975
    %v2107 = vpack.c.b16 %v1978, %v1977
    %v2108 = vpack.c.b16 %v1980, %v1979
    %2237 = vmatpush.bf16.msra.mxu0 %v1988
    %2238 = vmatpush.bf16.msra.mxu0 %v1987
    %2239 = vmatpush.bf16.msra.mxu0 %v1986
    %2240 = vmatpush.bf16.msra.mxu0 %v1985
    %2241 = vmatpush.bf16.msra.mxu0 %v1984
    %2242 = vmatpush.bf16.msra.mxu0 %v1983
    %2243 = vmatpush.bf16.msra.mxu0 %v1982
    %2244 = vmatpush.bf16.msra.mxu0 %v1981
    %2245 = vmatmul.bf16.gmra.mxu0 %v1193
    %v2246 = vpop.f32.mrf.mxu0
    %v2247 = vadd.f32 %v1467, %v2246
    %v2248 = vpop.f32.mrf.mxu0
    %v2249 = vadd.f32 %v1467, %v2248
    %2250 = vdwg.mxu0
    %2251 = vmatpush.bf16.msra.mxu0 %v1996
    %2252 = vmatpush.bf16.msra.mxu0 %v1995
    %2253 = vmatpush.bf16.msra.mxu0 %v1994
    %2254 = vmatpush.bf16.msra.mxu0 %v1993
    %2255 = vmatpush.bf16.msra.mxu0 %v1992
    %2256 = vmatpush.bf16.msra.mxu0 %v1991
    %2257 = vmatpush.bf16.msra.mxu0 %v1990
    %2258 = vmatpush.bf16.msra.mxu0 %v1989
    %2259 = vmatmul.bf16.gmra.mxu0 %v1194
    %v2260 = vpop.f32.mrf.mxu0
    %v2261 = vadd.f32 %v2247, %v2260
    %v2262 = vpop.f32.mrf.mxu0
    %v2263 = vadd.f32 %v2249, %v2262
    %2264 = vdwg.mxu0
    %2265 = vmatpush.bf16.msra.mxu0 %v2004
    %2266 = vmatpush.bf16.msra.mxu0 %v2003
    %2267 = vmatpush.bf16.msra.mxu0 %v2002
    %2268 = vmatpush.bf16.msra.mxu0 %v2001
    %2269 = vmatpush.bf16.msra.mxu0 %v2000
    %2270 = vmatpush.bf16.msra.mxu0 %v1999
    %2271 = vmatpush.bf16.msra.mxu0 %v1998
    %2272 = vmatpush.bf16.msra.mxu0 %v1997
    %2273 = vmatmul.bf16.gmra.mxu0 %v1195
    %v2274 = vpop.f32.mrf.mxu0
    %v2275 = vadd.f32 %v2261, %v2274
    %v2276 = vpop.f32.mrf.mxu0
    %v2277 = vadd.f32 %v2263, %v2276
    %2278 = vdwg.mxu0
    %2279 = vmatpush.bf16.msra.mxu0 %v2012
    %2280 = vmatpush.bf16.msra.mxu0 %v2011
    %2281 = vmatpush.bf16.msra.mxu0 %v2010
    %2282 = vmatpush.bf16.msra.mxu0 %v2009
    %2283 = vmatpush.bf16.msra.mxu0 %v2008
    %2284 = vmatpush.bf16.msra.mxu0 %v2007
    %2285 = vmatpush.bf16.msra.mxu0 %v2006
    %2286 = vmatpush.bf16.msra.mxu0 %v2005
    %2287 = vmatmul.bf16.gmra.mxu0 %v1196
    %v2288 = vpop.f32.mrf.mxu0
    %v2289 = vadd.f32 %v2275, %v2288
    %v2290 = vpop.f32.mrf.mxu0
    %v2291 = vadd.f32 %v2277, %v2290
    %2292 = vdwg.mxu0
    %2293 = vmatpush.bf16.msra.mxu0 %v2020
    %2294 = vmatpush.bf16.msra.mxu0 %v2019
    %2295 = vmatpush.bf16.msra.mxu0 %v2018
    %2296 = vmatpush.bf16.msra.mxu0 %v2017
    %2297 = vmatpush.bf16.msra.mxu0 %v2016
    %2298 = vmatpush.bf16.msra.mxu0 %v2015
    %2299 = vmatpush.bf16.msra.mxu0 %v2014
    %2300 = vmatpush.bf16.msra.mxu0 %v2013
    %2301 = vmatmul.bf16.gmra.mxu0 %v1197
    %v2302 = vpop.f32.mrf.mxu0
    %v2303 = vadd.f32 %v2289, %v2302
    %v2304 = vpop.f32.mrf.mxu0
    %v2305 = vadd.f32 %v2291, %v2304
    %2306 = vdwg.mxu0
    %2307 = vmatpush.bf16.msra.mxu0 %v2028
    %2308 = vmatpush.bf16.msra.mxu0 %v2027
    %2309 = vmatpush.bf16.msra.mxu0 %v2026
    %2310 = vmatpush.bf16.msra.mxu0 %v2025
    %2311 = vmatpush.bf16.msra.mxu0 %v2024
    %2312 = vmatpush.bf16.msra.mxu0 %v2023
    %2313 = vmatpush.bf16.msra.mxu0 %v2022
    %2314 = vmatpush.bf16.msra.mxu0 %v2021
    %2315 = vmatmul.bf16.gmra.mxu0 %v1198
    %v2316 = vpop.f32.mrf.mxu0
    %v2317 = vadd.f32 %v2303, %v2316
    %v2318 = vpop.f32.mrf.mxu0
    %v2319 = vadd.f32 %v2305, %v2318
    %2320 = vdwg.mxu0
    %2321 = vmatpush.bf16.msra.mxu0 %v2036
    %2322 = vmatpush.bf16.msra.mxu0 %v2035
    %2323 = vmatpush.bf16.msra.mxu0 %v2034
    %2324 = vmatpush.bf16.msra.mxu0 %v2033
    %2325 = vmatpush.bf16.msra.mxu0 %v2032
    %2326 = vmatpush.bf16.msra.mxu0 %v2031
    %2327 = vmatpush.bf16.msra.mxu0 %v2030
    %2328 = vmatpush.bf16.msra.mxu0 %v2029
    %2329 = vmatmul.bf16.gmra.mxu0 %v1199
    %v2330 = vpop.f32.mrf.mxu0
    %v2331 = vadd.f32 %v2317, %v2330
    %v2332 = vpop.f32.mrf.mxu0
    %v2333 = vadd.f32 %v2319, %v2332
    %2334 = vdwg.mxu0
    %2335 = vmatpush.bf16.msra.mxu0 %v2044
    %2336 = vmatpush.bf16.msra.mxu0 %v2043
    %2337 = vmatpush.bf16.msra.mxu0 %v2042
    %2338 = vmatpush.bf16.msra.mxu0 %v2041
    %2339 = vmatpush.bf16.msra.mxu0 %v2040
    %2340 = vmatpush.bf16.msra.mxu0 %v2039
    %2341 = vmatpush.bf16.msra.mxu0 %v2038
    %2342 = vmatpush.bf16.msra.mxu0 %v2037
    %2343 = vmatmul.bf16.gmra.mxu0 %v1200
    %v2344 = vpop.f32.mrf.mxu0
    %v2345 = vadd.f32 %v2331, %v2344
    %v2346 = vpop.f32.mrf.mxu0
    %v2347 = vadd.f32 %v2333, %v2346
    %2348 = vdwg.mxu0
    %2349 = vmatpush.bf16.msra.mxu0 %v2052
    %2350 = vmatpush.bf16.msra.mxu0 %v2051
    %2351 = vmatpush.bf16.msra.mxu0 %v2050
    %2352 = vmatpush.bf16.msra.mxu0 %v2049
    %2353 = vmatpush.bf16.msra.mxu0 %v2048
    %2354 = vmatpush.bf16.msra.mxu0 %v2047
    %2355 = vmatpush.bf16.msra.mxu0 %v2046
    %2356 = vmatpush.bf16.msra.mxu0 %v2045
    %2357 = vmatmul.bf16.gmra.mxu0 %v1201
    %v2358 = vpop.f32.mrf.mxu0
    %v2359 = vadd.f32 %v2345, %v2358
    %v2360 = vpop.f32.mrf.mxu0
    %v2361 = vadd.f32 %v2347, %v2360
    %2362 = vdwg.mxu0
    %2363 = vmatpush.bf16.msra.mxu0 %v2060
    %2364 = vmatpush.bf16.msra.mxu0 %v2059
    %2365 = vmatpush.bf16.msra.mxu0 %v2058
    %2366 = vmatpush.bf16.msra.mxu0 %v2057
    %2367 = vmatpush.bf16.msra.mxu0 %v2056
    %2368 = vmatpush.bf16.msra.mxu0 %v2055
    %2369 = vmatpush.bf16.msra.mxu0 %v2054
    %2370 = vmatpush.bf16.msra.mxu0 %v2053
    %2371 = vmatmul.bf16.gmra.mxu0 %v1202
    %v2372 = vpop.f32.mrf.mxu0
    %v2373 = vadd.f32 %v2359, %v2372
    %v2374 = vpop.f32.mrf.mxu0
    %v2375 = vadd.f32 %v2361, %v2374
    %2376 = vdwg.mxu0
    %2377 = vmatpush.bf16.msra.mxu0 %v2068
    %2378 = vmatpush.bf16.msra.mxu0 %v2067
    %2379 = vmatpush.bf16.msra.mxu0 %v2066
    %2380 = vmatpush.bf16.msra.mxu0 %v2065
    %2381 = vmatpush.bf16.msra.mxu0 %v2064
    %2382 = vmatpush.bf16.msra.mxu0 %v2063
    %2383 = vmatpush.bf16.msra.mxu0 %v2062
    %2384 = vmatpush.bf16.msra.mxu0 %v2061
    %2385 = vmatmul.bf16.gmra.mxu0 %v1203
    %v2386 = vpop.f32.mrf.mxu0
    %v2387 = vadd.f32 %v2373, %v2386
    %v2388 = vpop.f32.mrf.mxu0
    %v2389 = vadd.f32 %v2375, %v2388
    %2390 = vdwg.mxu0
    %2391 = vmatpush.bf16.msra.mxu0 %v2076
    %2392 = vmatpush.bf16.msra.mxu0 %v2075
    %2393 = vmatpush.bf16.msra.mxu0 %v2074
    %2394 = vmatpush.bf16.msra.mxu0 %v2073
    %2395 = vmatpush.bf16.msra.mxu0 %v2072
    %2396 = vmatpush.bf16.msra.mxu0 %v2071
    %2397 = vmatpush.bf16.msra.mxu0 %v2070
    %2398 = vmatpush.bf16.msra.mxu0 %v2069
    %2399 = vmatmul.bf16.gmra.mxu0 %v1204
    %v2400 = vpop.f32.mrf.mxu0
    %v2401 = vadd.f32 %v2387, %v2400
    %v2402 = vpop.f32.mrf.mxu0
    %v2403 = vadd.f32 %v2389, %v2402
    %2404 = vdwg.mxu0
    %2405 = vmatpush.bf16.msra.mxu0 %v2084
    %2406 = vmatpush.bf16.msra.mxu0 %v2083
    %2407 = vmatpush.bf16.msra.mxu0 %v2082
    %2408 = vmatpush.bf16.msra.mxu0 %v2081
    %2409 = vmatpush.bf16.msra.mxu0 %v2080
    %2410 = vmatpush.bf16.msra.mxu0 %v2079
    %2411 = vmatpush.bf16.msra.mxu0 %v2078
    %2412 = vmatpush.bf16.msra.mxu0 %v2077
    %2413 = vmatmul.bf16.gmra.mxu0 %v1205
    %v2414 = vpop.f32.mrf.mxu0
    %v2415 = vadd.f32 %v2401, %v2414
    %v2416 = vpop.f32.mrf.mxu0
    %v2417 = vadd.f32 %v2403, %v2416
    %2418 = vdwg.mxu0
    %2419 = vmatpush.bf16.msra.mxu0 %v2092
    %2420 = vmatpush.bf16.msra.mxu0 %v2091
    %2421 = vmatpush.bf16.msra.mxu0 %v2090
    %2422 = vmatpush.bf16.msra.mxu0 %v2089
    %2423 = vmatpush.bf16.msra.mxu0 %v2088
    %2424 = vmatpush.bf16.msra.mxu0 %v2087
    %2425 = vmatpush.bf16.msra.mxu0 %v2086
    %2426 = vmatpush.bf16.msra.mxu0 %v2085
    %2427 = vmatmul.bf16.gmra.mxu0 %v1206
    %v2428 = vpop.f32.mrf.mxu0
    %v2429 = vadd.f32 %v2415, %v2428
    %v2430 = vpop.f32.mrf.mxu0
    %v2431 = vadd.f32 %v2417, %v2430
    %2432 = vdwg.mxu0
    %2433 = vmatpush.bf16.msra.mxu0 %v2100
    %2434 = vmatpush.bf16.msra.mxu0 %v2099
    %2435 = vmatpush.bf16.msra.mxu0 %v2098
    %2436 = vmatpush.bf16.msra.mxu0 %v2097
    %2437 = vmatpush.bf16.msra.mxu0 %v2096
    %2438 = vmatpush.bf16.msra.mxu0 %v2095
    %2439 = vmatpush.bf16.msra.mxu0 %v2094
    %2440 = vmatpush.bf16.msra.mxu0 %v2093
    %2441 = vmatmul.bf16.gmra.mxu0 %v1207
    %v2442 = vpop.f32.mrf.mxu0
    %v2443 = vadd.f32 %v2429, %v2442
    %v2444 = vpop.f32.mrf.mxu0
    %v2445 = vadd.f32 %v2431, %v2444
    %2446 = vdwg.mxu0
    %2447 = vmatpush.bf16.msra.mxu0 %v2108
    %2448 = vmatpush.bf16.msra.mxu0 %v2107
    %2449 = vmatpush.bf16.msra.mxu0 %v2106
    %2450 = vmatpush.bf16.msra.mxu0 %v2105
    %2451 = vmatpush.bf16.msra.mxu0 %v2104
    %2452 = vmatpush.bf16.msra.mxu0 %v2103
    %2453 = vmatpush.bf16.msra.mxu0 %v2102
    %2454 = vmatpush.bf16.msra.mxu0 %v2101
    %2455 = vmatmul.bf16.gmra.mxu0 %v1208
    %v2456 = vpop.f32.mrf.mxu0
    %v2457 = vadd.f32 %v2443, %v2456
    %v2458 = vpop.f32.mrf.mxu0
    %v2459 = vadd.f32 %v2445, %v2458
    %2460 = vdwg.mxu0
    %v2461 = vadd.f32 %v703, %v2457
    %v2462 = vadd.f32 %v704, %v2459
    %v2463 = vld [vmem:[%s16] sm:$0x1]
    %v2464 = vld [vmem:[%s17] sm:$0x1]
    %v2465 = vsel %vm115, %v2461, 0.0
    %2466 = vadd.xlane.f32.xlu0 %v2465
    %v2467 = vpop.xlane.xlu0 %2466
    %v2468 = vsel %vm115, %v2462, 0.0
    %2469 = vadd.xlane.f32.xlu0 %v2468
    %v2470 = vpop.xlane.xlu0 %2469
    %v2471 = vmul.f32 %v2467, %v656
    %v2472 = vmul.f32 %v2470, %v656
    %v2473 = vsub.f32 %v2461, %v2471
    %v2474 = vsub.f32 %v2462, %v2472
    %v2475 = vmul.f32 %v2473, %v2473
    %v2476 = vmul.f32 %v2474, %v2474
    %v2477 = vsel %vm115, %v2475, 0.0
    %2478 = vadd.xlane.f32.xlu0 %v2477
    %v2479 = vpop.xlane.xlu0 %2478
    %v2480 = vsel %vm115, %v2476, 0.0
    %2481 = vadd.xlane.f32.xlu0 %v2480
    %v2482 = vpop.xlane.xlu0 %2481
    %v2483 = vmul.f32 %v2479, %v656
    %v2484 = vmul.f32 %v2482, %v656
    %v2485 = vadd.f32 %v2483, 1e-05
    %v2486 = vadd.f32 %v2484, 1e-05
    %v2487 = vrsqrt.pop %v2485
    %v2488 = vmul.f32 %v2487, %v2485
    %v2489 = vmul.f32 %v2488, %v2487
    %v2490 = vmul.f32 0.5, %v2489
    %v2491 = vsub.f32 1.5, %v2490
    %v2492 = vmul.f32 %v2487, %v2491
    %vm2493 = vweird.f32 %v2485
    %vm2494 = vweird.f32 %v2487
    %vm2495 = vmor %vm2493, %vm2494
    %v2496 = vsel %vm2495, %v2487, %v2492
    %v2497 = vrsqrt.pop %v2486
    %v2498 = vmul.f32 %v2497, %v2486
    %v2499 = vmul.f32 %v2498, %v2497
    %v2500 = vmul.f32 0.5, %v2499
    %v2501 = vsub.f32 1.5, %v2500
    %v2502 = vmul.f32 %v2497, %v2501
    %vm2503 = vweird.f32 %v2486
    %vm2504 = vweird.f32 %v2497
    %vm2505 = vmor %vm2503, %vm2504
    %v2506 = vsel %vm2505, %v2497, %v2502
    %v2507 = vmul.f32 %v2473, %v2496
    %v2508 = vmul.f32 %v2474, %v2506
    %v2510 = vperm.slane %v2463, 0
    %v2512 = vmul.f32 %v2507, %v2510
    %v2513 = vmul.f32 %v2508, %v2510
    %v2515 = vperm.slane %v2464, 0
    %v2517 = vadd.f32 %v2512, %v2515
    %v2518 = vadd.f32 %v2513, %v2515
    %s2519 = scalar_lea.vmem %s6, 32
    %v2520 = vld [vmem:[%s2519] sm:$0xff]
    %v2521 = vld [vmem:[%s2519 + $0x8] sm:$0xff]
    %v2522 = vld [vmem:[%s2519 + $0x10] sm:$0xff]
    %v2523 = vld [vmem:[%s2519 + $0x18] sm:$0xff]
    %s2524 = scalar_lea.vmem %s7, 1
    %v2525 = vld [vmem:[%s2524] sm:$0x1]
    %v2527 = vperm.slane %v2525, 0
    %v2530 = vsel %vm115, %v2517, 0
    %v2533 = vsel %vm115, %v2518, 0
    %2535 = vmatpush.msra.mxu0 0.0
    %2536 = vmatpush.msra.mxu0 0.0
    %2537 = vmatpush.msra.mxu0 0.0
    %2538 = vmatpush.msra.mxu0 0.0
    %2539 = vmatpush.msra.mxu0 0.0
    %2540 = vmatpush.msra.mxu0 0.0
    %2541 = vmatpush.msra.mxu0 0.0
    %2542 = vmatpush.msra.mxu0 0.0
    %2543 = vmatpush.msra.mxu0 0.0
    %2544 = vmatpush.msra.mxu0 0.0
    %2545 = vmatpush.msra.mxu0 0.0
    %2546 = vmatpush.msra.mxu0 0.0
    %2547 = vmatpush.msra.mxu0 %v2523
    %2548 = vmatpush.msra.mxu0 %v2522
    %2549 = vmatpush.msra.mxu0 %v2521
    %2550 = vmatpush.msra.mxu0 %v2520
    %2551 = vmatmul.f32.gmra.mxu0 %v2530
    %v2552 = vpop.f32.mrf.mxu0
    %v2553 = vadd.f32 %v2527, %v2552
    %2554 = vmatmul.f32.gmra.mxu0 %v2533
    %v2555 = vpop.f32.mrf.mxu0
    %v2556 = vadd.f32 %v2527, %v2555
    %2557 = vdwg.mxu0
    %2558 = vmatpush.msra.mxu0 0.0
    %2559 = vmatpush.msra.mxu0 0.0
    %2560 = vmatpush.msra.mxu0 0.0
    %2561 = vmatpush.msra.mxu0 0.0
    %2562 = vmatpush.msra.mxu0 0.0
    %2563 = vmatpush.msra.mxu0 0.0
    %2564 = vmatpush.msra.mxu0 0.0
    %2565 = vmatpush.msra.mxu0 0.0
    %2566 = vmatpush.msra.mxu0 0.0
    %2567 = vmatpush.msra.mxu0 0.0
    %2568 = vmatpush.msra.mxu0 0.0
    %2569 = vmatpush.msra.mxu0 0.0
    %2570 = vmatpush.msra.mxu0 0.0
    %2571 = vmatpush.msra.mxu0 0.0
    %2572 = vmatpush.msra.mxu0 %v2556
    %2573 = vmatpush.msra.mxu0 %v2553
    %2574 = vmatmul.f32.gmra.mxu0 %v147
    %v2575 = vpop.f32.mrf.mxu0
    %v2576 = vadd.f32 0.0, %v2575
    %2577 = vmatmul.f32.gmra.mxu0 %v150
    %v2578 = vpop.f32.mrf.mxu0
    %v2579 = vadd.f32 0.0, %v2578
    %2580 = vmatmul.f32.gmra.mxu0 %v153
    %v2581 = vpop.f32.mrf.mxu0
    %v2582 = vadd.f32 0.0, %v2581
    %2583 = vmatmul.f32.gmra.mxu0 %v156
    %v2584 = vpop.f32.mrf.mxu0
    %v2585 = vadd.f32 0.0, %v2584
    %2586 = vmatmul.f32.gmra.mxu0 %v159
    %v2587 = vpop.f32.mrf.mxu0
    %v2588 = vadd.f32 0.0, %v2587
    %2589 = vmatmul.f32.gmra.mxu0 %v162
    %v2590 = vpop.f32.mrf.mxu0
    %v2591 = vadd.f32 0.0, %v2590
    %2592 = vmatmul.f32.gmra.mxu0 %v165
    %v2593 = vpop.f32.mrf.mxu0
    %v2594 = vadd.f32 0.0, %v2593
    %2595 = vmatmul.f32.gmra.mxu0 %v168
    %v2596 = vpop.f32.mrf.mxu0
    %v2597 = vadd.f32 0.0, %v2596
    %2598 = vdwg.mxu0
    %v2599 = vmul.f32 %v2576, %v220
    %v2600 = vmul.f32 %v2579, %v222
    %v2601 = vmul.f32 %v2582, %v224
    %v2602 = vmul.f32 %v2585, %v226
    %v2603 = vmul.f32 %v2588, %v228
    %v2604 = vmul.f32 %v2591, %v230
    %v2605 = vmul.f32 %v2594, %v232
    %v2606 = vmul.f32 %v2597, %v234
    %v2607 = vmul.f32 %v2576, %v252
    %v2608 = vmul.f32 %v2579, %v254
    %v2609 = vmul.f32 %v2582, %v256
    %v2610 = vmul.f32 %v2585, %v258
    %v2611 = vmul.f32 %v2588, %v260
    %v2612 = vmul.f32 %v2591, %v262
    %v2613 = vmul.f32 %v2594, %v264
    %v2614 = vmul.f32 %v2597, %v266
    %2623 = vrot.lane.b32.xlu0 %v2599, 96
    %v2624 = vpop.permute.xlu0 %2623
    %2625 = vrot.lane.b32.xlu0 %v2600, 96
    %v2626 = vpop.permute.xlu0 %2625
    %2627 = vrot.lane.b32.xlu0 %v2601, 96
    %v2628 = vpop.permute.xlu0 %2627
    %2629 = vrot.lane.b32.xlu0 %v2602, 96
    %v2630 = vpop.permute.xlu0 %2629
    %2631 = vrot.lane.b32.xlu0 %v2603, 96
    %v2632 = vpop.permute.xlu0 %2631
    %2633 = vrot.lane.b32.xlu0 %v2604, 96
    %v2634 = vpop.permute.xlu0 %2633
    %2635 = vrot.lane.b32.xlu0 %v2605, 96
    %v2636 = vpop.permute.xlu0 %2635
    %2637 = vrot.lane.b32.xlu0 %v2606, 96
    %v2638 = vpop.permute.xlu0 %2637
    %v2640 = vsel %vm115, %v2576, 0
    %v2643 = vsel %vm115, %v2579, 0
    %v2646 = vsel %vm115, %v2582, 0
    %v2649 = vsel %vm115, %v2585, 0
    %v2652 = vsel %vm115, %v2588, 0
    %v2655 = vsel %vm115, %v2591, 0
    %v2658 = vsel %vm115, %v2594, 0
    %v2661 = vsel %vm115, %v2597, 0
    %v2663 = vsel %vm115, %v2624, 0
    %v2665 = vsel %vm115, %v2626, 0
    %v2667 = vsel %vm115, %v2628, 0
    %v2669 = vsel %vm115, %v2630, 0
    %v2671 = vsel %vm115, %v2632, 0
    %v2673 = vsel %vm115, %v2634, 0
    %v2675 = vsel %vm115, %v2636, 0
    %v2677 = vsel %vm115, %v2638, 0
    %2679 = vmatpush.xpose.msra.mxu0 0.0
    %2680 = vmatpush.xpose.msra.mxu0 0.0
    %2681 = vmatpush.xpose.msra.mxu0 0.0
    %2682 = vmatpush.xpose.msra.mxu0 0.0
    %2683 = vmatpush.xpose.msra.mxu0 0.0
    %2684 = vmatpush.xpose.msra.mxu0 0.0
    %2685 = vmatpush.xpose.msra.mxu0 0.0
    %2686 = vmatpush.xpose.msra.mxu0 0.0
    %2687 = vmatpush.xpose.msra.mxu0 %v2677
    %2688 = vmatpush.xpose.msra.mxu0 %v2675
    %2689 = vmatpush.xpose.msra.mxu0 %v2673
    %2690 = vmatpush.xpose.msra.mxu0 %v2671
    %2691 = vmatpush.xpose.msra.mxu0 %v2669
    %2692 = vmatpush.xpose.msra.mxu0 %v2667
    %2693 = vmatpush.xpose.msra.mxu0 %v2665
    %2694 = vmatpush.xpose.msra.mxu0 %v2663
    %2695 = vmatmul.f32.gmra.mxu0 %v2640
    %v2696 = vpop.f32.mrf.mxu0
    %v2697 = vadd.f32 %v81, %v2696
    %2698 = vmatmul.f32.gmra.mxu0 %v2643
    %v2699 = vpop.f32.mrf.mxu0
    %v2700 = vadd.f32 %v82, %v2699
    %2701 = vmatmul.f32.gmra.mxu0 %v2646
    %v2702 = vpop.f32.mrf.mxu0
    %v2703 = vadd.f32 %v83, %v2702
    %2704 = vmatmul.f32.gmra.mxu0 %v2649
    %v2705 = vpop.f32.mrf.mxu0
    %v2706 = vadd.f32 %v84, %v2705
    %2707 = vmatmul.f32.gmra.mxu0 %v2652
    %v2708 = vpop.f32.mrf.mxu0
    %v2709 = vadd.f32 %v85, %v2708
    %2710 = vmatmul.f32.gmra.mxu0 %v2655
    %v2711 = vpop.f32.mrf.mxu0
    %v2712 = vadd.f32 %v86, %v2711
    %2713 = vmatmul.f32.gmra.mxu0 %v2658
    %v2714 = vpop.f32.mrf.mxu0
    %v2715 = vadd.f32 %v87, %v2714
    %2716 = vmatmul.f32.gmra.mxu0 %v2661
    %v2717 = vpop.f32.mrf.mxu0
    %v2718 = vadd.f32 %v88, %v2717
    %2719 = vdwg.mxu0
    %v2720 = vsel %vm388, %v2697, -inf
    %2721 = vmax.xlane.f32.xlu0 %v2720
    %v2722 = vpop.xlane.xlu0 %2721
    %v2723 = vsel %vm388, %v2700, -inf
    %2724 = vmax.xlane.f32.xlu0 %v2723
    %v2725 = vpop.xlane.xlu0 %2724
    %v2726 = vsel %vm388, %v2703, -inf
    %2727 = vmax.xlane.f32.xlu0 %v2726
    %v2728 = vpop.xlane.xlu0 %2727
    %v2729 = vsel %vm388, %v2706, -inf
    %2730 = vmax.xlane.f32.xlu0 %v2729
    %v2731 = vpop.xlane.xlu0 %2730
    %v2732 = vsel %vm388, %v2709, -inf
    %2733 = vmax.xlane.f32.xlu0 %v2732
    %v2734 = vpop.xlane.xlu0 %2733
    %v2735 = vsel %vm388, %v2712, -inf
    %2736 = vmax.xlane.f32.xlu0 %v2735
    %v2737 = vpop.xlane.xlu0 %2736
    %v2738 = vsel %vm388, %v2715, -inf
    %2739 = vmax.xlane.f32.xlu0 %v2738
    %v2740 = vpop.xlane.xlu0 %2739
    %v2741 = vsel %vm388, %v2718, -inf
    %2742 = vmax.xlane.f32.xlu0 %v2741
    %v2743 = vpop.xlane.xlu0 %2742
    %v2744 = vsub.f32 %v2697, %v2722
    %v2745 = vsub.f32 %v2700, %v2725
    %v2746 = vsub.f32 %v2703, %v2728
    %v2747 = vsub.f32 %v2706, %v2731
    %v2748 = vsub.f32 %v2709, %v2734
    %v2749 = vsub.f32 %v2712, %v2737
    %v2750 = vsub.f32 %v2715, %v2740
    %v2751 = vsub.f32 %v2718, %v2743
    %v2752 = vmul.f32 %v2744, 1.442695
    %v2753 = vpow.pop %v2752
    %v2754 = vmul.f32 %v2745, 1.442695
    %v2755 = vpow.pop %v2754
    %v2756 = vmul.f32 %v2746, 1.442695
    %v2757 = vpow.pop %v2756
    %v2758 = vmul.f32 %v2747, 1.442695
    %v2759 = vpow.pop %v2758
    %v2760 = vmul.f32 %v2748, 1.442695
    %v2761 = vpow.pop %v2760
    %v2762 = vmul.f32 %v2749, 1.442695
    %v2763 = vpow.pop %v2762
    %v2764 = vmul.f32 %v2750, 1.442695
    %v2765 = vpow.pop %v2764
    %v2766 = vmul.f32 %v2751, 1.442695
    %v2767 = vpow.pop %v2766
    %v2768 = vsel %vm388, %v2753, 0.0
    %2769 = vadd.xlane.f32.xlu0 %v2768
    %v2770 = vpop.xlane.xlu0 %2769
    %v2771 = vsel %vm388, %v2755, 0.0
    %2772 = vadd.xlane.f32.xlu0 %v2771
    %v2773 = vpop.xlane.xlu0 %2772
    %v2774 = vsel %vm388, %v2757, 0.0
    %2775 = vadd.xlane.f32.xlu0 %v2774
    %v2776 = vpop.xlane.xlu0 %2775
    %v2777 = vsel %vm388, %v2759, 0.0
    %2778 = vadd.xlane.f32.xlu0 %v2777
    %v2779 = vpop.xlane.xlu0 %2778
    %v2780 = vsel %vm388, %v2761, 0.0
    %2781 = vadd.xlane.f32.xlu0 %v2780
    %v2782 = vpop.xlane.xlu0 %2781
    %v2783 = vsel %vm388, %v2763, 0.0
    %2784 = vadd.xlane.f32.xlu0 %v2783
    %v2785 = vpop.xlane.xlu0 %2784
    %v2786 = vsel %vm388, %v2765, 0.0
    %2787 = vadd.xlane.f32.xlu0 %v2786
    %v2788 = vpop.xlane.xlu0 %2787
    %v2789 = vsel %vm388, %v2767, 0.0
    %2790 = vadd.xlane.f32.xlu0 %v2789
    %v2791 = vpop.xlane.xlu0 %2790
    %v2792 = vrcp.pop %v2770
    %v2793 = vrcp.pop %v2773
    %v2794 = vrcp.pop %v2776
    %v2795 = vrcp.pop %v2779
    %v2796 = vrcp.pop %v2782
    %v2797 = vrcp.pop %v2785
    %v2798 = vrcp.pop %v2788
    %v2799 = vrcp.pop %v2791
    %v2800 = vmul.f32 %v2753, %v2792
    %v2801 = vmul.f32 %v2755, %v2793
    %v2802 = vmul.f32 %v2757, %v2794
    %v2803 = vmul.f32 %v2759, %v2795
    %v2804 = vmul.f32 %v2761, %v2796
    %v2805 = vmul.f32 %v2763, %v2797
    %v2806 = vmul.f32 %v2765, %v2798
    %v2807 = vmul.f32 %v2767, %v2799
    %2816 = vrot.lane.b32.xlu0 %v2607, 64
    %v2817 = vpop.permute.xlu0 %2816
    %2818 = vrot.lane.b32.xlu0 %v2608, 64
    %v2819 = vpop.permute.xlu0 %2818
    %2820 = vrot.lane.b32.xlu0 %v2609, 64
    %v2821 = vpop.permute.xlu0 %2820
    %2822 = vrot.lane.b32.xlu0 %v2610, 64
    %v2823 = vpop.permute.xlu0 %2822
    %2824 = vrot.lane.b32.xlu0 %v2611, 64
    %v2825 = vpop.permute.xlu0 %2824
    %2826 = vrot.lane.b32.xlu0 %v2612, 64
    %v2827 = vpop.permute.xlu0 %2826
    %2828 = vrot.lane.b32.xlu0 %v2613, 64
    %v2829 = vpop.permute.xlu0 %2828
    %2830 = vrot.lane.b32.xlu0 %v2614, 64
    %v2831 = vpop.permute.xlu0 %2830
    %v2841 = vsel %vm388, %v2800, 0
    %v2844 = vsel %vm388, %v2801, 0
    %v2847 = vsel %vm388, %v2802, 0
    %v2850 = vsel %vm388, %v2803, 0
    %v2853 = vsel %vm388, %v2804, 0
    %v2856 = vsel %vm388, %v2805, 0
    %v2859 = vsel %vm388, %v2806, 0
    %v2862 = vsel %vm388, %v2807, 0
    %2864 = vmatpush.msra.mxu0 0.0
    %2865 = vmatpush.msra.mxu0 0.0
    %2866 = vmatpush.msra.mxu0 0.0
    %2867 = vmatpush.msra.mxu0 0.0
    %2868 = vmatpush.msra.mxu0 0.0
    %2869 = vmatpush.msra.mxu0 0.0
    %2870 = vmatpush.msra.mxu0 0.0
    %2871 = vmatpush.msra.mxu0 0.0
    %2872 = vmatpush.msra.mxu0 %v2831
    %2873 = vmatpush.msra.mxu0 %v2829
    %2874 = vmatpush.msra.mxu0 %v2827
    %2875 = vmatpush.msra.mxu0 %v2825
    %2876 = vmatpush.msra.mxu0 %v2823
    %2877 = vmatpush.msra.mxu0 %v2821
    %2878 = vmatpush.msra.mxu0 %v2819
    %2879 = vmatpush.msra.mxu0 %v2817
    %2880 = vmatmul.f32.gmra.mxu0 %v2841
    %v2881 = vpop.f32.mrf.mxu0
    %v2882 = vadd.f32 0.0, %v2881
    %2883 = vmatmul.f32.gmra.mxu0 %v2844
    %v2884 = vpop.f32.mrf.mxu0
    %v2885 = vadd.f32 0.0, %v2884
    %2886 = vmatmul.f32.gmra.mxu0 %v2847
    %v2887 = vpop.f32.mrf.mxu0
    %v2888 = vadd.f32 0.0, %v2887
    %2889 = vmatmul.f32.gmra.mxu0 %v2850
    %v2890 = vpop.f32.mrf.mxu0
    %v2891 = vadd.f32 0.0, %v2890
    %2892 = vmatmul.f32.gmra.mxu0 %v2853
    %v2893 = vpop.f32.mrf.mxu0
    %v2894 = vadd.f32 0.0, %v2893
    %2895 = vmatmul.f32.gmra.mxu0 %v2856
    %v2896 = vpop.f32.mrf.mxu0
    %v2897 = vadd.f32 0.0, %v2896
    %2898 = vmatmul.f32.gmra.mxu0 %v2859
    %v2899 = vpop.f32.mrf.mxu0
    %v2900 = vadd.f32 0.0, %v2899
    %2901 = vmatmul.f32.gmra.mxu0 %v2862
    %v2902 = vpop.f32.mrf.mxu0
    %v2903 = vadd.f32 0.0, %v2902
    %2904 = vdwg.mxu0
    %2905 = vmatpush.msra.mxu0 0.0
    %2906 = vmatpush.msra.mxu0 0.0
    %2907 = vmatpush.msra.mxu0 0.0
    %2908 = vmatpush.msra.mxu0 0.0
    %2909 = vmatpush.msra.mxu0 0.0
    %2910 = vmatpush.msra.mxu0 0.0
    %2911 = vmatpush.msra.mxu0 0.0
    %2912 = vmatpush.msra.mxu0 0.0
    %2913 = vmatpush.msra.mxu0 %v2903
    %2914 = vmatpush.msra.mxu0 %v2900
    %2915 = vmatpush.msra.mxu0 %v2897
    %2916 = vmatpush.msra.mxu0 %v2894
    %2917 = vmatpush.msra.mxu0 %v2891
    %2918 = vmatpush.msra.mxu0 %v2888
    %2919 = vmatpush.msra.mxu0 %v2885
    %2920 = vmatpush.msra.mxu0 %v2882
    %2921 = vmatmul.f32.gmra.mxu0 %v575
    %v2922 = vpop.f32.mrf.mxu0
    %v2923 = vadd.f32 0.0, %v2922
    %2924 = vmatmul.f32.gmra.mxu0 %v578
    %v2925 = vpop.f32.mrf.mxu0
    %v2926 = vadd.f32 0.0, %v2925
    %2927 = vdwg.mxu0
    %s2928 = scalar_lea.vmem %s8, 32
    %v2929 = vld [vmem:[%s2928] sm:$0xff]
    %v2930 = vld [vmem:[%s2928 + $0x8] sm:$0xff]
    %v2931 = vld [vmem:[%s2928 + $0x10] sm:$0xff]
    %v2932 = vld [vmem:[%s2928 + $0x18] sm:$0xff]
    %s2933 = scalar_lea.vmem %s9, 1
    %v2934 = vld [vmem:[%s2933] sm:$0x1]
    %v2936 = vperm.slane %v2934, 0
    %v2939 = vsel %vm115, %v2923, 0
    %v2942 = vsel %vm115, %v2926, 0
    %2944 = vmatpush.msra.mxu0 0.0
    %2945 = vmatpush.msra.mxu0 0.0
    %2946 = vmatpush.msra.mxu0 0.0
    %2947 = vmatpush.msra.mxu0 0.0
    %2948 = vmatpush.msra.mxu0 0.0
    %2949 = vmatpush.msra.mxu0 0.0
    %2950 = vmatpush.msra.mxu0 0.0
    %2951 = vmatpush.msra.mxu0 0.0
    %2952 = vmatpush.msra.mxu0 0.0
    %2953 = vmatpush.msra.mxu0 0.0
    %2954 = vmatpush.msra.mxu0 0.0
    %2955 = vmatpush.msra.mxu0 0.0
    %2956 = vmatpush.msra.mxu0 %v2932
    %2957 = vmatpush.msra.mxu0 %v2931
    %2958 = vmatpush.msra.mxu0 %v2930
    %2959 = vmatpush.msra.mxu0 %v2929
    %2960 = vmatmul.f32.gmra.mxu0 %v2939
    %v2961 = vpop.f32.mrf.mxu0
    %v2962 = vadd.f32 %v2936, %v2961
    %2963 = vmatmul.f32.gmra.mxu0 %v2942
    %v2964 = vpop.f32.mrf.mxu0
    %v2965 = vadd.f32 %v2936, %v2964
    %2966 = vdwg.mxu0
    %v2967 = vadd.f32 %v2517, %v2962
    %v2968 = vadd.f32 %v2518, %v2965
    %s2969 = scalar_lea.vmem %s10, 1
    %v2970 = vld [vmem:[%s2969] sm:$0x1]
    %s2971 = scalar_lea.vmem %s11, 1
    %v2972 = vld [vmem:[%s2971] sm:$0x1]
    %v2973 = vsel %vm115, %v2967, 0.0
    %2974 = vadd.xlane.f32.xlu0 %v2973
    %v2975 = vpop.xlane.xlu0 %2974
    %v2976 = vsel %vm115, %v2968, 0.0
    %2977 = vadd.xlane.f32.xlu0 %v2976
    %v2978 = vpop.xlane.xlu0 %2977
    %v2979 = vmul.f32 %v2975, %v656
    %v2980 = vmul.f32 %v2978, %v656
    %v2981 = vsub.f32 %v2967, %v2979
    %v2982 = vsub.f32 %v2968, %v2980
    %v2983 = vmul.f32 %v2981, %v2981
    %v2984 = vmul.f32 %v2982, %v2982
    %v2985 = vsel %vm115, %v2983, 0.0
    %2986 = vadd.xlane.f32.xlu0 %v2985
    %v2987 = vpop.xlane.xlu0 %2986
    %v2988 = vsel %vm115, %v2984, 0.0
    %2989 = vadd.xlane.f32.xlu0 %v2988
    %v2990 = vpop.xlane.xlu0 %2989
    %v2991 = vmul.f32 %v2987, %v656
    %v2992 = vmul.f32 %v2990, %v656
    %v2993 = vadd.f32 %v2991, 1e-05
    %v2994 = vadd.f32 %v2992, 1e-05
    %v2995 = vrsqrt.pop %v2993
    %v2996 = vmul.f32 %v2995, %v2993
    %v2997 = vmul.f32 %v2996, %v2995
    %v2998 = vmul.f32 0.5, %v2997
    %v2999 = vsub.f32 1.5, %v2998
    %v3000 = vmul.f32 %v2995, %v2999
    %vm3001 = vweird.f32 %v2993
    %vm3002 = vweird.f32 %v2995
    %vm3003 = vmor %vm3001, %vm3002
    %v3004 = vsel %vm3003, %v2995, %v3000
    %v3005 = vrsqrt.pop %v2994
    %v3006 = vmul.f32 %v3005, %v2994
    %v3007 = vmul.f32 %v3006, %v3005
    %v3008 = vmul.f32 0.5, %v3007
    %v3009 = vsub.f32 1.5, %v3008
    %v3010 = vmul.f32 %v3005, %v3009
    %vm3011 = vweird.f32 %v2994
    %vm3012 = vweird.f32 %v3005
    %vm3013 = vmor %vm3011, %vm3012
    %v3014 = vsel %vm3013, %v3005, %v3010
    %v3015 = vmul.f32 %v2981, %v3004
    %v3016 = vmul.f32 %v2982, %v3014
    %v3018 = vperm.slane %v2970, 0
    %v3020 = vmul.f32 %v3015, %v3018
    %v3021 = vmul.f32 %v3016, %v3018
    %v3023 = vperm.slane %v2972, 0
    %v3025 = vadd.f32 %v3020, %v3023
    %v3026 = vadd.f32 %v3021, %v3023
    %v3027 = vpack.c.bf16 %v3026, %v3025
    %s3028 = scalar_lea.vmem %s12, 256
    %v3029 = vld [vmem:[%s3028] sm:$0xff]
    %v3030 = vld [vmem:[%s3028 + $0x8] sm:$0xff]
    %v3031 = vld [vmem:[%s3028 + $0x10] sm:$0xff]
    %v3032 = vld [vmem:[%s3028 + $0x18] sm:$0xff]
    %v3033 = vld [vmem:[%s3028 + $0x20] sm:$0xff]
    %v3034 = vld [vmem:[%s3028 + $0x28] sm:$0xff]
    %v3035 = vld [vmem:[%s3028 + $0x30] sm:$0xff]
    %v3036 = vld [vmem:[%s3028 + $0x38] sm:$0xff]
    %v3037 = vld [vmem:[%s3028 + $0x40] sm:$0xff]
    %v3038 = vld [vmem:[%s3028 + $0x48] sm:$0xff]
    %v3039 = vld [vmem:[%s3028 + $0x50] sm:$0xff]
    %v3040 = vld [vmem:[%s3028 + $0x58] sm:$0xff]
    %v3041 = vld [vmem:[%s3028 + $0x60] sm:$0xff]
    %v3042 = vld [vmem:[%s3028 + $0x68] sm:$0xff]
    %v3043 = vld [vmem:[%s3028 + $0x70] sm:$0xff]
    %v3044 = vld [vmem:[%s3028 + $0x78] sm:$0xff]
    %v3045 = vld [vmem:[%s3028 + $0x80] sm:$0xff]
    %v3046 = vld [vmem:[%s3028 + $0x88] sm:$0xff]
    %v3047 = vld [vmem:[%s3028 + $0x90] sm:$0xff]
    %v3048 = vld [vmem:[%s3028 + $0x98] sm:$0xff]
    %v3049 = vld [vmem:[%s3028 + $0xa0] sm:$0xff]
    %v3050 = vld [vmem:[%s3028 + $0xa8] sm:$0xff]
    %v3051 = vld [vmem:[%s3028 + $0xb0] sm:$0xff]
    %v3052 = vld [vmem:[%s3028 + $0xb8] sm:$0xff]
    %v3053 = vld [vmem:[%s3028 + $0xc0] sm:$0xff]
    %v3054 = vld [vmem:[%s3028 + $0xc8] sm:$0xff]
    %v3055 = vld [vmem:[%s3028 + $0xd0] sm:$0xff]
    %v3056 = vld [vmem:[%s3028 + $0xd8] sm:$0xff]
    %v3057 = vld [vmem:[%s3028 + $0xe0] sm:$0xff]
    %v3058 = vld [vmem:[%s3028 + $0xe8] sm:$0xff]
    %v3059 = vld [vmem:[%s3028 + $0xf0] sm:$0xff]
    %v3060 = vld [vmem:[%s3028 + $0xf8] sm:$0xff]
    %s3061 = scalar_lea.vmem %s13, 16
    %v3062 = vld [vmem:[%s3061] sm:$0xff]
    %v3063 = vld [vmem:[%s3061 + $0x8] sm:$0xff]
    %v3066 = vperm.slane %v3062, 0
    %v3067 = vperm.slane %v3062, 1
    %v3068 = vperm.slane %v3062, 2
    %v3069 = vperm.slane %v3062, 3
    %v3070 = vperm.slane %v3062, 4
    %v3071 = vperm.slane %v3062, 5
    %v3072 = vperm.slane %v3062, 6
    %v3073 = vperm.slane %v3062, 7
    %v3074 = vperm.slane %v3063, 0
    %v3075 = vperm.slane %v3063, 1
    %v3076 = vperm.slane %v3063, 2
    %v3077 = vperm.slane %v3063, 3
    %v3078 = vperm.slane %v3063, 4
    %v3079 = vperm.slane %v3063, 5
    %v3080 = vperm.slane %v3063, 6
    %v3081 = vperm.slane %v3063, 7
    %v3130 = vunpack.c.l.b16 %v3029
    %v3131 = vunpack.c.h.b16 %v3029
    %v3132 = vunpack.c.l.b16 %v3030
    %v3133 = vunpack.c.h.b16 %v3030
    %v3134 = vunpack.c.l.b16 %v3031
    %v3135 = vunpack.c.h.b16 %v3031
    %v3136 = vunpack.c.l.b16 %v3032
    %v3137 = vunpack.c.h.b16 %v3032
    %v3138 = vunpack.c.l.b16 %v3033
    %v3139 = vunpack.c.h.b16 %v3033
    %v3140 = vunpack.c.l.b16 %v3034
    %v3141 = vunpack.c.h.b16 %v3034
    %v3142 = vunpack.c.l.b16 %v3035
    %v3143 = vunpack.c.h.b16 %v3035
    %v3144 = vunpack.c.l.b16 %v3036
    %v3145 = vunpack.c.h.b16 %v3036
    %v3146 = vunpack.c.l.b16 %v3037
    %v3147 = vunpack.c.h.b16 %v3037
    %v3148 = vunpack.c.l.b16 %v3038
    %v3149 = vunpack.c.h.b16 %v3038
    %v3150 = vunpack.c.l.b16 %v3039
    %v3151 = vunpack.c.h.b16 %v3039
    %v3152 = vunpack.c.l.b16 %v3040
    %v3153 = vunpack.c.h.b16 %v3040
    %v3154 = vunpack.c.l.b16 %v3041
    %v3155 = vunpack.c.h.b16 %v3041
    %v3156 = vunpack.c.l.b16 %v3042
    %v3157 = vunpack.c.h.b16 %v3042
    %v3158 = vunpack.c.l.b16 %v3043
    %v3159 = vunpack.c.h.b16 %v3043
    %v3160 = vunpack.c.l.b16 %v3044
    %v3161 = vunpack.c.h.b16 %v3044
    %v3162 = vunpack.c.l.b16 %v3045
    %v3163 = vunpack.c.h.b16 %v3045
    %v3164 = vunpack.c.l.b16 %v3046
    %v3165 = vunpack.c.h.b16 %v3046
    %v3166 = vunpack.c.l.b16 %v3047
    %v3167 = vunpack.c.h.b16 %v3047
    %v3168 = vunpack.c.l.b16 %v3048
    %v3169 = vunpack.c.h.b16 %v3048
    %v3170 = vunpack.c.l.b16 %v3049
    %v3171 = vunpack.c.h.b16 %v3049
    %v3172 = vunpack.c.l.b16 %v3050
    %v3173 = vunpack.c.h.b16 %v3050
    %v3174 = vunpack.c.l.b16 %v3051
    %v3175 = vunpack.c.h.b16 %v3051
    %v3176 = vunpack.c.l.b16 %v3052
    %v3177 = vunpack.c.h.b16 %v3052
    %v3178 = vunpack.c.l.b16 %v3053
    %v3179 = vunpack.c.h.b16 %v3053
    %v3180 = vunpack.c.l.b16 %v3054
    %v3181 = vunpack.c.h.b16 %v3054
    %v3182 = vunpack.c.l.b16 %v3055
    %v3183 = vunpack.c.h.b16 %v3055
    %v3184 = vunpack.c.l.b16 %v3056
    %v3185 = vunpack.c.h.b16 %v3056
    %v3186 = vunpack.c.l.b16 %v3057
    %v3187 = vunpack.c.h.b16 %v3057
    %v3188 = vunpack.c.l.b16 %v3058
    %v3189 = vunpack.c.h.b16 %v3058
    %v3190 = vunpack.c.l.b16 %v3059
    %v3191 = vunpack.c.h.b16 %v3059
    %v3192 = vunpack.c.l.b16 %v3060
    %v3193 = vunpack.c.h.b16 %v3060
    %v3194 = vpack.c.b16 %v3146, %v3130
    %v3195 = vpack.c.b16 %v3147, %v3131
    %v3196 = vpack.c.b16 %v3148, %v3132
    %v3197 = vpack.c.b16 %v3149, %v3133
    %v3198 = vpack.c.b16 %v3150, %v3134
    %v3199 = vpack.c.b16 %v3151, %v3135
    %v3200 = vpack.c.b16 %v3152, %v3136
    %v3201 = vpack.c.b16 %v3153, %v3137
    %v3202 = vpack.c.b16 %v3154, %v3138
    %v3203 = vpack.c.b16 %v3155, %v3139
    %v3204 = vpack.c.b16 %v3156, %v3140
    %v3205 = vpack.c.b16 %v3157, %v3141
    %v3206 = vpack.c.b16 %v3158, %v3142
    %v3207 = vpack.c.b16 %v3159, %v3143
    %v3208 = vpack.c.b16 %v3160, %v3144
    %v3209 = vpack.c.b16 %v3161, %v3145
    %v3210 = vpack.c.b16 %v3178, %v3162
    %v3211 = vpack.c.b16 %v3179, %v3163
    %v3212 = vpack.c.b16 %v3180, %v3164
    %v3213 = vpack.c.b16 %v3181, %v3165
    %v3214 = vpack.c.b16 %v3182, %v3166
    %v3215 = vpack.c.b16 %v3183, %v3167
    %v3216 = vpack.c.b16 %v3184, %v3168
    %v3217 = vpack.c.b16 %v3185, %v3169
    %v3218 = vpack.c.b16 %v3186, %v3170
    %v3219 = vpack.c.b16 %v3187, %v3171
    %v3220 = vpack.c.b16 %v3188, %v3172
    %v3221 = vpack.c.b16 %v3189, %v3173
    %v3222 = vpack.c.b16 %v3190, %v3174
    %v3223 = vpack.c.b16 %v3191, %v3175
    %v3224 = vpack.c.b16 %v3192, %v3176
    %v3225 = vpack.c.b16 %v3193, %v3177
    %v3259 = vsel %vm115, %v3027, 0
    %3261 = vmatpush.bf16.msra.mxu0 0
    %3262 = vmatpush.bf16.msra.mxu0 0
    %3263 = vmatpush.bf16.msra.mxu0 0
    %3264 = vmatpush.bf16.msra.mxu0 0
    %3265 = vmatpush.bf16.msra.mxu0 0
    %3266 = vmatpush.bf16.msra.mxu0 0
    %3267 = vmatpush.bf16.msra.mxu0 %v3210
    %3268 = vmatpush.bf16.msra.mxu0 %v3194
    %3269 = vmatmul.bf16.gmra.mxu0 %v3259
    %v3270 = vpop.f32.mrf.mxu0
    %v3271 = vadd.f32 %v3066, %v3270
    %v3272 = vpop.f32.mrf.mxu0
    %v3273 = vadd.f32 %v3066, %v3272
    %3274 = vdwg.mxu0
    %3275 = vmatpush.bf16.msra.mxu0 0
    %3276 = vmatpush.bf16.msra.mxu0 0
    %3277 = vmatpush.bf16.msra.mxu0 0
    %3278 = vmatpush.bf16.msra.mxu0 0
    %3279 = vmatpush.bf16.msra.mxu0 0
    %3280 = vmatpush.bf16.msra.mxu0 0
    %3281 = vmatpush.bf16.msra.mxu0 %v3211
    %3282 = vmatpush.bf16.msra.mxu0 %v3195
    %3283 = vmatmul.bf16.gmra.mxu0 %v3259
    %v3284 = vpop.f32.mrf.mxu0
    %v3285 = vadd.f32 %v3067, %v3284
    %v3286 = vpop.f32.mrf.mxu0
    %v3287 = vadd.f32 %v3067, %v3286
    %3288 = vdwg.mxu0
    %3289 = vmatpush.bf16.msra.mxu0 0
    %3290 = vmatpush.bf16.msra.mxu0 0
    %3291 = vmatpush.bf16.msra.mxu0 0
    %3292 = vmatpush.bf16.msra.mxu0 0
    %3293 = vmatpush.bf16.msra.mxu0 0
    %3294 = vmatpush.bf16.msra.mxu0 0
    %3295 = vmatpush.bf16.msra.mxu0 %v3212
    %3296 = vmatpush.bf16.msra.mxu0 %v3196
    %3297 = vmatmul.bf16.gmra.mxu0 %v3259
    %v3298 = vpop.f32.mrf.mxu0
    %v3299 = vadd.f32 %v3068, %v3298
    %v3300 = vpop.f32.mrf.mxu0
    %v3301 = vadd.f32 %v3068, %v3300
    %3302 = vdwg.mxu0
    %3303 = vmatpush.bf16.msra.mxu0 0
    %3304 = vmatpush.bf16.msra.mxu0 0
    %3305 = vmatpush.bf16.msra.mxu0 0
    %3306 = vmatpush.bf16.msra.mxu0 0
    %3307 = vmatpush.bf16.msra.mxu0 0
    %3308 = vmatpush.bf16.msra.mxu0 0
    %3309 = vmatpush.bf16.msra.mxu0 %v3213
    %3310 = vmatpush.bf16.msra.mxu0 %v3197
    %3311 = vmatmul.bf16.gmra.mxu0 %v3259
    %v3312 = vpop.f32.mrf.mxu0
    %v3313 = vadd.f32 %v3069, %v3312
    %v3314 = vpop.f32.mrf.mxu0
    %v3315 = vadd.f32 %v3069, %v3314
    %3316 = vdwg.mxu0
    %3317 = vmatpush.bf16.msra.mxu0 0
    %3318 = vmatpush.bf16.msra.mxu0 0
    %3319 = vmatpush.bf16.msra.mxu0 0
    %3320 = vmatpush.bf16.msra.mxu0 0
    %3321 = vmatpush.bf16.msra.mxu0 0
    %3322 = vmatpush.bf16.msra.mxu0 0
    %3323 = vmatpush.bf16.msra.mxu0 %v3214
    %3324 = vmatpush.bf16.msra.mxu0 %v3198
    %3325 = vmatmul.bf16.gmra.mxu0 %v3259
    %v3326 = vpop.f32.mrf.mxu0
    %v3327 = vadd.f32 %v3070, %v3326
    %v3328 = vpop.f32.mrf.mxu0
    %v3329 = vadd.f32 %v3070, %v3328
    %3330 = vdwg.mxu0
    %3331 = vmatpush.bf16.msra.mxu0 0
    %3332 = vmatpush.bf16.msra.mxu0 0
    %3333 = vmatpush.bf16.msra.mxu0 0
    %3334 = vmatpush.bf16.msra.mxu0 0
    %3335 = vmatpush.bf16.msra.mxu0 0
    %3336 = vmatpush.bf16.msra.mxu0 0
    %3337 = vmatpush.bf16.msra.mxu0 %v3215
    %3338 = vmatpush.bf16.msra.mxu0 %v3199
    %3339 = vmatmul.bf16.gmra.mxu0 %v3259
    %v3340 = vpop.f32.mrf.mxu0
    %v3341 = vadd.f32 %v3071, %v3340
    %v3342 = vpop.f32.mrf.mxu0
    %v3343 = vadd.f32 %v3071, %v3342
    %3344 = vdwg.mxu0
    %3345 = vmatpush.bf16.msra.mxu0 0
    %3346 = vmatpush.bf16.msra.mxu0 0
    %3347 = vmatpush.bf16.msra.mxu0 0
    %3348 = vmatpush.bf16.msra.mxu0 0
    %3349 = vmatpush.bf16.msra.mxu0 0
    %3350 = vmatpush.bf16.msra.mxu0 0
    %3351 = vmatpush.bf16.msra.mxu0 %v3216
    %3352 = vmatpush.bf16.msra.mxu0 %v3200
    %3353 = vmatmul.bf16.gmra.mxu0 %v3259
    %v3354 = vpop.f32.mrf.mxu0
    %v3355 = vadd.f32 %v3072, %v3354
    %v3356 = vpop.f32.mrf.mxu0
    %v3357 = vadd.f32 %v3072, %v3356
    %3358 = vdwg.mxu0
    %3359 = vmatpush.bf16.msra.mxu0 0
    %3360 = vmatpush.bf16.msra.mxu0 0
    %3361 = vmatpush.bf16.msra.mxu0 0
    %3362 = vmatpush.bf16.msra.mxu0 0
    %3363 = vmatpush.bf16.msra.mxu0 0
    %3364 = vmatpush.bf16.msra.mxu0 0
    %3365 = vmatpush.bf16.msra.mxu0 %v3217
    %3366 = vmatpush.bf16.msra.mxu0 %v3201
    %3367 = vmatmul.bf16.gmra.mxu0 %v3259
    %v3368 = vpop.f32.mrf.mxu0
    %v3369 = vadd.f32 %v3073, %v3368
    %v3370 = vpop.f32.mrf.mxu0
    %v3371 = vadd.f32 %v3073, %v3370
    %3372 = vdwg.mxu0
    %3373 = vmatpush.bf16.msra.mxu0 0
    %3374 = vmatpush.bf16.msra.mxu0 0
    %3375 = vmatpush.bf16.msra.mxu0 0
    %3376 = vmatpush.bf16.msra.mxu0 0
    %3377 = vmatpush.bf16.msra.mxu0 0
    %3378 = vmatpush.bf16.msra.mxu0 0
    %3379 = vmatpush.bf16.msra.mxu0 %v3218
    %3380 = vmatpush.bf16.msra.mxu0 %v3202
    %3381 = vmatmul.bf16.gmra.mxu0 %v3259
    %v3382 = vpop.f32.mrf.mxu0
    %v3383 = vadd.f32 %v3074, %v3382
    %v3384 = vpop.f32.mrf.mxu0
    %v3385 = vadd.f32 %v3074, %v3384
    %3386 = vdwg.mxu0
    %3387 = vmatpush.bf16.msra.mxu0 0
    %3388 = vmatpush.bf16.msra.mxu0 0
    %3389 = vmatpush.bf16.msra.mxu0 0
    %3390 = vmatpush.bf16.msra.mxu0 0
    %3391 = vmatpush.bf16.msra.mxu0 0
    %3392 = vmatpush.bf16.msra.mxu0 0
    %3393 = vmatpush.bf16.msra.mxu0 %v3219
    %3394 = vmatpush.bf16.msra.mxu0 %v3203
    %3395 = vmatmul.bf16.gmra.mxu0 %v3259
    %v3396 = vpop.f32.mrf.mxu0
    %v3397 = vadd.f32 %v3075, %v3396
    %v3398 = vpop.f32.mrf.mxu0
    %v3399 = vadd.f32 %v3075, %v3398
    %3400 = vdwg.mxu0
    %3401 = vmatpush.bf16.msra.mxu0 0
    %3402 = vmatpush.bf16.msra.mxu0 0
    %3403 = vmatpush.bf16.msra.mxu0 0
    %3404 = vmatpush.bf16.msra.mxu0 0
    %3405 = vmatpush.bf16.msra.mxu0 0
    %3406 = vmatpush.bf16.msra.mxu0 0
    %3407 = vmatpush.bf16.msra.mxu0 %v3220
    %3408 = vmatpush.bf16.msra.mxu0 %v3204
    %3409 = vmatmul.bf16.gmra.mxu0 %v3259
    %v3410 = vpop.f32.mrf.mxu0
    %v3411 = vadd.f32 %v3076, %v3410
    %v3412 = vpop.f32.mrf.mxu0
    %v3413 = vadd.f32 %v3076, %v3412
    %3414 = vdwg.mxu0
    %3415 = vmatpush.bf16.msra.mxu0 0
    %3416 = vmatpush.bf16.msra.mxu0 0
    %3417 = vmatpush.bf16.msra.mxu0 0
    %3418 = vmatpush.bf16.msra.mxu0 0
    %3419 = vmatpush.bf16.msra.mxu0 0
    %3420 = vmatpush.bf16.msra.mxu0 0
    %3421 = vmatpush.bf16.msra.mxu0 %v3221
    %3422 = vmatpush.bf16.msra.mxu0 %v3205
    %3423 = vmatmul.bf16.gmra.mxu0 %v3259
    %v3424 = vpop.f32.mrf.mxu0
    %v3425 = vadd.f32 %v3077, %v3424
    %v3426 = vpop.f32.mrf.mxu0
    %v3427 = vadd.f32 %v3077, %v3426
    %3428 = vdwg.mxu0
    %3429 = vmatpush.bf16.msra.mxu0 0
    %3430 = vmatpush.bf16.msra.mxu0 0
    %3431 = vmatpush.bf16.msra.mxu0 0
    %3432 = vmatpush.bf16.msra.mxu0 0
    %3433 = vmatpush.bf16.msra.mxu0 0
    %3434 = vmatpush.bf16.msra.mxu0 0
    %3435 = vmatpush.bf16.msra.mxu0 %v3222
    %3436 = vmatpush.bf16.msra.mxu0 %v3206
    %3437 = vmatmul.bf16.gmra.mxu0 %v3259
    %v3438 = vpop.f32.mrf.mxu0
    %v3439 = vadd.f32 %v3078, %v3438
    %v3440 = vpop.f32.mrf.mxu0
    %v3441 = vadd.f32 %v3078, %v3440
    %3442 = vdwg.mxu0
    %3443 = vmatpush.bf16.msra.mxu0 0
    %3444 = vmatpush.bf16.msra.mxu0 0
    %3445 = vmatpush.bf16.msra.mxu0 0
    %3446 = vmatpush.bf16.msra.mxu0 0
    %3447 = vmatpush.bf16.msra.mxu0 0
    %3448 = vmatpush.bf16.msra.mxu0 0
    %3449 = vmatpush.bf16.msra.mxu0 %v3223
    %3450 = vmatpush.bf16.msra.mxu0 %v3207
    %3451 = vmatmul.bf16.gmra.mxu0 %v3259
    %v3452 = vpop.f32.mrf.mxu0
    %v3453 = vadd.f32 %v3079, %v3452
    %v3454 = vpop.f32.mrf.mxu0
    %v3455 = vadd.f32 %v3079, %v3454
    %3456 = vdwg.mxu0
    %3457 = vmatpush.bf16.msra.mxu0 0
    %3458 = vmatpush.bf16.msra.mxu0 0
    %3459 = vmatpush.bf16.msra.mxu0 0
    %3460 = vmatpush.bf16.msra.mxu0 0
    %3461 = vmatpush.bf16.msra.mxu0 0
    %3462 = vmatpush.bf16.msra.mxu0 0
    %3463 = vmatpush.bf16.msra.mxu0 %v3224
    %3464 = vmatpush.bf16.msra.mxu0 %v3208
    %3465 = vmatmul.bf16.gmra.mxu0 %v3259
    %v3466 = vpop.f32.mrf.mxu0
    %v3467 = vadd.f32 %v3080, %v3466
    %v3468 = vpop.f32.mrf.mxu0
    %v3469 = vadd.f32 %v3080, %v3468
    %3470 = vdwg.mxu0
    %3471 = vmatpush.bf16.msra.mxu0 0
    %3472 = vmatpush.bf16.msra.mxu0 0
    %3473 = vmatpush.bf16.msra.mxu0 0
    %3474 = vmatpush.bf16.msra.mxu0 0
    %3475 = vmatpush.bf16.msra.mxu0 0
    %3476 = vmatpush.bf16.msra.mxu0 0
    %3477 = vmatpush.bf16.msra.mxu0 %v3225
    %3478 = vmatpush.bf16.msra.mxu0 %v3209
    %3479 = vmatmul.bf16.gmra.mxu0 %v3259
    %v3480 = vpop.f32.mrf.mxu0
    %v3481 = vadd.f32 %v3081, %v3480
    %v3482 = vpop.f32.mrf.mxu0
    %v3483 = vadd.f32 %v3081, %v3482
    %3484 = vdwg.mxu0
    %v3485 = vmax.f32 %v3271, 0.0
    %v3486 = vmax.f32 %v3285, 0.0
    %v3487 = vmax.f32 %v3299, 0.0
    %v3488 = vmax.f32 %v3313, 0.0
    %v3489 = vmax.f32 %v3327, 0.0
    %v3490 = vmax.f32 %v3341, 0.0
    %v3491 = vmax.f32 %v3355, 0.0
    %v3492 = vmax.f32 %v3369, 0.0
    %v3493 = vmax.f32 %v3383, 0.0
    %v3494 = vmax.f32 %v3397, 0.0
    %v3495 = vmax.f32 %v3411, 0.0
    %v3496 = vmax.f32 %v3425, 0.0
    %v3497 = vmax.f32 %v3439, 0.0
    %v3498 = vmax.f32 %v3453, 0.0
    %v3499 = vmax.f32 %v3467, 0.0
    %v3500 = vmax.f32 %v3481, 0.0
    %v3501 = vmax.f32 %v3273, 0.0
    %v3502 = vmax.f32 %v3287, 0.0
    %v3503 = vmax.f32 %v3301, 0.0
    %v3504 = vmax.f32 %v3315, 0.0
    %v3505 = vmax.f32 %v3329, 0.0
    %v3506 = vmax.f32 %v3343, 0.0
    %v3507 = vmax.f32 %v3357, 0.0
    %v3508 = vmax.f32 %v3371, 0.0
    %v3509 = vmax.f32 %v3385, 0.0
    %v3510 = vmax.f32 %v3399, 0.0
    %v3511 = vmax.f32 %v3413, 0.0
    %v3512 = vmax.f32 %v3427, 0.0
    %v3513 = vmax.f32 %v3441, 0.0
    %v3514 = vmax.f32 %v3455, 0.0
    %v3515 = vmax.f32 %v3469, 0.0
    %v3516 = vmax.f32 %v3483, 0.0
    %v3517 = vpack.c.bf16 %v3501, %v3485
    %v3518 = vpack.c.bf16 %v3502, %v3486
    %v3519 = vpack.c.bf16 %v3503, %v3487
    %v3520 = vpack.c.bf16 %v3504, %v3488
    %v3521 = vpack.c.bf16 %v3505, %v3489
    %v3522 = vpack.c.bf16 %v3506, %v3490
    %v3523 = vpack.c.bf16 %v3507, %v3491
    %v3524 = vpack.c.bf16 %v3508, %v3492
    %v3525 = vpack.c.bf16 %v3509, %v3493
    %v3526 = vpack.c.bf16 %v3510, %v3494
    %v3527 = vpack.c.bf16 %v3511, %v3495
    %v3528 = vpack.c.bf16 %v3512, %v3496
    %v3529 = vpack.c.bf16 %v3513, %v3497
    %v3530 = vpack.c.bf16 %v3514, %v3498
    %v3531 = vpack.c.bf16 %v3515, %v3499
    %v3532 = vpack.c.bf16 %v3516, %v3500
    %s3533 = scalar_lea.vmem %s14, 1024
    %v3534 = vld [vmem:[%s3533] sm:$0xf]
    %v3535 = vld [vmem:[%s3533 + $0x4] sm:$0xf]
    %v3536 = vld [vmem:[%s3533 + $0x8] sm:$0xf]
    %v3537 = vld [vmem:[%s3533 + $0xc] sm:$0xf]
    %v3538 = vld [vmem:[%s3533 + $0x10] sm:$0xf]
    %v3539 = vld [vmem:[%s3533 + $0x14] sm:$0xf]
    %v3540 = vld [vmem:[%s3533 + $0x18] sm:$0xf]
    %v3541 = vld [vmem:[%s3533 + $0x1c] sm:$0xf]
    %v3542 = vld [vmem:[%s3533 + $0x20] sm:$0xf]
    %v3543 = vld [vmem:[%s3533 + $0x24] sm:$0xf]
    %v3544 = vld [vmem:[%s3533 + $0x28] sm:$0xf]
    %v3545 = vld [vmem:[%s3533 + $0x2c] sm:$0xf]
    %v3546 = vld [vmem:[%s3533 + $0x30] sm:$0xf]
    %v3547 = vld [vmem:[%s3533 + $0x34] sm:$0xf]
    %v3548 = vld [vmem:[%s3533 + $0x38] sm:$0xf]
    %v3549 = vld [vmem:[%s3533 + $0x3c] sm:$0xf]
    %v3550 = vld [vmem:[%s3533 + $0x40] sm:$0xf]
    %v3551 = vld [vmem:[%s3533 + $0x44] sm:$0xf]
    %v3552 = vld [vmem:[%s3533 + $0x48] sm:$0xf]
    %v3553 = vld [vmem:[%s3533 + $0x4c] sm:$0xf]
    %v3554 = vld [vmem:[%s3533 + $0x50] sm:$0xf]
    %v3555 = vld [vmem:[%s3533 + $0x54] sm:$0xf]
    %v3556 = vld [vmem:[%s3533 + $0x58] sm:$0xf]
    %v3557 = vld [vmem:[%s3533 + $0x5c] sm:$0xf]
    %v3558 = vld [vmem:[%s3533 + $0x60] sm:$0xf]
    %v3559 = vld [vmem:[%s3533 + $0x64] sm:$0xf]
    %v3560 = vld [vmem:[%s3533 + $0x68] sm:$0xf]
    %v3561 = vld [vmem:[%s3533 + $0x6c] sm:$0xf]
    %v3562 = vld [vmem:[%s3533 + $0x70] sm:$0xf]
    %v3563 = vld [vmem:[%s3533 + $0x74] sm:$0xf]
    %v3564 = vld [vmem:[%s3533 + $0x78] sm:$0xf]
    %v3565 = vld [vmem:[%s3533 + $0x7c] sm:$0xf]
    %v3566 = vld [vmem:[%s3533 + $0x80] sm:$0xf]
    %v3567 = vld [vmem:[%s3533 + $0x84] sm:$0xf]
    %v3568 = vld [vmem:[%s3533 + $0x88] sm:$0xf]
    %v3569 = vld [vmem:[%s3533 + $0x8c] sm:$0xf]
    %v3570 = vld [vmem:[%s3533 + $0x90] sm:$0xf]
    %v3571 = vld [vmem:[%s3533 + $0x94] sm:$0xf]
    %v3572 = vld [vmem:[%s3533 + $0x98] sm:$0xf]
    %v3573 = vld [vmem:[%s3533 + $0x9c] sm:$0xf]
    %v3574 = vld [vmem:[%s3533 + $0xa0] sm:$0xf]
    %v3575 = vld [vmem:[%s3533 + $0xa4] sm:$0xf]
    %v3576 = vld [vmem:[%s3533 + $0xa8] sm:$0xf]
    %v3577 = vld [vmem:[%s3533 + $0xac] sm:$0xf]
    %v3578 = vld [vmem:[%s3533 + $0xb0] sm:$0xf]
    %v3579 = vld [vmem:[%s3533 + $0xb4] sm:$0xf]
    %v3580 = vld [vmem:[%s3533 + $0xb8] sm:$0xf]
    %v3581 = vld [vmem:[%s3533 + $0xbc] sm:$0xf]
    %v3582 = vld [vmem:[%s3533 + $0xc0] sm:$0xf]
    %v3583 = vld [vmem:[%s3533 + $0xc4] sm:$0xf]
    %v3584 = vld [vmem:[%s3533 + $0xc8] sm:$0xf]
    %v3585 = vld [vmem:[%s3533 + $0xcc] sm:$0xf]
    %v3586 = vld [vmem:[%s3533 + $0xd0] sm:$0xf]
    %v3587 = vld [vmem:[%s3533 + $0xd4] sm:$0xf]
    %v3588 = vld [vmem:[%s3533 + $0xd8] sm:$0xf]
    %v3589 = vld [vmem:[%s3533 + $0xdc] sm:$0xf]
    %v3590 = vld [vmem:[%s3533 + $0xe0] sm:$0xf]
    %v3591 = vld [vmem:[%s3533 + $0xe4] sm:$0xf]
    %v3592 = vld [vmem:[%s3533 + $0xe8] sm:$0xf]
    %v3593 = vld [vmem:[%s3533 + $0xec] sm:$0xf]
    %v3594 = vld [vmem:[%s3533 + $0xf0] sm:$0xf]
    %v3595 = vld [vmem:[%s3533 + $0xf4] sm:$0xf]
    %v3596 = vld [vmem:[%s3533 + $0xf8] sm:$0xf]
    %v3597 = vld [vmem:[%s3533 + $0xfc] sm:$0xf]
    %v3598 = vld [vmem:[%s3533 + $0x100] sm:$0xf]
    %v3599 = vld [vmem:[%s3533 + $0x104] sm:$0xf]
    %v3600 = vld [vmem:[%s3533 + $0x108] sm:$0xf]
    %v3601 = vld [vmem:[%s3533 + $0x10c] sm:$0xf]
    %v3602 = vld [vmem:[%s3533 + $0x110] sm:$0xf]
    %v3603 = vld [vmem:[%s3533 + $0x114] sm:$0xf]
    %v3604 = vld [vmem:[%s3533 + $0x118] sm:$0xf]
    %v3605 = vld [vmem:[%s3533 + $0x11c] sm:$0xf]
    %v3606 = vld [vmem:[%s3533 + $0x120] sm:$0xf]
    %v3607 = vld [vmem:[%s3533 + $0x124] sm:$0xf]
    %v3608 = vld [vmem:[%s3533 + $0x128] sm:$0xf]
    %v3609 = vld [vmem:[%s3533 + $0x12c] sm:$0xf]
    %v3610 = vld [vmem:[%s3533 + $0x130] sm:$0xf]
    %v3611 = vld [vmem:[%s3533 + $0x134] sm:$0xf]
    %v3612 = vld [vmem:[%s3533 + $0x138] sm:$0xf]
    %v3613 = vld [vmem:[%s3533 + $0x13c] sm:$0xf]
    %v3614 = vld [vmem:[%s3533 + $0x140] sm:$0xf]
    %v3615 = vld [vmem:[%s3533 + $0x144] sm:$0xf]
    %v3616 = vld [vmem:[%s3533 + $0x148] sm:$0xf]
    %v3617 = vld [vmem:[%s3533 + $0x14c] sm:$0xf]
    %v3618 = vld [vmem:[%s3533 + $0x150] sm:$0xf]
    %v3619 = vld [vmem:[%s3533 + $0x154] sm:$0xf]
    %v3620 = vld [vmem:[%s3533 + $0x158] sm:$0xf]
    %v3621 = vld [vmem:[%s3533 + $0x15c] sm:$0xf]
    %v3622 = vld [vmem:[%s3533 + $0x160] sm:$0xf]
    %v3623 = vld [vmem:[%s3533 + $0x164] sm:$0xf]
    %v3624 = vld [vmem:[%s3533 + $0x168] sm:$0xf]
    %v3625 = vld [vmem:[%s3533 + $0x16c] sm:$0xf]
    %v3626 = vld [vmem:[%s3533 + $0x170] sm:$0xf]
    %v3627 = vld [vmem:[%s3533 + $0x174] sm:$0xf]
    %v3628 = vld [vmem:[%s3533 + $0x178] sm:$0xf]
    %v3629 = vld [vmem:[%s3533 + $0x17c] sm:$0xf]
    %v3630 = vld [vmem:[%s3533 + $0x180] sm:$0xf]
    %v3631 = vld [vmem:[%s3533 + $0x184] sm:$0xf]
    %v3632 = vld [vmem:[%s3533 + $0x188] sm:$0xf]
    %v3633 = vld [vmem:[%s3533 + $0x18c] sm:$0xf]
    %v3634 = vld [vmem:[%s3533 + $0x190] sm:$0xf]
    %v3635 = vld [vmem:[%s3533 + $0x194] sm:$0xf]
    %v3636 = vld [vmem:[%s3533 + $0x198] sm:$0xf]
    %v3637 = vld [vmem:[%s3533 + $0x19c] sm:$0xf]
    %v3638 = vld [vmem:[%s3533 + $0x1a0] sm:$0xf]
    %v3639 = vld [vmem:[%s3533 + $0x1a4] sm:$0xf]
    %v3640 = vld [vmem:[%s3533 + $0x1a8] sm:$0xf]
    %v3641 = vld [vmem:[%s3533 + $0x1ac] sm:$0xf]
    %v3642 = vld [vmem:[%s3533 + $0x1b0] sm:$0xf]
    %v3643 = vld [vmem:[%s3533 + $0x1b4] sm:$0xf]
    %v3644 = vld [vmem:[%s3533 + $0x1b8] sm:$0xf]
    %v3645 = vld [vmem:[%s3533 + $0x1bc] sm:$0xf]
    %v3646 = vld [vmem:[%s3533 + $0x1c0] sm:$0xf]
    %v3647 = vld [vmem:[%s3533 + $0x1c4] sm:$0xf]
    %v3648 = vld [vmem:[%s3533 + $0x1c8] sm:$0xf]
    %v3649 = vld [vmem:[%s3533 + $0x1cc] sm:$0xf]
    %v3650 = vld [vmem:[%s3533 + $0x1d0] sm:$0xf]
    %v3651 = vld [vmem:[%s3533 + $0x1d4] sm:$0xf]
    %v3652 = vld [vmem:[%s3533 + $0x1d8] sm:$0xf]
    %v3653 = vld [vmem:[%s3533 + $0x1dc] sm:$0xf]
    %v3654 = vld [vmem:[%s3533 + $0x1e0] sm:$0xf]
    %v3655 = vld [vmem:[%s3533 + $0x1e4] sm:$0xf]
    %v3656 = vld [vmem:[%s3533 + $0x1e8] sm:$0xf]
    %v3657 = vld [vmem:[%s3533 + $0x1ec] sm:$0xf]
    %v3658 = vld [vmem:[%s3533 + $0x1f0] sm:$0xf]
    %v3659 = vld [vmem:[%s3533 + $0x1f4] sm:$0xf]
    %v3660 = vld [vmem:[%s3533 + $0x1f8] sm:$0xf]
    %v3661 = vld [vmem:[%s3533 + $0x1fc] sm:$0xf]
    %v3662 = vld [vmem:[%s3533 + $0x200] sm:$0xf]
    %v3663 = vld [vmem:[%s3533 + $0x204] sm:$0xf]
    %v3664 = vld [vmem:[%s3533 + $0x208] sm:$0xf]
    %v3665 = vld [vmem:[%s3533 + $0x20c] sm:$0xf]
    %v3666 = vld [vmem:[%s3533 + $0x210] sm:$0xf]
    %v3667 = vld [vmem:[%s3533 + $0x214] sm:$0xf]
    %v3668 = vld [vmem:[%s3533 + $0x218] sm:$0xf]
    %v3669 = vld [vmem:[%s3533 + $0x21c] sm:$0xf]
    %v3670 = vld [vmem:[%s3533 + $0x220] sm:$0xf]
    %v3671 = vld [vmem:[%s3533 + $0x224] sm:$0xf]
    %v3672 = vld [vmem:[%s3533 + $0x228] sm:$0xf]
    %v3673 = vld [vmem:[%s3533 + $0x22c] sm:$0xf]
    %v3674 = vld [vmem:[%s3533 + $0x230] sm:$0xf]
    %v3675 = vld [vmem:[%s3533 + $0x234] sm:$0xf]
    %v3676 = vld [vmem:[%s3533 + $0x238] sm:$0xf]
    %v3677 = vld [vmem:[%s3533 + $0x23c] sm:$0xf]
    %v3678 = vld [vmem:[%s3533 + $0x240] sm:$0xf]
    %v3679 = vld [vmem:[%s3533 + $0x244] sm:$0xf]
    %v3680 = vld [vmem:[%s3533 + $0x248] sm:$0xf]
    %v3681 = vld [vmem:[%s3533 + $0x24c] sm:$0xf]
    %v3682 = vld [vmem:[%s3533 + $0x250] sm:$0xf]
    %v3683 = vld [vmem:[%s3533 + $0x254] sm:$0xf]
    %v3684 = vld [vmem:[%s3533 + $0x258] sm:$0xf]
    %v3685 = vld [vmem:[%s3533 + $0x25c] sm:$0xf]
    %v3686 = vld [vmem:[%s3533 + $0x260] sm:$0xf]
    %v3687 = vld [vmem:[%s3533 + $0x264] sm:$0xf]
    %v3688 = vld [vmem:[%s3533 + $0x268] sm:$0xf]
    %v3689 = vld [vmem:[%s3533 + $0x26c] sm:$0xf]
    %v3690 = vld [vmem:[%s3533 + $0x270] sm:$0xf]
    %v3691 = vld [vmem:[%s3533 + $0x274] sm:$0xf]
    %v3692 = vld [vmem:[%s3533 + $0x278] sm:$0xf]
    %v3693 = vld [vmem:[%s3533 + $0x27c] sm:$0xf]
    %v3694 = vld [vmem:[%s3533 + $0x280] sm:$0xf]
    %v3695 = vld [vmem:[%s3533 + $0x284] sm:$0xf]
    %v3696 = vld [vmem:[%s3533 + $0x288] sm:$0xf]
    %v3697 = vld [vmem:[%s3533 + $0x28c] sm:$0xf]
    %v3698 = vld [vmem:[%s3533 + $0x290] sm:$0xf]
    %v3699 = vld [vmem:[%s3533 + $0x294] sm:$0xf]
    %v3700 = vld [vmem:[%s3533 + $0x298] sm:$0xf]
    %v3701 = vld [vmem:[%s3533 + $0x29c] sm:$0xf]
    %v3702 = vld [vmem:[%s3533 + $0x2a0] sm:$0xf]
    %v3703 = vld [vmem:[%s3533 + $0x2a4] sm:$0xf]
    %v3704 = vld [vmem:[%s3533 + $0x2a8] sm:$0xf]
    %v3705 = vld [vmem:[%s3533 + $0x2ac] sm:$0xf]
    %v3706 = vld [vmem:[%s3533 + $0x2b0] sm:$0xf]
    %v3707 = vld [vmem:[%s3533 + $0x2b4] sm:$0xf]
    %v3708 = vld [vmem:[%s3533 + $0x2b8] sm:$0xf]
    %v3709 = vld [vmem:[%s3533 + $0x2bc] sm:$0xf]
    %v3710 = vld [vmem:[%s3533 + $0x2c0] sm:$0xf]
    %v3711 = vld [vmem:[%s3533 + $0x2c4] sm:$0xf]
    %v3712 = vld [vmem:[%s3533 + $0x2c8] sm:$0xf]
    %v3713 = vld [vmem:[%s3533 + $0x2cc] sm:$0xf]
    %v3714 = vld [vmem:[%s3533 + $0x2d0] sm:$0xf]
    %v3715 = vld [vmem:[%s3533 + $0x2d4] sm:$0xf]
    %v3716 = vld [vmem:[%s3533 + $0x2d8] sm:$0xf]
    %v3717 = vld [vmem:[%s3533 + $0x2dc] sm:$0xf]
    %v3718 = vld [vmem:[%s3533 + $0x2e0] sm:$0xf]
    %v3719 = vld [vmem:[%s3533 + $0x2e4] sm:$0xf]
    %v3720 = vld [vmem:[%s3533 + $0x2e8] sm:$0xf]
    %v3721 = vld [vmem:[%s3533 + $0x2ec] sm:$0xf]
    %v3722 = vld [vmem:[%s3533 + $0x2f0] sm:$0xf]
    %v3723 = vld [vmem:[%s3533 + $0x2f4] sm:$0xf]
    %v3724 = vld [vmem:[%s3533 + $0x2f8] sm:$0xf]
    %v3725 = vld [vmem:[%s3533 + $0x2fc] sm:$0xf]
    %v3726 = vld [vmem:[%s3533 + $0x300] sm:$0xf]
    %v3727 = vld [vmem:[%s3533 + $0x304] sm:$0xf]
    %v3728 = vld [vmem:[%s3533 + $0x308] sm:$0xf]
    %v3729 = vld [vmem:[%s3533 + $0x30c] sm:$0xf]
    %v3730 = vld [vmem:[%s3533 + $0x310] sm:$0xf]
    %v3731 = vld [vmem:[%s3533 + $0x314] sm:$0xf]
    %v3732 = vld [vmem:[%s3533 + $0x318] sm:$0xf]
    %v3733 = vld [vmem:[%s3533 + $0x31c] sm:$0xf]
    %v3734 = vld [vmem:[%s3533 + $0x320] sm:$0xf]
    %v3735 = vld [vmem:[%s3533 + $0x324] sm:$0xf]
    %v3736 = vld [vmem:[%s3533 + $0x328] sm:$0xf]
    %v3737 = vld [vmem:[%s3533 + $0x32c] sm:$0xf]
    %v3738 = vld [vmem:[%s3533 + $0x330] sm:$0xf]
    %v3739 = vld [vmem:[%s3533 + $0x334] sm:$0xf]
    %v3740 = vld [vmem:[%s3533 + $0x338] sm:$0xf]
    %v3741 = vld [vmem:[%s3533 + $0x33c] sm:$0xf]
    %v3742 = vld [vmem:[%s3533 + $0x340] sm:$0xf]
    %v3743 = vld [vmem:[%s3533 + $0x344] sm:$0xf]
    %v3744 = vld [vmem:[%s3533 + $0x348] sm:$0xf]
    %v3745 = vld [vmem:[%s3533 + $0x34c] sm:$0xf]
    %v3746 = vld [vmem:[%s3533 + $0x350] sm:$0xf]
    %v3747 = vld [vmem:[%s3533 + $0x354] sm:$0xf]
    %v3748 = vld [vmem:[%s3533 + $0x358] sm:$0xf]
    %v3749 = vld [vmem:[%s3533 + $0x35c] sm:$0xf]
    %v3750 = vld [vmem:[%s3533 + $0x360] sm:$0xf]
    %v3751 = vld [vmem:[%s3533 + $0x364] sm:$0xf]
    %v3752 = vld [vmem:[%s3533 + $0x368] sm:$0xf]
    %v3753 = vld [vmem:[%s3533 + $0x36c] sm:$0xf]
    %v3754 = vld [vmem:[%s3533 + $0x370] sm:$0xf]
    %v3755 = vld [vmem:[%s3533 + $0x374] sm:$0xf]
    %v3756 = vld [vmem:[%s3533 + $0x378] sm:$0xf]
    %v3757 = vld [vmem:[%s3533 + $0x37c] sm:$0xf]
    %v3758 = vld [vmem:[%s3533 + $0x380] sm:$0xf]
    %v3759 = vld [vmem:[%s3533 + $0x384] sm:$0xf]
    %v3760 = vld [vmem:[%s3533 + $0x388] sm:$0xf]
    %v3761 = vld [vmem:[%s3533 + $0x38c] sm:$0xf]
    %v3762 = vld [vmem:[%s3533 + $0x390] sm:$0xf]
    %v3763 = vld [vmem:[%s3533 + $0x394] sm:$0xf]
    %v3764 = vld [vmem:[%s3533 + $0x398] sm:$0xf]
    %v3765 = vld [vmem:[%s3533 + $0x39c] sm:$0xf]
    %v3766 = vld [vmem:[%s3533 + $0x3a0] sm:$0xf]
    %v3767 = vld [vmem:[%s3533 + $0x3a4] sm:$0xf]
    %v3768 = vld [vmem:[%s3533 + $0x3a8] sm:$0xf]
    %v3769 = vld [vmem:[%s3533 + $0x3ac] sm:$0xf]
    %v3770 = vld [vmem:[%s3533 + $0x3b0] sm:$0xf]
    %v3771 = vld [vmem:[%s3533 + $0x3b4] sm:$0xf]
    %v3772 = vld [vmem:[%s3533 + $0x3b8] sm:$0xf]
    %v3773 = vld [vmem:[%s3533 + $0x3bc] sm:$0xf]
    %v3774 = vld [vmem:[%s3533 + $0x3c0] sm:$0xf]
    %v3775 = vld [vmem:[%s3533 + $0x3c4] sm:$0xf]
    %v3776 = vld [vmem:[%s3533 + $0x3c8] sm:$0xf]
    %v3777 = vld [vmem:[%s3533 + $0x3cc] sm:$0xf]
    %v3778 = vld [vmem:[%s3533 + $0x3d0] sm:$0xf]
    %v3779 = vld [vmem:[%s3533 + $0x3d4] sm:$0xf]
    %v3780 = vld [vmem:[%s3533 + $0x3d8] sm:$0xf]
    %v3781 = vld [vmem:[%s3533 + $0x3dc] sm:$0xf]
    %v3782 = vld [vmem:[%s3533 + $0x3e0] sm:$0xf]
    %v3783 = vld [vmem:[%s3533 + $0x3e4] sm:$0xf]
    %v3784 = vld [vmem:[%s3533 + $0x3e8] sm:$0xf]
    %v3785 = vld [vmem:[%s3533 + $0x3ec] sm:$0xf]
    %v3786 = vld [vmem:[%s3533 + $0x3f0] sm:$0xf]
    %v3787 = vld [vmem:[%s3533 + $0x3f4] sm:$0xf]
    %v3788 = vld [vmem:[%s3533 + $0x3f8] sm:$0xf]
    %v3789 = vld [vmem:[%s3533 + $0x3fc] sm:$0xf]
    %s3790 = scalar_lea.vmem %s15, 1
    %v3791 = vld [vmem:[%s3790] sm:$0x1]
    %v3793 = vperm.slane %v3791, 0
    %v4051 = vunpack.c.l.b16 %v3534
    %v4052 = vunpack.c.l.b16 %v3535
    %v4053 = vunpack.c.l.b16 %v3536
    %v4054 = vunpack.c.l.b16 %v3537
    %v4055 = vunpack.c.l.b16 %v3538
    %v4056 = vunpack.c.l.b16 %v3539
    %v4057 = vunpack.c.l.b16 %v3540
    %v4058 = vunpack.c.l.b16 %v3541
    %v4059 = vunpack.c.l.b16 %v3542
    %v4060 = vunpack.c.l.b16 %v3543
    %v4061 = vunpack.c.l.b16 %v3544
    %v4062 = vunpack.c.l.b16 %v3545
    %v4063 = vunpack.c.l.b16 %v3546
    %v4064 = vunpack.c.l.b16 %v3547
    %v4065 = vunpack.c.l.b16 %v3548
    %v4066 = vunpack.c.l.b16 %v3549
    %v4067 = vunpack.c.l.b16 %v3550
    %v4068 = vunpack.c.l.b16 %v3551
    %v4069 = vunpack.c.l.b16 %v3552
    %v4070 = vunpack.c.l.b16 %v3553
    %v4071 = vunpack.c.l.b16 %v3554
    %v4072 = vunpack.c.l.b16 %v3555
    %v4073 = vunpack.c.l.b16 %v3556
    %v4074 = vunpack.c.l.b16 %v3557
    %v4075 = vunpack.c.l.b16 %v3558
    %v4076 = vunpack.c.l.b16 %v3559
    %v4077 = vunpack.c.l.b16 %v3560
    %v4078 = vunpack.c.l.b16 %v3561
    %v4079 = vunpack.c.l.b16 %v3562
    %v4080 = vunpack.c.l.b16 %v3563
    %v4081 = vunpack.c.l.b16 %v3564
    %v4082 = vunpack.c.l.b16 %v3565
    %v4083 = vunpack.c.l.b16 %v3566
    %v4084 = vunpack.c.l.b16 %v3567
    %v4085 = vunpack.c.l.b16 %v3568
    %v4086 = vunpack.c.l.b16 %v3569
    %v4087 = vunpack.c.l.b16 %v3570
    %v4088 = vunpack.c.l.b16 %v3571
    %v4089 = vunpack.c.l.b16 %v3572
    %v4090 = vunpack.c.l.b16 %v3573
    %v4091 = vunpack.c.l.b16 %v3574
    %v4092 = vunpack.c.l.b16 %v3575
    %v4093 = vunpack.c.l.b16 %v3576
    %v4094 = vunpack.c.l.b16 %v3577
    %v4095 = vunpack.c.l.b16 %v3578
    %v4096 = vunpack.c.l.b16 %v3579
    %v4097 = vunpack.c.l.b16 %v3580
    %v4098 = vunpack.c.l.b16 %v3581
    %v4099 = vunpack.c.l.b16 %v3582
    %v4100 = vunpack.c.l.b16 %v3583
    %v4101 = vunpack.c.l.b16 %v3584
    %v4102 = vunpack.c.l.b16 %v3585
    %v4103 = vunpack.c.l.b16 %v3586
    %v4104 = vunpack.c.l.b16 %v3587
    %v4105 = vunpack.c.l.b16 %v3588
    %v4106 = vunpack.c.l.b16 %v3589
    %v4107 = vunpack.c.l.b16 %v3590
    %v4108 = vunpack.c.l.b16 %v3591
    %v4109 = vunpack.c.l.b16 %v3592
    %v4110 = vunpack.c.l.b16 %v3593
    %v4111 = vunpack.c.l.b16 %v3594
    %v4112 = vunpack.c.l.b16 %v3595
    %v4113 = vunpack.c.l.b16 %v3596
    %v4114 = vunpack.c.l.b16 %v3597
    %v4115 = vunpack.c.l.b16 %v3598
    %v4116 = vunpack.c.l.b16 %v3599
    %v4117 = vunpack.c.l.b16 %v3600
    %v4118 = vunpack.c.l.b16 %v3601
    %v4119 = vunpack.c.l.b16 %v3602
    %v4120 = vunpack.c.l.b16 %v3603
    %v4121 = vunpack.c.l.b16 %v3604
    %v4122 = vunpack.c.l.b16 %v3605
    %v4123 = vunpack.c.l.b16 %v3606
    %v4124 = vunpack.c.l.b16 %v3607
    %v4125 = vunpack.c.l.b16 %v3608
    %v4126 = vunpack.c.l.b16 %v3609
    %v4127 = vunpack.c.l.b16 %v3610
    %v4128 = vunpack.c.l.b16 %v3611
    %v4129 = vunpack.c.l.b16 %v3612
    %v4130 = vunpack.c.l.b16 %v3613
    %v4131 = vunpack.c.l.b16 %v3614
    %v4132 = vunpack.c.l.b16 %v3615
    %v4133 = vunpack.c.l.b16 %v3616
    %v4134 = vunpack.c.l.b16 %v3617
    %v4135 = vunpack.c.l.b16 %v3618
    %v4136 = vunpack.c.l.b16 %v3619
    %v4137 = vunpack.c.l.b16 %v3620
    %v4138 = vunpack.c.l.b16 %v3621
    %v4139 = vunpack.c.l.b16 %v3622
    %v4140 = vunpack.c.l.b16 %v3623
    %v4141 = vunpack.c.l.b16 %v3624
    %v4142 = vunpack.c.l.b16 %v3625
    %v4143 = vunpack.c.l.b16 %v3626
    %v4144 = vunpack.c.l.b16 %v3627
    %v4145 = vunpack.c.l.b16 %v3628
    %v4146 = vunpack.c.l.b16 %v3629
    %v4147 = vunpack.c.l.b16 %v3630
    %v4148 = vunpack.c.l.b16 %v3631
    %v4149 = vunpack.c.l.b16 %v3632
    %v4150 = vunpack.c.l.b16 %v3633
    %v4151 = vunpack.c.l.b16 %v3634
    %v4152 = vunpack.c.l.b16 %v3635
    %v4153 = vunpack.c.l.b16 %v3636
    %v4154 = vunpack.c.l.b16 %v3637
    %v4155 = vunpack.c.l.b16 %v3638
    %v4156 = vunpack.c.l.b16 %v3639
    %v4157 = vunpack.c.l.b16 %v3640
    %v4158 = vunpack.c.l.b16 %v3641
    %v4159 = vunpack.c.l.b16 %v3642
    %v4160 = vunpack.c.l.b16 %v3643
    %v4161 = vunpack.c.l.b16 %v3644
    %v4162 = vunpack.c.l.b16 %v3645
    %v4163 = vunpack.c.l.b16 %v3646
    %v4164 = vunpack.c.l.b16 %v3647
    %v4165 = vunpack.c.l.b16 %v3648
    %v4166 = vunpack.c.l.b16 %v3649
    %v4167 = vunpack.c.l.b16 %v3650
    %v4168 = vunpack.c.l.b16 %v3651
    %v4169 = vunpack.c.l.b16 %v3652
    %v4170 = vunpack.c.l.b16 %v3653
    %v4171 = vunpack.c.l.b16 %v3654
    %v4172 = vunpack.c.l.b16 %v3655
    %v4173 = vunpack.c.l.b16 %v3656
    %v4174 = vunpack.c.l.b16 %v3657
    %v4175 = vunpack.c.l.b16 %v3658
    %v4176 = vunpack.c.l.b16 %v3659
    %v4177 = vunpack.c.l.b16 %v3660
    %v4178 = vunpack.c.l.b16 %v3661
    %v4179 = vunpack.c.l.b16 %v3662
    %v4180 = vunpack.c.l.b16 %v3663
    %v4181 = vunpack.c.l.b16 %v3664
    %v4182 = vunpack.c.l.b16 %v3665
    %v4183 = vunpack.c.l.b16 %v3666
    %v4184 = vunpack.c.l.b16 %v3667
    %v4185 = vunpack.c.l.b16 %v3668
    %v4186 = vunpack.c.l.b16 %v3669
    %v4187 = vunpack.c.l.b16 %v3670
    %v4188 = vunpack.c.l.b16 %v3671
    %v4189 = vunpack.c.l.b16 %v3672
    %v4190 = vunpack.c.l.b16 %v3673
    %v4191 = vunpack.c.l.b16 %v3674
    %v4192 = vunpack.c.l.b16 %v3675
    %v4193 = vunpack.c.l.b16 %v3676
    %v4194 = vunpack.c.l.b16 %v3677
    %v4195 = vunpack.c.l.b16 %v3678
    %v4196 = vunpack.c.l.b16 %v3679
    %v4197 = vunpack.c.l.b16 %v3680
    %v4198 = vunpack.c.l.b16 %v3681
    %v4199 = vunpack.c.l.b16 %v3682
    %v4200 = vunpack.c.l.b16 %v3683
    %v4201 = vunpack.c.l.b16 %v3684
    %v4202 = vunpack.c.l.b16 %v3685
    %v4203 = vunpack.c.l.b16 %v3686
    %v4204 = vunpack.c.l.b16 %v3687
    %v4205 = vunpack.c.l.b16 %v3688
    %v4206 = vunpack.c.l.b16 %v3689
    %v4207 = vunpack.c.l.b16 %v3690
    %v4208 = vunpack.c.l.b16 %v3691
    %v4209 = vunpack.c.l.b16 %v3692
    %v4210 = vunpack.c.l.b16 %v3693
    %v4211 = vunpack.c.l.b16 %v3694
    %v4212 = vunpack.c.l.b16 %v3695
    %v4213 = vunpack.c.l.b16 %v3696
    %v4214 = vunpack.c.l.b16 %v3697
    %v4215 = vunpack.c.l.b16 %v3698
    %v4216 = vunpack.c.l.b16 %v3699
    %v4217 = vunpack.c.l.b16 %v3700
    %v4218 = vunpack.c.l.b16 %v3701
    %v4219 = vunpack.c.l.b16 %v3702
    %v4220 = vunpack.c.l.b16 %v3703
    %v4221 = vunpack.c.l.b16 %v3704
    %v4222 = vunpack.c.l.b16 %v3705
    %v4223 = vunpack.c.l.b16 %v3706
    %v4224 = vunpack.c.l.b16 %v3707
    %v4225 = vunpack.c.l.b16 %v3708
    %v4226 = vunpack.c.l.b16 %v3709
    %v4227 = vunpack.c.l.b16 %v3710
    %v4228 = vunpack.c.l.b16 %v3711
    %v4229 = vunpack.c.l.b16 %v3712
    %v4230 = vunpack.c.l.b16 %v3713
    %v4231 = vunpack.c.l.b16 %v3714
    %v4232 = vunpack.c.l.b16 %v3715
    %v4233 = vunpack.c.l.b16 %v3716
    %v4234 = vunpack.c.l.b16 %v3717
    %v4235 = vunpack.c.l.b16 %v3718
    %v4236 = vunpack.c.l.b16 %v3719
    %v4237 = vunpack.c.l.b16 %v3720
    %v4238 = vunpack.c.l.b16 %v3721
    %v4239 = vunpack.c.l.b16 %v3722
    %v4240 = vunpack.c.l.b16 %v3723
    %v4241 = vunpack.c.l.b16 %v3724
    %v4242 = vunpack.c.l.b16 %v3725
    %v4243 = vunpack.c.l.b16 %v3726
    %v4244 = vunpack.c.l.b16 %v3727
    %v4245 = vunpack.c.l.b16 %v3728
    %v4246 = vunpack.c.l.b16 %v3729
    %v4247 = vunpack.c.l.b16 %v3730
    %v4248 = vunpack.c.l.b16 %v3731
    %v4249 = vunpack.c.l.b16 %v3732
    %v4250 = vunpack.c.l.b16 %v3733
    %v4251 = vunpack.c.l.b16 %v3734
    %v4252 = vunpack.c.l.b16 %v3735
    %v4253 = vunpack.c.l.b16 %v3736
    %v4254 = vunpack.c.l.b16 %v3737
    %v4255 = vunpack.c.l.b16 %v3738
    %v4256 = vunpack.c.l.b16 %v3739
    %v4257 = vunpack.c.l.b16 %v3740
    %v4258 = vunpack.c.l.b16 %v3741
    %v4259 = vunpack.c.l.b16 %v3742
    %v4260 = vunpack.c.l.b16 %v3743
    %v4261 = vunpack.c.l.b16 %v3744
    %v4262 = vunpack.c.l.b16 %v3745
    %v4263 = vunpack.c.l.b16 %v3746
    %v4264 = vunpack.c.l.b16 %v3747
    %v4265 = vunpack.c.l.b16 %v3748
    %v4266 = vunpack.c.l.b16 %v3749
    %v4267 = vunpack.c.l.b16 %v3750
    %v4268 = vunpack.c.l.b16 %v3751
    %v4269 = vunpack.c.l.b16 %v3752
    %v4270 = vunpack.c.l.b16 %v3753
    %v4271 = vunpack.c.l.b16 %v3754
    %v4272 = vunpack.c.l.b16 %v3755
    %v4273 = vunpack.c.l.b16 %v3756
    %v4274 = vunpack.c.l.b16 %v3757
    %v4275 = vunpack.c.l.b16 %v3758
    %v4276 = vunpack.c.l.b16 %v3759
    %v4277 = vunpack.c.l.b16 %v3760
    %v4278 = vunpack.c.l.b16 %v3761
    %v4279 = vunpack.c.l.b16 %v3762
    %v4280 = vunpack.c.l.b16 %v3763
    %v4281 = vunpack.c.l.b16 %v3764
    %v4282 = vunpack.c.l.b16 %v3765
    %v4283 = vunpack.c.l.b16 %v3766
    %v4284 = vunpack.c.l.b16 %v3767
    %v4285 = vunpack.c.l.b16 %v3768
    %v4286 = vunpack.c.l.b16 %v3769
    %v4287 = vunpack.c.l.b16 %v3770
    %v4288 = vunpack.c.l.b16 %v3771
    %v4289 = vunpack.c.l.b16 %v3772
    %v4290 = vunpack.c.l.b16 %v3773
    %v4291 = vunpack.c.l.b16 %v3774
    %v4292 = vunpack.c.l.b16 %v3775
    %v4293 = vunpack.c.l.b16 %v3776
    %v4294 = vunpack.c.l.b16 %v3777
    %v4295 = vunpack.c.l.b16 %v3778
    %v4296 = vunpack.c.l.b16 %v3779
    %v4297 = vunpack.c.l.b16 %v3780
    %v4298 = vunpack.c.l.b16 %v3781
    %v4299 = vunpack.c.l.b16 %v3782
    %v4300 = vunpack.c.l.b16 %v3783
    %v4301 = vunpack.c.l.b16 %v3784
    %v4302 = vunpack.c.l.b16 %v3785
    %v4303 = vunpack.c.l.b16 %v3786
    %v4304 = vunpack.c.l.b16 %v3787
    %v4305 = vunpack.c.l.b16 %v3788
    %v4306 = vunpack.c.l.b16 %v3789
    %v4307 = vpack.c.b16 %v4052, %v4051
    %v4308 = vpack.c.b16 %v4054, %v4053
    %v4309 = vpack.c.b16 %v4056, %v4055
    %v4310 = vpack.c.b16 %v4058, %v4057
    %v4311 = vpack.c.b16 %v4060, %v4059
    %v4312 = vpack.c.b16 %v4062, %v4061
    %v4313 = vpack.c.b16 %v4064, %v4063
    %v4314 = vpack.c.b16 %v4066, %v4065
    %v4315 = vpack.c.b16 %v4068, %v4067
    %v4316 = vpack.c.b16 %v4070, %v4069
    %v4317 = vpack.c.b16 %v4072, %v4071
    %v4318 = vpack.c.b16 %v4074, %v4073
    %v4319 = vpack.c.b16 %v4076, %v4075
    %v4320 = vpack.c.b16 %v4078, %v4077
    %v4321 = vpack.c.b16 %v4080, %v4079
    %v4322 = vpack.c.b16 %v4082, %v4081
    %v4323 = vpack.c.b16 %v4084, %v4083
    %v4324 = vpack.c.b16 %v4086, %v4085
    %v4325 = vpack.c.b16 %v4088, %v4087
    %v4326 = vpack.c.b16 %v4090, %v4089
    %v4327 = vpack.c.b16 %v4092, %v4091
    %v4328 = vpack.c.b16 %v4094, %v4093
    %v4329 = vpack.c.b16 %v4096, %v4095
    %v4330 = vpack.c.b16 %v4098, %v4097
    %v4331 = vpack.c.b16 %v4100, %v4099
    %v4332 = vpack.c.b16 %v4102, %v4101
    %v4333 = vpack.c.b16 %v4104, %v4103
    %v4334 = vpack.c.b16 %v4106, %v4105
    %v4335 = vpack.c.b16 %v4108, %v4107
    %v4336 = vpack.c.b16 %v4110, %v4109
    %v4337 = vpack.c.b16 %v4112, %v4111
    %v4338 = vpack.c.b16 %v4114, %v4113
    %v4339 = vpack.c.b16 %v4116, %v4115
    %v4340 = vpack.c.b16 %v4118, %v4117
    %v4341 = vpack.c.b16 %v4120, %v4119
    %v4342 = vpack.c.b16 %v4122, %v4121
    %v4343 = vpack.c.b16 %v4124, %v4123
    %v4344 = vpack.c.b16 %v4126, %v4125
    %v4345 = vpack.c.b16 %v4128, %v4127
    %v4346 = vpack.c.b16 %v4130, %v4129
    %v4347 = vpack.c.b16 %v4132, %v4131
    %v4348 = vpack.c.b16 %v4134, %v4133
    %v4349 = vpack.c.b16 %v4136, %v4135
    %v4350 = vpack.c.b16 %v4138, %v4137
    %v4351 = vpack.c.b16 %v4140, %v4139
    %v4352 = vpack.c.b16 %v4142, %v4141
    %v4353 = vpack.c.b16 %v4144, %v4143
    %v4354 = vpack.c.b16 %v4146, %v4145
    %v4355 = vpack.c.b16 %v4148, %v4147
    %v4356 = vpack.c.b16 %v4150, %v4149
    %v4357 = vpack.c.b16 %v4152, %v4151
    %v4358 = vpack.c.b16 %v4154, %v4153
    %v4359 = vpack.c.b16 %v4156, %v4155
    %v4360 = vpack.c.b16 %v4158, %v4157
    %v4361 = vpack.c.b16 %v4160, %v4159
    %v4362 = vpack.c.b16 %v4162, %v4161
    %v4363 = vpack.c.b16 %v4164, %v4163
    %v4364 = vpack.c.b16 %v4166, %v4165
    %v4365 = vpack.c.b16 %v4168, %v4167
    %v4366 = vpack.c.b16 %v4170, %v4169
    %v4367 = vpack.c.b16 %v4172, %v4171
    %v4368 = vpack.c.b16 %v4174, %v4173
    %v4369 = vpack.c.b16 %v4176, %v4175
    %v4370 = vpack.c.b16 %v4178, %v4177
    %v4371 = vpack.c.b16 %v4180, %v4179
    %v4372 = vpack.c.b16 %v4182, %v4181
    %v4373 = vpack.c.b16 %v4184, %v4183
    %v4374 = vpack.c.b16 %v4186, %v4185
    %v4375 = vpack.c.b16 %v4188, %v4187
    %v4376 = vpack.c.b16 %v4190, %v4189
    %v4377 = vpack.c.b16 %v4192, %v4191
    %v4378 = vpack.c.b16 %v4194, %v4193
    %v4379 = vpack.c.b16 %v4196, %v4195
    %v4380 = vpack.c.b16 %v4198, %v4197
    %v4381 = vpack.c.b16 %v4200, %v4199
    %v4382 = vpack.c.b16 %v4202, %v4201
    %v4383 = vpack.c.b16 %v4204, %v4203
    %v4384 = vpack.c.b16 %v4206, %v4205
    %v4385 = vpack.c.b16 %v4208, %v4207
    %v4386 = vpack.c.b16 %v4210, %v4209
    %v4387 = vpack.c.b16 %v4212, %v4211
    %v4388 = vpack.c.b16 %v4214, %v4213
    %v4389 = vpack.c.b16 %v4216, %v4215
    %v4390 = vpack.c.b16 %v4218, %v4217
    %v4391 = vpack.c.b16 %v4220, %v4219
    %v4392 = vpack.c.b16 %v4222, %v4221
    %v4393 = vpack.c.b16 %v4224, %v4223
    %v4394 = vpack.c.b16 %v4226, %v4225
    %v4395 = vpack.c.b16 %v4228, %v4227
    %v4396 = vpack.c.b16 %v4230, %v4229
    %v4397 = vpack.c.b16 %v4232, %v4231
    %v4398 = vpack.c.b16 %v4234, %v4233
    %v4399 = vpack.c.b16 %v4236, %v4235
    %v4400 = vpack.c.b16 %v4238, %v4237
    %v4401 = vpack.c.b16 %v4240, %v4239
    %v4402 = vpack.c.b16 %v4242, %v4241
    %v4403 = vpack.c.b16 %v4244, %v4243
    %v4404 = vpack.c.b16 %v4246, %v4245
    %v4405 = vpack.c.b16 %v4248, %v4247
    %v4406 = vpack.c.b16 %v4250, %v4249
    %v4407 = vpack.c.b16 %v4252, %v4251
    %v4408 = vpack.c.b16 %v4254, %v4253
    %v4409 = vpack.c.b16 %v4256, %v4255
    %v4410 = vpack.c.b16 %v4258, %v4257
    %v4411 = vpack.c.b16 %v4260, %v4259
    %v4412 = vpack.c.b16 %v4262, %v4261
    %v4413 = vpack.c.b16 %v4264, %v4263
    %v4414 = vpack.c.b16 %v4266, %v4265
    %v4415 = vpack.c.b16 %v4268, %v4267
    %v4416 = vpack.c.b16 %v4270, %v4269
    %v4417 = vpack.c.b16 %v4272, %v4271
    %v4418 = vpack.c.b16 %v4274, %v4273
    %v4419 = vpack.c.b16 %v4276, %v4275
    %v4420 = vpack.c.b16 %v4278, %v4277
    %v4421 = vpack.c.b16 %v4280, %v4279
    %v4422 = vpack.c.b16 %v4282, %v4281
    %v4423 = vpack.c.b16 %v4284, %v4283
    %v4424 = vpack.c.b16 %v4286, %v4285
    %v4425 = vpack.c.b16 %v4288, %v4287
    %v4426 = vpack.c.b16 %v4290, %v4289
    %v4427 = vpack.c.b16 %v4292, %v4291
    %v4428 = vpack.c.b16 %v4294, %v4293
    %v4429 = vpack.c.b16 %v4296, %v4295
    %v4430 = vpack.c.b16 %v4298, %v4297
    %v4431 = vpack.c.b16 %v4300, %v4299
    %v4432 = vpack.c.b16 %v4302, %v4301
    %v4433 = vpack.c.b16 %v4304, %v4303
    %v4434 = vpack.c.b16 %v4306, %v4305
    %4563 = vmatpush.bf16.msra.mxu0 %v4314
    %4564 = vmatpush.bf16.msra.mxu0 %v4313
    %4565 = vmatpush.bf16.msra.mxu0 %v4312
    %4566 = vmatpush.bf16.msra.mxu0 %v4311
    %4567 = vmatpush.bf16.msra.mxu0 %v4310
    %4568 = vmatpush.bf16.msra.mxu0 %v4309
    %4569 = vmatpush.bf16.msra.mxu0 %v4308
    %4570 = vmatpush.bf16.msra.mxu0 %v4307
    %4571 = vmatmul.bf16.gmra.mxu0 %v3517
    %v4572 = vpop.f32.mrf.mxu0
    %v4573 = vadd.f32 %v3793, %v4572
    %v4574 = vpop.f32.mrf.mxu0
    %v4575 = vadd.f32 %v3793, %v4574
    %4576 = vdwg.mxu0
    %4577 = vmatpush.bf16.msra.mxu0 %v4322
    %4578 = vmatpush.bf16.msra.mxu0 %v4321
    %4579 = vmatpush.bf16.msra.mxu0 %v4320
    %4580 = vmatpush.bf16.msra.mxu0 %v4319
    %4581 = vmatpush.bf16.msra.mxu0 %v4318
    %4582 = vmatpush.bf16.msra.mxu0 %v4317
    %4583 = vmatpush.bf16.msra.mxu0 %v4316
    %4584 = vmatpush.bf16.msra.mxu0 %v4315
    %4585 = vmatmul.bf16.gmra.mxu0 %v3518
    %v4586 = vpop.f32.mrf.mxu0
    %v4587 = vadd.f32 %v4573, %v4586
    %v4588 = vpop.f32.mrf.mxu0
    %v4589 = vadd.f32 %v4575, %v4588
    %4590 = vdwg.mxu0
    %4591 = vmatpush.bf16.msra.mxu0 %v4330
    %4592 = vmatpush.bf16.msra.mxu0 %v4329
    %4593 = vmatpush.bf16.msra.mxu0 %v4328
    %4594 = vmatpush.bf16.msra.mxu0 %v4327
    %4595 = vmatpush.bf16.msra.mxu0 %v4326
    %4596 = vmatpush.bf16.msra.mxu0 %v4325
    %4597 = vmatpush.bf16.msra.mxu0 %v4324
    %4598 = vmatpush.bf16.msra.mxu0 %v4323
    %4599 = vmatmul.bf16.gmra.mxu0 %v3519
    %v4600 = vpop.f32.mrf.mxu0
    %v4601 = vadd.f32 %v4587, %v4600
    %v4602 = vpop.f32.mrf.mxu0
    %v4603 = vadd.f32 %v4589, %v4602
    %4604 = vdwg.mxu0
    %4605 = vmatpush.bf16.msra.mxu0 %v4338
    %4606 = vmatpush.bf16.msra.mxu0 %v4337
    %4607 = vmatpush.bf16.msra.mxu0 %v4336
    %4608 = vmatpush.bf16.msra.mxu0 %v4335
    %4609 = vmatpush.bf16.msra.mxu0 %v4334
    %4610 = vmatpush.bf16.msra.mxu0 %v4333
    %4611 = vmatpush.bf16.msra.mxu0 %v4332
    %4612 = vmatpush.bf16.msra.mxu0 %v4331
    %4613 = vmatmul.bf16.gmra.mxu0 %v3520
    %v4614 = vpop.f32.mrf.mxu0
    %v4615 = vadd.f32 %v4601, %v4614
    %v4616 = vpop.f32.mrf.mxu0
    %v4617 = vadd.f32 %v4603, %v4616
    %4618 = vdwg.mxu0
    %4619 = vmatpush.bf16.msra.mxu0 %v4346
    %4620 = vmatpush.bf16.msra.mxu0 %v4345
    %4621 = vmatpush.bf16.msra.mxu0 %v4344
    %4622 = vmatpush.bf16.msra.mxu0 %v4343
    %4623 = vmatpush.bf16.msra.mxu0 %v4342
    %4624 = vmatpush.bf16.msra.mxu0 %v4341
    %4625 = vmatpush.bf16.msra.mxu0 %v4340
    %4626 = vmatpush.bf16.msra.mxu0 %v4339
    %4627 = vmatmul.bf16.gmra.mxu0 %v3521
    %v4628 = vpop.f32.mrf.mxu0
    %v4629 = vadd.f32 %v4615, %v4628
    %v4630 = vpop.f32.mrf.mxu0
    %v4631 = vadd.f32 %v4617, %v4630
    %4632 = vdwg.mxu0
    %4633 = vmatpush.bf16.msra.mxu0 %v4354
    %4634 = vmatpush.bf16.msra.mxu0 %v4353
    %4635 = vmatpush.bf16.msra.mxu0 %v4352
    %4636 = vmatpush.bf16.msra.mxu0 %v4351
    %4637 = vmatpush.bf16.msra.mxu0 %v4350
    %4638 = vmatpush.bf16.msra.mxu0 %v4349
    %4639 = vmatpush.bf16.msra.mxu0 %v4348
    %4640 = vmatpush.bf16.msra.mxu0 %v4347
    %4641 = vmatmul.bf16.gmra.mxu0 %v3522
    %v4642 = vpop.f32.mrf.mxu0
    %v4643 = vadd.f32 %v4629, %v4642
    %v4644 = vpop.f32.mrf.mxu0
    %v4645 = vadd.f32 %v4631, %v4644
    %4646 = vdwg.mxu0
    %4647 = vmatpush.bf16.msra.mxu0 %v4362
    %4648 = vmatpush.bf16.msra.mxu0 %v4361
    %4649 = vmatpush.bf16.msra.mxu0 %v4360
    %4650 = vmatpush.bf16.msra.mxu0 %v4359
    %4651 = vmatpush.bf16.msra.mxu0 %v4358
    %4652 = vmatpush.bf16.msra.mxu0 %v4357
    %4653 = vmatpush.bf16.msra.mxu0 %v4356
    %4654 = vmatpush.bf16.msra.mxu0 %v4355
    %4655 = vmatmul.bf16.gmra.mxu0 %v3523
    %v4656 = vpop.f32.mrf.mxu0
    %v4657 = vadd.f32 %v4643, %v4656
    %v4658 = vpop.f32.mrf.mxu0
    %v4659 = vadd.f32 %v4645, %v4658
    %4660 = vdwg.mxu0
    %4661 = vmatpush.bf16.msra.mxu0 %v4370
    %4662 = vmatpush.bf16.msra.mxu0 %v4369
    %4663 = vmatpush.bf16.msra.mxu0 %v4368
    %4664 = vmatpush.bf16.msra.mxu0 %v4367
    %4665 = vmatpush.bf16.msra.mxu0 %v4366
    %4666 = vmatpush.bf16.msra.mxu0 %v4365
    %4667 = vmatpush.bf16.msra.mxu0 %v4364
    %4668 = vmatpush.bf16.msra.mxu0 %v4363
    %4669 = vmatmul.bf16.gmra.mxu0 %v3524
    %v4670 = vpop.f32.mrf.mxu0
    %v4671 = vadd.f32 %v4657, %v4670
    %v4672 = vpop.f32.mrf.mxu0
    %v4673 = vadd.f32 %v4659, %v4672
    %4674 = vdwg.mxu0
    %4675 = vmatpush.bf16.msra.mxu0 %v4378
    %4676 = vmatpush.bf16.msra.mxu0 %v4377
    %4677 = vmatpush.bf16.msra.mxu0 %v4376
    %4678 = vmatpush.bf16.msra.mxu0 %v4375
    %4679 = vmatpush.bf16.msra.mxu0 %v4374
    %4680 = vmatpush.bf16.msra.mxu0 %v4373
    %4681 = vmatpush.bf16.msra.mxu0 %v4372
    %4682 = vmatpush.bf16.msra.mxu0 %v4371
    %4683 = vmatmul.bf16.gmra.mxu0 %v3525
    %v4684 = vpop.f32.mrf.mxu0
    %v4685 = vadd.f32 %v4671, %v4684
    %v4686 = vpop.f32.mrf.mxu0
    %v4687 = vadd.f32 %v4673, %v4686
    %4688 = vdwg.mxu0
    %4689 = vmatpush.bf16.msra.mxu0 %v4386
    %4690 = vmatpush.bf16.msra.mxu0 %v4385
    %4691 = vmatpush.bf16.msra.mxu0 %v4384
    %4692 = vmatpush.bf16.msra.mxu0 %v4383
    %4693 = vmatpush.bf16.msra.mxu0 %v4382
    %4694 = vmatpush.bf16.msra.mxu0 %v4381
    %4695 = vmatpush.bf16.msra.mxu0 %v4380
    %4696 = vmatpush.bf16.msra.mxu0 %v4379
    %4697 = vmatmul.bf16.gmra.mxu0 %v3526
    %v4698 = vpop.f32.mrf.mxu0
    %v4699 = vadd.f32 %v4685, %v4698
    %v4700 = vpop.f32.mrf.mxu0
    %v4701 = vadd.f32 %v4687, %v4700
    %4702 = vdwg.mxu0
    %4703 = vmatpush.bf16.msra.mxu0 %v4394
    %4704 = vmatpush.bf16.msra.mxu0 %v4393
    %4705 = vmatpush.bf16.msra.mxu0 %v4392
    %4706 = vmatpush.bf16.msra.mxu0 %v4391
    %4707 = vmatpush.bf16.msra.mxu0 %v4390
    %4708 = vmatpush.bf16.msra.mxu0 %v4389
    %4709 = vmatpush.bf16.msra.mxu0 %v4388
    %4710 = vmatpush.bf16.msra.mxu0 %v4387
    %4711 = vmatmul.bf16.gmra.mxu0 %v3527
    %v4712 = vpop.f32.mrf.mxu0
    %v4713 = vadd.f32 %v4699, %v4712
    %v4714 = vpop.f32.mrf.mxu0
    %v4715 = vadd.f32 %v4701, %v4714
    %4716 = vdwg.mxu0
    %4717 = vmatpush.bf16.msra.mxu0 %v4402
    %4718 = vmatpush.bf16.msra.mxu0 %v4401
    %4719 = vmatpush.bf16.msra.mxu0 %v4400
    %4720 = vmatpush.bf16.msra.mxu0 %v4399
    %4721 = vmatpush.bf16.msra.mxu0 %v4398
    %4722 = vmatpush.bf16.msra.mxu0 %v4397
    %4723 = vmatpush.bf16.msra.mxu0 %v4396
    %4724 = vmatpush.bf16.msra.mxu0 %v4395
    %4725 = vmatmul.bf16.gmra.mxu0 %v3528
    %v4726 = vpop.f32.mrf.mxu0
    %v4727 = vadd.f32 %v4713, %v4726
    %v4728 = vpop.f32.mrf.mxu0
    %v4729 = vadd.f32 %v4715, %v4728
    %4730 = vdwg.mxu0
    %4731 = vmatpush.bf16.msra.mxu0 %v4410
    %4732 = vmatpush.bf16.msra.mxu0 %v4409
    %4733 = vmatpush.bf16.msra.mxu0 %v4408
    %4734 = vmatpush.bf16.msra.mxu0 %v4407
    %4735 = vmatpush.bf16.msra.mxu0 %v4406
    %4736 = vmatpush.bf16.msra.mxu0 %v4405
    %4737 = vmatpush.bf16.msra.mxu0 %v4404
    %4738 = vmatpush.bf16.msra.mxu0 %v4403
    %4739 = vmatmul.bf16.gmra.mxu0 %v3529
    %v4740 = vpop.f32.mrf.mxu0
    %v4741 = vadd.f32 %v4727, %v4740
    %v4742 = vpop.f32.mrf.mxu0
    %v4743 = vadd.f32 %v4729, %v4742
    %4744 = vdwg.mxu0
    %4745 = vmatpush.bf16.msra.mxu0 %v4418
    %4746 = vmatpush.bf16.msra.mxu0 %v4417
    %4747 = vmatpush.bf16.msra.mxu0 %v4416
    %4748 = vmatpush.bf16.msra.mxu0 %v4415
    %4749 = vmatpush.bf16.msra.mxu0 %v4414
    %4750 = vmatpush.bf16.msra.mxu0 %v4413
    %4751 = vmatpush.bf16.msra.mxu0 %v4412
    %4752 = vmatpush.bf16.msra.mxu0 %v4411
    %4753 = vmatmul.bf16.gmra.mxu0 %v3530
    %v4754 = vpop.f32.mrf.mxu0
    %v4755 = vadd.f32 %v4741, %v4754
    %v4756 = vpop.f32.mrf.mxu0
    %v4757 = vadd.f32 %v4743, %v4756
    %4758 = vdwg.mxu0
    %4759 = vmatpush.bf16.msra.mxu0 %v4426
    %4760 = vmatpush.bf16.msra.mxu0 %v4425
    %4761 = vmatpush.bf16.msra.mxu0 %v4424
    %4762 = vmatpush.bf16.msra.mxu0 %v4423
    %4763 = vmatpush.bf16.msra.mxu0 %v4422
    %4764 = vmatpush.bf16.msra.mxu0 %v4421
    %4765 = vmatpush.bf16.msra.mxu0 %v4420
    %4766 = vmatpush.bf16.msra.mxu0 %v4419
    %4767 = vmatmul.bf16.gmra.mxu0 %v3531
    %v4768 = vpop.f32.mrf.mxu0
    %v4769 = vadd.f32 %v4755, %v4768
    %v4770 = vpop.f32.mrf.mxu0
    %v4771 = vadd.f32 %v4757, %v4770
    %4772 = vdwg.mxu0
    %4773 = vmatpush.bf16.msra.mxu0 %v4434
    %4774 = vmatpush.bf16.msra.mxu0 %v4433
    %4775 = vmatpush.bf16.msra.mxu0 %v4432
    %4776 = vmatpush.bf16.msra.mxu0 %v4431
    %4777 = vmatpush.bf16.msra.mxu0 %v4430
    %4778 = vmatpush.bf16.msra.mxu0 %v4429
    %4779 = vmatpush.bf16.msra.mxu0 %v4428
    %4780 = vmatpush.bf16.msra.mxu0 %v4427
    %4781 = vmatmul.bf16.gmra.mxu0 %v3532
    %v4782 = vpop.f32.mrf.mxu0
    %v4783 = vadd.f32 %v4769, %v4782
    %v4784 = vpop.f32.mrf.mxu0
    %v4785 = vadd.f32 %v4771, %v4784
    %4786 = vdwg.mxu0
    %v4787 = vadd.f32 %v3025, %v4783
    %v4788 = vadd.f32 %v3026, %v4785
    %s4789 = scalar_lea.vmem %s16, 1
    %v4790 = vld [vmem:[%s4789] sm:$0x1]
    %s4791 = scalar_lea.vmem %s17, 1
    %v4792 = vld [vmem:[%s4791] sm:$0x1]
    %v4793 = vsel %vm115, %v4787, 0.0
    %4794 = vadd.xlane.f32.xlu0 %v4793
    %v4795 = vpop.xlane.xlu0 %4794
    %v4796 = vsel %vm115, %v4788, 0.0
    %4797 = vadd.xlane.f32.xlu0 %v4796
    %v4798 = vpop.xlane.xlu0 %4797
    %v4799 = vmul.f32 %v4795, %v656
    %v4800 = vmul.f32 %v4798, %v656
    %v4801 = vsub.f32 %v4787, %v4799
    %v4802 = vsub.f32 %v4788, %v4800
    %v4803 = vmul.f32 %v4801, %v4801
    %v4804 = vmul.f32 %v4802, %v4802
    %v4805 = vsel %vm115, %v4803, 0.0
    %4806 = vadd.xlane.f32.xlu0 %v4805
    %v4807 = vpop.xlane.xlu0 %4806
    %v4808 = vsel %vm115, %v4804, 0.0
    %4809 = vadd.xlane.f32.xlu0 %v4808
    %v4810 = vpop.xlane.xlu0 %4809
    %v4811 = vmul.f32 %v4807, %v656
    %v4812 = vmul.f32 %v4810, %v656
    %v4813 = vadd.f32 %v4811, 1e-05
    %v4814 = vadd.f32 %v4812, 1e-05
    %v4815 = vrsqrt.pop %v4813
    %v4816 = vmul.f32 %v4815, %v4813
    %v4817 = vmul.f32 %v4816, %v4815
    %v4818 = vmul.f32 0.5, %v4817
    %v4819 = vsub.f32 1.5, %v4818
    %v4820 = vmul.f32 %v4815, %v4819
    %vm4821 = vweird.f32 %v4813
    %vm4822 = vweird.f32 %v4815
    %vm4823 = vmor %vm4821, %vm4822
    %v4824 = vsel %vm4823, %v4815, %v4820
    %v4825 = vrsqrt.pop %v4814
    %v4826 = vmul.f32 %v4825, %v4814
    %v4827 = vmul.f32 %v4826, %v4825
    %v4828 = vmul.f32 0.5, %v4827
    %v4829 = vsub.f32 1.5, %v4828
    %v4830 = vmul.f32 %v4825, %v4829
    %vm4831 = vweird.f32 %v4814
    %vm4832 = vweird.f32 %v4825
    %vm4833 = vmor %vm4831, %vm4832
    %v4834 = vsel %vm4833, %v4825, %v4830
    %v4835 = vmul.f32 %v4801, %v4824
    %v4836 = vmul.f32 %v4802, %v4834
    %v4838 = vperm.slane %v4790, 0
    %v4840 = vmul.f32 %v4835, %v4838
    %v4841 = vmul.f32 %v4836, %v4838
    %v4843 = vperm.slane %v4792, 0
    %v4845 = vadd.f32 %v4840, %v4843
    %v4846 = vadd.f32 %v4841, %v4843
    %v4847 = vld [vmem:[%s5] sm:$0x3]
    %v4849 = vsel %vm145, %v4847, 0
    %4851 = vmatpush.msra.mxu0 0.0
    %4852 = vmatpush.msra.mxu0 0.0
    %4853 = vmatpush.msra.mxu0 0.0
    %4854 = vmatpush.msra.mxu0 0.0
    %4855 = vmatpush.msra.mxu0 0.0
    %4856 = vmatpush.msra.mxu0 0.0
    %4857 = vmatpush.msra.mxu0 0.0
    %4858 = vmatpush.msra.mxu0 0.0
    %4859 = vmatpush.msra.mxu0 0.0
    %4860 = vmatpush.msra.mxu0 0.0
    %4861 = vmatpush.msra.mxu0 0.0
    %4862 = vmatpush.msra.mxu0 0.0
    %4863 = vmatpush.msra.mxu0 0.0
    %4864 = vmatpush.msra.mxu0 0.0
    %4865 = vmatpush.msra.mxu0 %v4846
    %4866 = vmatpush.msra.mxu0 %v4845
    %4867 = vmatmul.f32.gmra.mxu0 %v4849
    %v4868 = vpop.f32.mrf.mxu0
    %v4869 = vadd.f32 0.0, %v4868
    %4870 = vdwg.mxu0
    %v4871 = vld [vmem:[%s18] sm:$0xff]
    %v4872 = vld [vmem:[%s18 + $0x8] sm:$0xff]
    %v4873 = vld [vmem:[%s18 + $0x10] sm:$0xff]
    %v4874 = vld [vmem:[%s18 + $0x18] sm:$0xff]
    %v4875 = vld [vmem:[%s19] sm:$0x1]
    %v4877 = vperm.slane %v4875, 0
    %v4880 = vsel %vm115, %v4869, 0
    %4882 = vmatpush.msra.mxu0 0.0
    %4883 = vmatpush.msra.mxu0 0.0
    %4884 = vmatpush.msra.mxu0 0.0
    %4885 = vmatpush.msra.mxu0 0.0
    %4886 = vmatpush.msra.mxu0 0.0
    %4887 = vmatpush.msra.mxu0 0.0
    %4888 = vmatpush.msra.mxu0 0.0
    %4889 = vmatpush.msra.mxu0 0.0
    %4890 = vmatpush.msra.mxu0 0.0
    %4891 = vmatpush.msra.mxu0 0.0
    %4892 = vmatpush.msra.mxu0 0.0
    %4893 = vmatpush.msra.mxu0 0.0
    %4894 = vmatpush.msra.mxu0 %v4874
    %4895 = vmatpush.msra.mxu0 %v4873
    %4896 = vmatpush.msra.mxu0 %v4872
    %4897 = vmatpush.msra.mxu0 %v4871
    %4898 = vmatmul.f32.gmra.mxu0 %v4880
    %v4899 = vpop.f32.mrf.mxu0
    %v4900 = vadd.f32 %v4877, %v4899
    %4901 = vdwg.mxu0
    %v4902 = vmax.f32 %v4900, 0.0
    %v4903 = vld [vmem:[%s20] sm:$0xff]
    %v4904 = vld [vmem:[%s20 + $0x8] sm:$0xff]
    %v4905 = vld [vmem:[%s20 + $0x10] sm:$0xff]
    %v4906 = vld [vmem:[%s20 + $0x18] sm:$0xff]
    %v4907 = vld [vmem:[%s21] sm:$0x1]
    %v4909 = vperm.slane %v4907, 0
    %v4912 = vsel %vm115, %v4902, 0
    %4914 = vmatpush.msra.mxu0 0.0
    %4915 = vmatpush.msra.mxu0 0.0
    %4916 = vmatpush.msra.mxu0 0.0
    %4917 = vmatpush.msra.mxu0 0.0
    %4918 = vmatpush.msra.mxu0 0.0
    %4919 = vmatpush.msra.mxu0 0.0
    %4920 = vmatpush.msra.mxu0 0.0
    %4921 = vmatpush.msra.mxu0 0.0
    %4922 = vmatpush.msra.mxu0 0.0
    %4923 = vmatpush.msra.mxu0 0.0
    %4924 = vmatpush.msra.mxu0 0.0
    %4925 = vmatpush.msra.mxu0 0.0
    %4926 = vmatpush.msra.mxu0 %v4906
    %4927 = vmatpush.msra.mxu0 %v4905
    %4928 = vmatpush.msra.mxu0 %v4904
    %4929 = vmatpush.msra.mxu0 %v4903
    %4930 = vmatmul.f32.gmra.mxu0 %v4912
    %v4931 = vpop.f32.mrf.mxu0
    %v4932 = vadd.f32 %v4909, %v4931
    %4933 = vdwg.mxu0
    %v4934 = vmax.f32 %v4932, 0.0
    %v4935 = vld [vmem:[%s22] sm:$0xff]
    %v4936 = vld [vmem:[%s22 + $0x8] sm:$0xff]
    %v4937 = vld [vmem:[%s23] sm:$0x1]
    %v4939 = vperm.slane %v4937, 0
    %v4942 = vsel %vm145, %v4934, 0
    %4944 = vmatpush.msra.mxu0 0.0
    %4945 = vmatpush.msra.mxu0 0.0
    %4946 = vmatpush.msra.mxu0 0.0
    %4947 = vmatpush.msra.mxu0 0.0
    %4948 = vmatpush.msra.mxu0 0.0
    %4949 = vmatpush.msra.mxu0 0.0
    %4950 = vmatpush.msra.mxu0 0.0
    %4951 = vmatpush.msra.mxu0 0.0
    %4952 = vmatpush.msra.mxu0 0.0
    %4953 = vmatpush.msra.mxu0 0.0
    %4954 = vmatpush.msra.mxu0 0.0
    %4955 = vmatpush.msra.mxu0 0.0
    %4956 = vmatpush.msra.mxu0 0.0
    %4957 = vmatpush.msra.mxu0 0.0
    %4958 = vmatpush.msra.mxu0 %v4936
    %4959 = vmatpush.msra.mxu0 %v4935
    %4960 = vmatmul.f32.gmra.mxu0 %v4942
    %v4961 = vpop.f32.mrf.mxu0
    %v4962 = vadd.f32 %v4939, %v4961
    %4963 = vdwg.mxu0
    %vm4964 = vcmask 25600
    %4965 = vst.msk [vmem:[#allocation2] sm:$0x3] %vm4964, %v4962
    // Predicated region
    $region98: #{transformer_control_forward.1} parent=1 // pred_check
      _
    $region99: #{transformer_control_forward.1} parent=1 // pred_check_branch
      %4967 = sbr.rel (0) target = $region101
    $region100: #{transformer_control_forward.1} parent=1 // pred_region
      %4969 = vsyncadd [#allocation3], 0
      %s4971 = sshll.u32 [#allocation2], 4
      %s4972 = int_to_ptr.vmem [resolvable:$true] %s4971
      %s4973 = sshll.u32 %s24, 4
      %s4974 = int_to_ptr.hbm [resolvable:$true] %s4973
      %4976 = dma.vmem_to_hbm [thread:$0]  %s4972, 32, %s4974, [#allocation3]
    $region101: #{transformer_control_forward.1} parent=1 // pred_fallthru
      _
    // Predicated region
    $region102: #{transformer_control_forward.1} parent=1 // pred_check
      _
    $region103: #{transformer_control_forward.1} parent=1 // pred_check_branch
      %4978 = sbr.rel (0) target = $region105
    $region104: #{transformer_control_forward.1} parent=1 // pred_region
      %4980 = dma.done [#allocation3], 32
    $region105: #{transformer_control_forward.1} parent=1 // pred_fallthru
      _
    %4981 = vsyncpa [#allocation3], 1

</llo_original>
